<compile_context>
chip_gen: v5e
topology: v5e:2x2
jax: 0.10.0
libtpu: 0.0.40
codegen_flags: <defaults>
</compile_context>

<pallas_src>
import functools

import jax
import jax.numpy as jnp
from jax.experimental import pallas as pl
from jax.experimental.pallas import tpu as pltpu

BN_EPS = 1e-5
REF_PRECISION = jax.lax.Precision.HIGHEST  # reference path only


def _round_up(v, m):
    return (v + m - 1) // m * m


# ---------------------------------------------------------------------------
# Weight packing (wrapper-side, traced once)
# ---------------------------------------------------------------------------

def _toeplitz_conv_weight(w_t, width, lane_pad):
    """(Co, Ci, 3, 3, 3) torch layout -> (9*lane_pad, width*Co) bf16.

    Block-Toeplitz matrix for a padded 3x3x3 conv where the LHS rows are
    (d, h) positions and the LHS lanes are (w', ci) (zero-padded to lane_pad),
    concatenated over the 9 (kd, kh) taps.  Output columns are (w, co).
    """
    co, ci = w_t.shape[0], w_t.shape[1]
    wk = jnp.transpose(w_t, (2, 3, 4, 1, 0)).astype(jnp.float32)   # (kd,kh,kw,ci,co)
    kw_i = jnp.arange(3)[:, None, None]
    wp_i = jnp.arange(width)[None, :, None]
    w_i = jnp.arange(width)[None, None, :]
    # out[w] uses input column w + kw - 1 (padding=1); out-of-range -> zero row.
    shift = (wp_i == w_i + kw_i - 1).astype(jnp.float32)            # (3, w', w)
    t = jnp.einsum("dhkic,kpw->dhpiwc", wk, shift)                  # (kd,kh,w',ci,w,co)
    t = t.reshape(3, 3, width * ci, width * co)
    t = jnp.pad(t, ((0, 0), (0, 0), (0, lane_pad - width * ci), (0, 0)))
    return t.reshape(9 * lane_pad, width * co).astype(jnp.bfloat16)


def _blockdiag_residual_weight(wres_2d, width, lane_pad):
    """(Co, Ci) 1x1x1 weight -> block-diagonal (lane_pad, width*Co) bf16."""
    co, ci = wres_2d.shape
    eye = jnp.eye(width, dtype=jnp.float32)
    t = jnp.einsum("oi,ab->aibo", wres_2d.astype(jnp.float32), eye)  # (w',ci,w,co)
    t = t.reshape(width * ci, width * co)
    t = jnp.pad(t, ((0, lane_pad - width * ci), (0, 0)))
    return t.astype(jnp.bfloat16)


def _bn_affine(stats, gamma, beta, count, width):
    """Fold training-mode BatchNorm into lane-tiled scale/shift (1, width*Co)."""
    co = gamma.shape[0]
    st = stats.reshape(stats.shape[0], 2, width, co).sum(axis=(0, 2))  # (2, co)
    mean = st[0] / count
    var = jnp.maximum(st[1] / count - mean * mean, 0.0)
    scale = gamma * jax.lax.rsqrt(var + BN_EPS)
    shift = beta - mean * scale
    scale_l = jnp.tile(scale, (width,)).reshape(1, width * co).astype(jnp.float32)
    shift_l = jnp.tile(shift, (width,)).reshape(1, width * co).astype(jnp.float32)
    return scale_l, shift_l


# ---------------------------------------------------------------------------
# Kernels (grid = (N,), one full-depth sample per step)
# ---------------------------------------------------------------------------

def _im2col_lanes(vol, dd, hh, lanes):
    """vol: (dd+2, hh+2, lanes) bf16 -> (dd*hh, 9*lanes) bf16 patch matrix."""
    m = dd * hh
    pieces = [vol[kd:kd + dd, kh:kh + hh, :].reshape(m, lanes)
              for kd in range(3) for kh in range(3)]
    return jnp.concatenate(pieces, axis=1)


def _partial_stats(z):
    """(sum, sum of squares) over rows -> (2, lanes) float32."""
    return jnp.concatenate([jnp.sum(z, axis=0, keepdims=True),
                            jnp.sum(z * z, axis=0, keepdims=True)], axis=0)


def _conv1_kernel(x_ref, t_ref, z_ref, st_ref):
    """conv1 (3x3x3, no bias) for one sample + BN1 partial statistics."""
    dpad, hpad, lanes = x_ref.shape[1], x_ref.shape[2], x_ref.shape[3]
    dd, hh = dpad - 2, hpad - 2
    patches = _im2col_lanes(x_ref[0], dd, hh, lanes)           # (D*H, 9*lanes) bf16
    z = jnp.dot(patches, t_ref[...], preferred_element_type=jnp.float32)
    st_ref[0] = _partial_stats(z)                              # stats from f32 acc
    z_ref[0] = z.astype(z_ref.dtype)                           # bf16, lane-dense


def _bn1_relu_conv2_kernel(z1_ref, sc_ref, sh_ref, t_ref, z2_ref, st_ref, *, dd, hh):
    """BN1+ReLU (applied once per element), conv2, BN2 partial statistics."""
    m, wco = z1_ref.shape[1], z1_ref.shape[2]
    lanes = t_ref.shape[0] // 9
    y = jnp.maximum(z1_ref[0].astype(jnp.float32) * sc_ref[...] + sh_ref[...], 0.0)
    y = y.astype(jnp.bfloat16)
    if lanes > wco:                                            # lane zero-pad (static)
        y = jnp.concatenate([y, jnp.zeros((m, lanes - wco), jnp.bfloat16)], axis=1)
    y = y.reshape(dd, hh, lanes)
    zrow = jnp.zeros((dd, 1, lanes), jnp.bfloat16)             # H halo
    y = jnp.concatenate([zrow, y, zrow], axis=1)
    zdep = jnp.zeros((1, hh + 2, lanes), jnp.bfloat16)         # D halo
    y = jnp.concatenate([zdep, y, zdep], axis=0)
    patches = _im2col_lanes(y, dd, hh, lanes)
    z2 = jnp.dot(patches, t_ref[...], preferred_element_type=jnp.float32)
    st_ref[0] = _partial_stats(z2)
    z2_ref[0] = z2.astype(z2_ref.dtype)


def _bn2_relu_residual_kernel(z2_ref, sc_ref, sh_ref, xr_ref, tr_ref, o_ref):
    """BN2+ReLU plus block-diagonal 1x1x1 residual matmul."""
    y = jnp.maximum(z2_ref[0].astype(jnp.float32) * sc_ref[...] + sh_ref[...], 0.0)
    res = jnp.dot(xr_ref[0], tr_ref[...], preferred_element_type=jnp.float32)
    o_ref[0] = y + res


# ---------------------------------------------------------------------------
# Wrapper
# ---------------------------------------------------------------------------

@jax.jit
def conv3d_block_forward(x_ncdhw, params):
    """x: (N, Ci, D, H, W) f32, torch-layout params -> (N, Co, D, H, W) f32."""
    n, ci, d, h, w = x_ncdhw.shape
    co = params["w1"].shape[0]
    wco = w * co
    l1 = _round_up(w * ci, 128)          # lane width of conv1 / residual input
    l2 = _round_up(wco, 128)             # lane width of conv2 input
    m = d * h
    count = float(n * d * h * w)

    # Channels-last, bf16, lane layout = (w, c); pad lanes to a 128 multiple.
    x_cl = jnp.transpose(x_ncdhw, (0, 2, 3, 4, 1)).astype(jnp.bfloat16)
    x_lane = x_cl.reshape(n, d, h, w * ci)
    x_lane = jnp.pad(x_lane, ((0, 0), (0, 0), (0, 0), (0, l1 - w * ci)))
    x_c1 = jnp.pad(x_lane, ((0, 0), (1, 1), (1, 1), (0, 0)))   # D/H conv halo
    x_res = x_lane.reshape(n, m, l1)                            # residual input

    t1 = _toeplitz_conv_weight(params["w1"], w, l1)             # (9*l1, wco)
    t2 = _toeplitz_conv_weight(params["w2"], w, l2)             # (9*l2, wco)
    tres = _blockdiag_residual_weight(params["wres"][:, :, 0, 0, 0], w, l1)

    par = pltpu.CompilerParams(dimension_semantics=("parallel",))
    slab = lambda: pl.BlockSpec((1, m, wco), lambda i: (i, 0, 0))
    stat = lambda: pl.BlockSpec((1, 2, wco), lambda i: (i, 0, 0))
    full = lambda a: pl.BlockSpec(a.shape, lambda i, nd=a.ndim: (0,) * nd)

    # --- stage 1: conv1 + BN1 partial statistics -----------------------------
    z1, st1 = pl.pallas_call(
        _conv1_kernel,
        grid=(n,),
        in_specs=[pl.BlockSpec((1, d + 2, h + 2, l1), lambda i: (i, 0, 0, 0)),
                  full(t1)],
        out_specs=[slab(), stat()],
        out_shape=[jax.ShapeDtypeStruct((n, m, wco), jnp.bfloat16),
                   jax.ShapeDtypeStruct((n, 2, wco), jnp.float32)],
        compiler_params=par,
    )(x_c1, t1)

    sc1, sh1 = _bn_affine(st1, params["gamma1"], params["beta1"], count, w)

    # --- stage 2: BN1 + ReLU + conv2 + BN2 partial statistics ----------------
    z2, st2 = pl.pallas_call(
        functools.partial(_bn1_relu_conv2_kernel, dd=d, hh=h),
        grid=(n,),
        in_specs=[slab(), full(sc1), full(sh1), full(t2)],
        out_specs=[slab(), stat()],
        out_shape=[jax.ShapeDtypeStruct((n, m, wco), jnp.bfloat16),
                   jax.ShapeDtypeStruct((n, 2, wco), jnp.float32)],
        compiler_params=par,
    )(z1, sc1, sh1, t2)

    sc2, sh2 = _bn_affine(st2, params["gamma2"], params["beta2"], count, w)

    # --- stage 3: BN2 + ReLU + residual ---------------------------------------
    out2d = pl.pallas_call(
        _bn2_relu_residual_kernel,
        grid=(n,),
        in_specs=[slab(), full(sc2), full(sh2),
                  pl.BlockSpec((1, m, l1), lambda i: (i, 0, 0)),
                  full(tres)],
        out_specs=slab(),
        out_shape=jax.ShapeDtypeStruct((n, m, wco), jnp.float32),
        compiler_params=par,
    )(z2, sc2, sh2, x_res, tres)

    out = out2d.reshape(n, d, h, w, co)
    return jnp.transpose(out, (0, 4, 1, 2, 3))                  # back to NCDHW


# ---------------------------------------------------------------------------
# Parameters & pure-JAX reference
# ---------------------------------------------------------------------------

def init_params(key, in_feat, out_feat):
    """Synthetic parameters with the same shapes/layout as the torch module."""
    k1, k2, k3, kb1, kb2 = jax.random.split(key, 5)
    return dict(
        # torch Conv3d weight layout: (Co, Ci, kd, kh, kw)
        w1=jax.random.normal(k1, (out_feat, in_feat, 3, 3, 3), jnp.float32) * 0.1,
        b1=jax.random.normal(kb1, (out_feat,), jnp.float32) * 0.05,
        w2=jax.random.normal(k2, (out_feat, out_feat, 3, 3, 3), jnp.float32) * 0.1,
        b2=jax.random.normal(kb2, (out_feat,), jnp.float32) * 0.05,
        wres=jax.random.normal(k3, (out_feat, in_feat, 1, 1, 1), jnp.float32) * 0.1,
        gamma1=jnp.ones((out_feat,), jnp.float32),
        beta1=jnp.zeros((out_feat,), jnp.float32),
        gamma2=jnp.ones((out_feat,), jnp.float32),
        beta2=jnp.zeros((out_feat,), jnp.float32),
    )


def ref_forward(x_ncdhw, params):
    """Pure-JAX reference with the torch module's semantics (f32, HIGHEST).

    Includes the conv biases (the kernel omits them), which validates that
    training-mode BN batch statistics cancel them exactly.
    """
    x = jnp.transpose(x_ncdhw, (0, 2, 3, 4, 1))

    def conv(z, w_t, b):
        wk = jnp.transpose(w_t, (2, 3, 4, 1, 0))  # DHWIO
        out = jax.lax.conv_general_dilated(
            z, wk, (1, 1, 1), ((1, 1), (1, 1), (1, 1)),
            dimension_numbers=("NDHWC", "DHWIO", "NDHWC"),
            precision=REF_PRECISION)
        return out + b.reshape(1, 1, 1, 1, -1)

    def bn_relu(y, g, beta):
        mean = jnp.mean(y, axis=(0, 1, 2, 3), keepdims=True)
        var = jnp.mean((y - mean) ** 2, axis=(0, 1, 2, 3), keepdims=True)
        yn = (y - mean) * jax.lax.rsqrt(var + BN_EPS)
        return jnp.maximum(yn * g.reshape(1, 1, 1, 1, -1)
                           + beta.reshape(1, 1, 1, 1, -1), 0.0)

    y1 = bn_relu(conv(x, params["w1"], params["b1"]),
                 params["gamma1"], params["beta1"])
    y2 = bn_relu(conv(y1, params["w2"], params["b2"]),
                 params["gamma2"], params["beta2"])
    res = jnp.einsum("ndhwc,oc->ndhwo", x, params["wres"][:, :, 0, 0, 0],
                     precision=REF_PRECISION)
    return jnp.transpose(y2 + res, (0, 4, 1, 2, 3))


if __name__ == "__main__":
    key = jax.random.PRNGKey(0)
    kx, kp = jax.random.split(key)

    # Small demo shapes; W * out_feat = 128 keeps the slabs exactly lane-dense.
    N, CI, CO, D, H, W = 2, 8, 16, 8, 8, 8
    x = jax.random.normal(kx, (N, CI, D, H, W), jnp.float32)
    params = init_params(kp, CI, CO)

    out = jax.block_until_ready(conv3d_block_forward(x, params))
    assert out.shape == (N, CO, D, H, W)

    ref = jax.block_until_ready(ref_forward(x, params))
    max_err = float(jnp.max(jnp.abs(out - ref)))
    mean_err = float(jnp.mean(jnp.abs(out - ref)))
    # bf16 inputs/weights/intermediates (f32 accumulation, f32 BN statistics)
    # vs the f32 HIGHEST reference: ~0.5-1% relative error on unit-scale
    # BN outputs; a genuine tap/BN bug would be >0.3 absolute.
    assert max_err < 1.5e-1 and mean_err < 2e-2, (
        f"mismatch vs reference: max_err={max_err}, mean_err={mean_err}")
    print("KERNEL_OK")
</pallas_src>

<mosaic_0001>
module attributes {stable_mosaic.version = 11 : i64} {
  func.func @_conv1_kernel(%arg0: i32, %arg1: memref<1x10x10x128xbf16, #tpu.memory_space<vmem>>, %arg2: memref<1152x128xbf16, #tpu.memory_space<vmem>>, %arg3: memref<1x64x128xbf16, #tpu.memory_space<vmem>>, %arg4: memref<1x2x128xf32, #tpu.memory_space<vmem>>) attributes {dimension_semantics = [#tpu.dimension_semantics<parallel>], iteration_bounds = array<i64: 2>, scalar_prefetch = 0 : i64, scratch_operands = 0 : i64, tpu.core_type = #tpu.core_type<tc>, window_params = [{transform_indices = @transform_0, window_bounds = array<i64: 1, 10, 10, 128>}, {pipeline_mode = #tpu.pipeline_mode<synchronous>, transform_indices = @transform_1, window_bounds = array<i64: 1152, 128>}, {transform_indices = @transform_2, window_bounds = array<i64: 1, 64, 128>}, {transform_indices = @transform_3, window_bounds = array<i64: 1, 2, 128>}]} {
    %c0 = arith.constant 0 : index
    %c0_0 = arith.constant 0 : index
    %c0_1 = arith.constant 0 : index
    %c0_2 = arith.constant 0 : index
    %0 = vector.load %arg1[%c0, %c0_0, %c0_1, %c0_2] : memref<1x10x10x128xbf16, #tpu.memory_space<vmem>>, vector<1x10x10x128xbf16>
    %1 = vector.shape_cast %0 : vector<1x10x10x128xbf16> to vector<10x10x128xbf16>
    %2 = vector.extract_strided_slice %1 {offsets = [0, 0, 0], sizes = [8, 8, 128], strides = [1, 1, 1]} : vector<10x10x128xbf16> to vector<8x8x128xbf16>
    %3 = vector.shape_cast %2 : vector<8x8x128xbf16> to vector<64x128xbf16>
    %4 = vector.extract_strided_slice %1 {offsets = [0, 1, 0], sizes = [8, 8, 128], strides = [1, 1, 1]} : vector<10x10x128xbf16> to vector<8x8x128xbf16>
    %5 = vector.shape_cast %4 : vector<8x8x128xbf16> to vector<64x128xbf16>
    %6 = vector.extract_strided_slice %1 {offsets = [0, 2, 0], sizes = [8, 8, 128], strides = [1, 1, 1]} : vector<10x10x128xbf16> to vector<8x8x128xbf16>
    %7 = vector.shape_cast %6 : vector<8x8x128xbf16> to vector<64x128xbf16>
    %8 = vector.extract_strided_slice %1 {offsets = [1, 0, 0], sizes = [8, 8, 128], strides = [1, 1, 1]} : vector<10x10x128xbf16> to vector<8x8x128xbf16>
    %9 = vector.shape_cast %8 : vector<8x8x128xbf16> to vector<64x128xbf16>
    %10 = vector.extract_strided_slice %1 {offsets = [1, 1, 0], sizes = [8, 8, 128], strides = [1, 1, 1]} : vector<10x10x128xbf16> to vector<8x8x128xbf16>
    %11 = vector.shape_cast %10 : vector<8x8x128xbf16> to vector<64x128xbf16>
    %12 = vector.extract_strided_slice %1 {offsets = [1, 2, 0], sizes = [8, 8, 128], strides = [1, 1, 1]} : vector<10x10x128xbf16> to vector<8x8x128xbf16>
    %13 = vector.shape_cast %12 : vector<8x8x128xbf16> to vector<64x128xbf16>
    %14 = vector.extract_strided_slice %1 {offsets = [2, 0, 0], sizes = [8, 8, 128], strides = [1, 1, 1]} : vector<10x10x128xbf16> to vector<8x8x128xbf16>
    %15 = vector.shape_cast %14 : vector<8x8x128xbf16> to vector<64x128xbf16>
    %16 = vector.extract_strided_slice %1 {offsets = [2, 1, 0], sizes = [8, 8, 128], strides = [1, 1, 1]} : vector<10x10x128xbf16> to vector<8x8x128xbf16>
    %17 = vector.shape_cast %16 : vector<8x8x128xbf16> to vector<64x128xbf16>
    %18 = vector.extract_strided_slice %1 {offsets = [2, 2, 0], sizes = [8, 8, 128], strides = [1, 1, 1]} : vector<10x10x128xbf16> to vector<8x8x128xbf16>
    %19 = vector.shape_cast %18 : vector<8x8x128xbf16> to vector<64x128xbf16>
    %20 = tpu.concatenate %3, %5, %7, %9, %11, %13, %15, %17, %19 in 1 : vector<64x128xbf16>, vector<64x128xbf16>, vector<64x128xbf16>, vector<64x128xbf16>, vector<64x128xbf16>, vector<64x128xbf16>, vector<64x128xbf16>, vector<64x128xbf16>, vector<64x128xbf16> -> vector<64x1152xbf16>
    %c0_3 = arith.constant 0 : index
    %c0_4 = arith.constant 0 : index
    %21 = vector.load %arg2[%c0_3, %c0_4] : memref<1152x128xbf16, #tpu.memory_space<vmem>>, vector<1152x128xbf16>
    %cst = arith.constant dense<0.000000e+00> : vector<64x128xf32>
    %22 = tpu.matmul %20, %21, %cst {dimension_numbers = #tpu.dot_dimension_numbers<[1], [0], [0], [1], [0, 0, 1, 1], [], []>} : vector<64x1152xbf16>, vector<1152x128xbf16>, vector<64x128xf32> -> vector<64x128xf32>
    %cst_5 = arith.constant dense<0.000000e+00> : vector<128xf32>
    %23 = vector.multi_reduction <add>, %22, %cst_5 [0] : vector<64x128xf32> to vector<128xf32>
    %24 = vector.shape_cast %23 : vector<128xf32> to vector<1x128xf32>
    %25 = arith.mulf %22, %22 : vector<64x128xf32>
    %cst_6 = arith.constant dense<0.000000e+00> : vector<128xf32>
    %26 = vector.multi_reduction <add>, %25, %cst_6 [0] : vector<64x128xf32> to vector<128xf32>
    %27 = vector.shape_cast %26 : vector<128xf32> to vector<1x128xf32>
    %28 = tpu.concatenate %24, %27 in 0 : vector<1x128xf32>, vector<1x128xf32> -> vector<2x128xf32>
    %c0_7 = arith.constant 0 : index
    %c0_8 = arith.constant 0 : index
    %c0_9 = arith.constant 0 : index
    %29 = vector.load %arg4[%c0_7, %c0_8, %c0_9] : memref<1x2x128xf32, #tpu.memory_space<vmem>>, vector<1x2x128xf32>
    %30 = vector.shape_cast %29 : vector<1x2x128xf32> to vector<2x128xf32>
    %31 = vector.shape_cast %28 : vector<2x128xf32> to vector<1x2x128xf32>
    tpu.vector_store %arg4[%c0_7, %c0_8, %c0_9], %31 {strides = array<i32>} : memref<1x2x128xf32, #tpu.memory_space<vmem>>, vector<1x2x128xf32>,
    %32 = arith.truncf %22 : vector<64x128xf32> to vector<64x128xbf16>
    %c0_10 = arith.constant 0 : index
    %c0_11 = arith.constant 0 : index
    %c0_12 = arith.constant 0 : index
    %33 = vector.load %arg3[%c0_10, %c0_11, %c0_12] : memref<1x64x128xbf16, #tpu.memory_space<vmem>>, vector<1x64x128xbf16>
    %34 = vector.shape_cast %33 : vector<1x64x128xbf16> to vector<64x128xbf16>
    %35 = vector.shape_cast %32 : vector<64x128xbf16> to vector<1x64x128xbf16>
    tpu.vector_store %arg3[%c0_10, %c0_11, %c0_12], %35 {strides = array<i32>} : memref<1x64x128xbf16, #tpu.memory_space<vmem>>, vector<1x64x128xbf16>,
    return
  }
  func.func @transform_0(%arg0: i32) -> (i32, i32, i32, i32) {
    %c0_i32 = arith.constant 0 : i32
    %c0_i32_0 = arith.constant 0 : i32
    %c0_i32_1 = arith.constant 0 : i32
    %c0_i32_2 = arith.constant 0 : i32
    return %arg0, %c0_i32, %c0_i32_0, %c0_i32_1 : i32, i32, i32, i32
  }
  func.func @transform_1(%arg0: i32) -> (i32, i32) {
    %c0_i32 = arith.constant 0 : i32
    %c0_i32_0 = arith.constant 0 : i32
    %c0_i32_1 = arith.constant 0 : i32
    return %c0_i32, %c0_i32_0 : i32, i32
  }
  func.func @transform_2(%arg0: i32) -> (i32, i32, i32) {
    %c0_i32 = arith.constant 0 : i32
    %c0_i32_0 = arith.constant 0 : i32
    %c0_i32_1 = arith.constant 0 : i32
    return %arg0, %c0_i32, %c0_i32_0 : i32, i32, i32
  }
  func.func @transform_3(%arg0: i32) -> (i32, i32, i32) {
    %c0_i32 = arith.constant 0 : i32
    %c0_i32_0 = arith.constant 0 : i32
    %c0_i32_1 = arith.constant 0 : i32
    return %arg0, %c0_i32, %c0_i32_0 : i32, i32, i32
  }
}

module attributes {stable_mosaic.version = 11 : i64} {
  func.func @_bn1_relu_conv2_kernel(%arg0: i32, %arg1: memref<1x64x128xbf16, #tpu.memory_space<vmem>>, %arg2: memref<1x128xf32, #tpu.memory_space<vmem>>, %arg3: memref<1x128xf32, #tpu.memory_space<vmem>>, %arg4: memref<1152x128xbf16, #tpu.memory_space<vmem>>, %arg5: memref<1x64x128xbf16, #tpu.memory_space<vmem>>, %arg6: memref<1x2x128xf32, #tpu.memory_space<vmem>>) attributes {dimension_semantics = [#tpu.dimension_semantics<parallel>], iteration_bounds = array<i64: 2>, scalar_prefetch = 0 : i64, scratch_operands = 0 : i64, tpu.core_type = #tpu.core_type<tc>, window_params = [{transform_indices = @transform_0, window_bounds = array<i64: 1, 64, 128>}, {pipeline_mode = #tpu.pipeline_mode<synchronous>, transform_indices = @transform_1, window_bounds = array<i64: 1, 128>}, {pipeline_mode = #tpu.pipeline_mode<synchronous>, transform_indices = @transform_2, window_bounds = array<i64: 1, 128>}, {pipeline_mode = #tpu.pipeline_mode<synchronous>, transform_indices = @transform_3, window_bounds = array<i64: 1152, 128>}, {transform_indices = @transform_4, window_bounds = array<i64: 1, 64, 128>}, {transform_indices = @transform_5, window_bounds = array<i64: 1, 2, 128>}]} {
    %c0 = arith.constant 0 : index
    %c0_0 = arith.constant 0 : index
    %c0_1 = arith.constant 0 : index
    %0 = vector.load %arg1[%c0, %c0_0, %c0_1] : memref<1x64x128xbf16, #tpu.memory_space<vmem>>, vector<1x64x128xbf16>
    %1 = vector.shape_cast %0 : vector<1x64x128xbf16> to vector<64x128xbf16>
    %2 = arith.extf %1 : vector<64x128xbf16> to vector<64x128xf32>
    %c0_2 = arith.constant 0 : index
    %c0_3 = arith.constant 0 : index
    %3 = vector.load %arg2[%c0_2, %c0_3] : memref<1x128xf32, #tpu.memory_space<vmem>>, vector<1x128xf32>
    %4 = vector.broadcast %3 : vector<1x128xf32> to vector<64x128xf32>
    %5 = arith.mulf %2, %4 : vector<64x128xf32>
    %c0_4 = arith.constant 0 : index
    %c0_5 = arith.constant 0 : index
    %6 = vector.load %arg3[%c0_4, %c0_5] : memref<1x128xf32, #tpu.memory_space<vmem>>, vector<1x128xf32>
    %7 = vector.broadcast %6 : vector<1x128xf32> to vector<64x128xf32>
    %8 = arith.addf %5, %7 : vector<64x128xf32>
    %cst = arith.constant 0.000000e+00 : f32
    %9 = vector.broadcast %cst : f32 to vector<64x128xf32>
    %10 = arith.maximumf %8, %9 : vector<64x128xf32>
    %11 = arith.truncf %10 : vector<64x128xf32> to vector<64x128xbf16>
    %12 = vector.shape_cast %11 : vector<64x128xbf16> to vector<8x8x128xbf16>
    %cst_6 = arith.constant 0.000000e+00 : bf16
    %13 = vector.broadcast %cst_6 : bf16 to vector<8x1x128xbf16>
    %14 = tpu.concatenate %13, %12, %13 in 1 : vector<8x1x128xbf16>, vector<8x8x128xbf16>, vector<8x1x128xbf16> -> vector<8x10x128xbf16>
    %cst_7 = arith.constant 0.000000e+00 : bf16
    %15 = vector.broadcast %cst_7 : bf16 to vector<1x10x128xbf16>
    %16 = tpu.concatenate %15, %14, %15 in 0 : vector<1x10x128xbf16>, vector<8x10x128xbf16>, vector<1x10x128xbf16> -> vector<10x10x128xbf16>
    %17 = vector.extract_strided_slice %16 {offsets = [0, 0, 0], sizes = [8, 8, 128], strides = [1, 1, 1]} : vector<10x10x128xbf16> to vector<8x8x128xbf16>
    %18 = vector.shape_cast %17 : vector<8x8x128xbf16> to vector<64x128xbf16>
    %19 = vector.extract_strided_slice %16 {offsets = [0, 1, 0], sizes = [8, 8, 128], strides = [1, 1, 1]} : vector<10x10x128xbf16> to vector<8x8x128xbf16>
    %20 = vector.shape_cast %19 : vector<8x8x128xbf16> to vector<64x128xbf16>
    %21 = vector.extract_strided_slice %16 {offsets = [0, 2, 0], sizes = [8, 8, 128], strides = [1, 1, 1]} : vector<10x10x128xbf16> to vector<8x8x128xbf16>
    %22 = vector.shape_cast %21 : vector<8x8x128xbf16> to vector<64x128xbf16>
    %23 = vector.extract_strided_slice %16 {offsets = [1, 0, 0], sizes = [8, 8, 128], strides = [1, 1, 1]} : vector<10x10x128xbf16> to vector<8x8x128xbf16>
    %24 = vector.shape_cast %23 : vector<8x8x128xbf16> to vector<64x128xbf16>
    %25 = vector.extract_strided_slice %16 {offsets = [1, 1, 0], sizes = [8, 8, 128], strides = [1, 1, 1]} : vector<10x10x128xbf16> to vector<8x8x128xbf16>
    %26 = vector.shape_cast %25 : vector<8x8x128xbf16> to vector<64x128xbf16>
    %27 = vector.extract_strided_slice %16 {offsets = [1, 2, 0], sizes = [8, 8, 128], strides = [1, 1, 1]} : vector<10x10x128xbf16> to vector<8x8x128xbf16>
    %28 = vector.shape_cast %27 : vector<8x8x128xbf16> to vector<64x128xbf16>
    %29 = vector.extract_strided_slice %16 {offsets = [2, 0, 0], sizes = [8, 8, 128], strides = [1, 1, 1]} : vector<10x10x128xbf16> to vector<8x8x128xbf16>
    %30 = vector.shape_cast %29 : vector<8x8x128xbf16> to vector<64x128xbf16>
    %31 = vector.extract_strided_slice %16 {offsets = [2, 1, 0], sizes = [8, 8, 128], strides = [1, 1, 1]} : vector<10x10x128xbf16> to vector<8x8x128xbf16>
    %32 = vector.shape_cast %31 : vector<8x8x128xbf16> to vector<64x128xbf16>
    %33 = vector.extract_strided_slice %16 {offsets = [2, 2, 0], sizes = [8, 8, 128], strides = [1, 1, 1]} : vector<10x10x128xbf16> to vector<8x8x128xbf16>
    %34 = vector.shape_cast %33 : vector<8x8x128xbf16> to vector<64x128xbf16>
    %35 = tpu.concatenate %18, %20, %22, %24, %26, %28, %30, %32, %34 in 1 : vector<64x128xbf16>, vector<64x128xbf16>, vector<64x128xbf16>, vector<64x128xbf16>, vector<64x128xbf16>, vector<64x128xbf16>, vector<64x128xbf16>, vector<64x128xbf16>, vector<64x128xbf16> -> vector<64x1152xbf16>
    %c0_8 = arith.constant 0 : index
    %c0_9 = arith.constant 0 : index
    %36 = vector.load %arg4[%c0_8, %c0_9] : memref<1152x128xbf16, #tpu.memory_space<vmem>>, vector<1152x128xbf16>
    %cst_10 = arith.constant dense<0.000000e+00> : vector<64x128xf32>
    %37 = tpu.matmul %35, %36, %cst_10 {dimension_numbers = #tpu.dot_dimension_numbers<[1], [0], [0], [1], [0, 0, 1, 1], [], []>} : vector<64x1152xbf16>, vector<1152x128xbf16>, vector<64x128xf32> -> vector<64x128xf32>
    %cst_11 = arith.constant dense<0.000000e+00> : vector<128xf32>
    %38 = vector.multi_reduction <add>, %37, %cst_11 [0] : vector<64x128xf32> to vector<128xf32>
    %39 = vector.shape_cast %38 : vector<128xf32> to vector<1x128xf32>
    %40 = arith.mulf %37, %37 : vector<64x128xf32>
    %cst_12 = arith.constant dense<0.000000e+00> : vector<128xf32>
    %41 = vector.multi_reduction <add>, %40, %cst_12 [0] : vector<64x128xf32> to vector<128xf32>
    %42 = vector.shape_cast %41 : vector<128xf32> to vector<1x128xf32>
    %43 = tpu.concatenate %39, %42 in 0 : vector<1x128xf32>, vector<1x128xf32> -> vector<2x128xf32>
    %c0_13 = arith.constant 0 : index
    %c0_14 = arith.constant 0 : index
    %c0_15 = arith.constant 0 : index
    %44 = vector.load %arg6[%c0_13, %c0_14, %c0_15] : memref<1x2x128xf32, #tpu.memory_space<vmem>>, vector<1x2x128xf32>
    %45 = vector.shape_cast %44 : vector<1x2x128xf32> to vector<2x128xf32>
    %46 = vector.shape_cast %43 : vector<2x128xf32> to vector<1x2x128xf32>
    tpu.vector_store %arg6[%c0_13, %c0_14, %c0_15], %46 {strides = array<i32>} : memref<1x2x128xf32, #tpu.memory_space<vmem>>, vector<1x2x128xf32>,
    %47 = arith.truncf %37 : vector<64x128xf32> to vector<64x128xbf16>
    %c0_16 = arith.constant 0 : index
    %c0_17 = arith.constant 0 : index
    %c0_18 = arith.constant 0 : index
    %48 = vector.load %arg5[%c0_16, %c0_17, %c0_18] : memref<1x64x128xbf16, #tpu.memory_space<vmem>>, vector<1x64x128xbf16>
    %49 = vector.shape_cast %48 : vector<1x64x128xbf16> to vector<64x128xbf16>
    %50 = vector.shape_cast %47 : vector<64x128xbf16> to vector<1x64x128xbf16>
    tpu.vector_store %arg5[%c0_16, %c0_17, %c0_18], %50 {strides = array<i32>} : memref<1x64x128xbf16, #tpu.memory_space<vmem>>, vector<1x64x128xbf16>,
    return
  }
  func.func @transform_0(%arg0: i32) -> (i32, i32, i32) {
    %c0_i32 = arith.constant 0 : i32
    %c0_i32_0 = arith.constant 0 : i32
    %c0_i32_1 = arith.constant 0 : i32
    return %arg0, %c0_i32, %c0_i32_0 : i32, i32, i32
  }
  func.func @transform_1(%arg0: i32) -> (i32, i32) {
    %c0_i32 = arith.constant 0 : i32
    %c0_i32_0 = arith.constant 0 : i32
    %c0_i32_1 = arith.constant 0 : i32
    return %c0_i32, %c0_i32_0 : i32, i32
  }
  func.func @transform_2(%arg0: i32) -> (i32, i32) {
    %c0_i32 = arith.constant 0 : i32
    %c0_i32_0 = arith.constant 0 : i32
    %c0_i32_1 = arith.constant 0 : i32
    return %c0_i32, %c0_i32_0 : i32, i32
  }
  func.func @transform_3(%arg0: i32) -> (i32, i32) {
    %c0_i32 = arith.constant 0 : i32
    %c0_i32_0 = arith.constant 0 : i32
    %c0_i32_1 = arith.constant 0 : i32
    return %c0_i32, %c0_i32_0 : i32, i32
  }
  func.func @transform_4(%arg0: i32) -> (i32, i32, i32) {
    %c0_i32 = arith.constant 0 : i32
    %c0_i32_0 = arith.constant 0 : i32
    %c0_i32_1 = arith.constant 0 : i32
    return %arg0, %c0_i32, %c0_i32_0 : i32, i32, i32
  }
  func.func @transform_5(%arg0: i32) -> (i32, i32, i32) {
    %c0_i32 = arith.constant 0 : i32
    %c0_i32_0 = arith.constant 0 : i32
    %c0_i32_1 = arith.constant 0 : i32
    return %arg0, %c0_i32, %c0_i32_0 : i32, i32, i32
  }
}

module attributes {stable_mosaic.version = 11 : i64} {
  func.func @_bn2_relu_residual_kernel(%arg0: i32, %arg1: memref<1x64x128xbf16, #tpu.memory_space<vmem>>, %arg2: memref<1x128xf32, #tpu.memory_space<vmem>>, %arg3: memref<1x128xf32, #tpu.memory_space<vmem>>, %arg4: memref<1x64x128xbf16, #tpu.memory_space<vmem>>, %arg5: memref<128x128xbf16, #tpu.memory_space<vmem>>, %arg6: memref<1x64x128xf32, #tpu.memory_space<vmem>>) attributes {dimension_semantics = [#tpu.dimension_semantics<parallel>], iteration_bounds = array<i64: 2>, scalar_prefetch = 0 : i64, scratch_operands = 0 : i64, tpu.core_type = #tpu.core_type<tc>, window_params = [{transform_indices = @transform_0, window_bounds = array<i64: 1, 64, 128>}, {pipeline_mode = #tpu.pipeline_mode<synchronous>, transform_indices = @transform_1, window_bounds = array<i64: 1, 128>}, {pipeline_mode = #tpu.pipeline_mode<synchronous>, transform_indices = @transform_2, window_bounds = array<i64: 1, 128>}, {transform_indices = @transform_3, window_bounds = array<i64: 1, 64, 128>}, {pipeline_mode = #tpu.pipeline_mode<synchronous>, transform_indices = @transform_4, window_bounds = array<i64: 128, 128>}, {transform_indices = @transform_5, window_bounds = array<i64: 1, 64, 128>}]} {
    %c0 = arith.constant 0 : index
    %c0_0 = arith.constant 0 : index
    %c0_1 = arith.constant 0 : index
    %0 = vector.load %arg1[%c0, %c0_0, %c0_1] : memref<1x64x128xbf16, #tpu.memory_space<vmem>>, vector<1x64x128xbf16>
    %1 = vector.shape_cast %0 : vector<1x64x128xbf16> to vector<64x128xbf16>
    %2 = arith.extf %1 : vector<64x128xbf16> to vector<64x128xf32>
    %c0_2 = arith.constant 0 : index
    %c0_3 = arith.constant 0 : index
    %3 = vector.load %arg2[%c0_2, %c0_3] : memref<1x128xf32, #tpu.memory_space<vmem>>, vector<1x128xf32>
    %4 = vector.broadcast %3 : vector<1x128xf32> to vector<64x128xf32>
    %5 = arith.mulf %2, %4 : vector<64x128xf32>
    %c0_4 = arith.constant 0 : index
    %c0_5 = arith.constant 0 : index
    %6 = vector.load %arg3[%c0_4, %c0_5] : memref<1x128xf32, #tpu.memory_space<vmem>>, vector<1x128xf32>
    %7 = vector.broadcast %6 : vector<1x128xf32> to vector<64x128xf32>
    %8 = arith.addf %5, %7 : vector<64x128xf32>
    %cst = arith.constant 0.000000e+00 : f32
    %9 = vector.broadcast %cst : f32 to vector<64x128xf32>
    %10 = arith.maximumf %8, %9 : vector<64x128xf32>
    %c0_6 = arith.constant 0 : index
    %c0_7 = arith.constant 0 : index
    %c0_8 = arith.constant 0 : index
    %11 = vector.load %arg4[%c0_6, %c0_7, %c0_8] : memref<1x64x128xbf16, #tpu.memory_space<vmem>>, vector<1x64x128xbf16>
    %12 = vector.shape_cast %11 : vector<1x64x128xbf16> to vector<64x128xbf16>
    %c0_9 = arith.constant 0 : index
    %c0_10 = arith.constant 0 : index
    %13 = vector.load %arg5[%c0_9, %c0_10] : memref<128x128xbf16, #tpu.memory_space<vmem>>, vector<128x128xbf16>
    %cst_11 = arith.constant dense<0.000000e+00> : vector<64x128xf32>
    %14 = tpu.matmul %12, %13, %cst_11 {dimension_numbers = #tpu.dot_dimension_numbers<[1], [0], [0], [1], [0, 0, 1, 1], [], []>} : vector<64x128xbf16>, vector<128x128xbf16>, vector<64x128xf32> -> vector<64x128xf32>
    %15 = arith.addf %10, %14 : vector<64x128xf32>
    %c0_12 = arith.constant 0 : index
    %c0_13 = arith.constant 0 : index
    %c0_14 = arith.constant 0 : index
    %16 = vector.load %arg6[%c0_12, %c0_13, %c0_14] : memref<1x64x128xf32, #tpu.memory_space<vmem>>, vector<1x64x128xf32>
    %17 = vector.shape_cast %16 : vector<1x64x128xf32> to vector<64x128xf32>
    %18 = vector.shape_cast %15 : vector<64x128xf32> to vector<1x64x128xf32>
    tpu.vector_store %arg6[%c0_12, %c0_13, %c0_14], %18 {strides = array<i32>} : memref<1x64x128xf32, #tpu.memory_space<vmem>>, vector<1x64x128xf32>,
    return
  }
  func.func @transform_0(%arg0: i32) -> (i32, i32, i32) {
    %c0_i32 = arith.constant 0 : i32
    %c0_i32_0 = arith.constant 0 : i32
    %c0_i32_1 = arith.constant 0 : i32
    return %arg0, %c0_i32, %c0_i32_0 : i32, i32, i32
  }
  func.func @transform_1(%arg0: i32) -> (i32, i32) {
    %c0_i32 = arith.constant 0 : i32
    %c0_i32_0 = arith.constant 0 : i32
    %c0_i32_1 = arith.constant 0 : i32
    return %c0_i32, %c0_i32_0 : i32, i32
  }
  func.func @transform_2(%arg0: i32) -> (i32, i32) {
    %c0_i32 = arith.constant 0 : i32
    %c0_i32_0 = arith.constant 0 : i32
    %c0_i32_1 = arith.constant 0 : i32
    return %c0_i32, %c0_i32_0 : i32, i32
  }
  func.func @transform_3(%arg0: i32) -> (i32, i32, i32) {
    %c0_i32 = arith.constant 0 : i32
    %c0_i32_0 = arith.constant 0 : i32
    %c0_i32_1 = arith.constant 0 : i32
    return %arg0, %c0_i32, %c0_i32_0 : i32, i32, i32
  }
  func.func @transform_4(%arg0: i32) -> (i32, i32) {
    %c0_i32 = arith.constant 0 : i32
    %c0_i32_0 = arith.constant 0 : i32
    %c0_i32_1 = arith.constant 0 : i32
    return %c0_i32, %c0_i32_0 : i32, i32
  }
  func.func @transform_5(%arg0: i32) -> (i32, i32, i32) {
    %c0_i32 = arith.constant 0 : i32
    %c0_i32_0 = arith.constant 0 : i32
    %c0_i32_1 = arith.constant 0 : i32
    return %arg0, %c0_i32, %c0_i32_0 : i32, i32, i32
  }
}

</mosaic_0001>

<llo_original>
// kernel: tile.23
$region0: #{tile.23}
  #allocation0 [shape = 's32[1]{0}', space=sflag, size = 0x4, scoped, tag = 'scoped memory for tile.23']
  %s0 = inlined_call_operand.vmem [shape: f32[16], index: 0, kind: input, shape index: {}]
  %s1 = inlined_call_operand.vmem [shape: f32[8,16], index: 1, kind: output, shape index: {}]
  // Predicated region
  $region2: #{tile.23} parent=0 // pred_check
    _
  $region3: #{tile.23} parent=0 // pred_check_branch
    %3 = sbr.rel (0) target = $region5
  $region4: #{tile.23} parent=0 // pred_region
    _
  $region5: #{tile.23} parent=0 // pred_fallthru
    _
  %v4 = vld [vmem:[%s0] ss:$0 sm:$0xff]
  %5 = vst [vmem:[%s1] sm:$0xff] %v4

// kernel: tile.24
$region0: #{tile.24}
  %s0 = inlined_call_operand.vmem [shape: f32[8,16], index: 0, kind: input, shape index: {}]
  %s1 = inlined_call_operand.vmem [shape: f32[1,128], index: 1, kind: output, shape index: {}]
  $region1: #{tile.24} parent=0
    #allocation0 [shape = 'u8[4096]{0}', space=vmem, size = 0x1000, scoped, tag = 'scoped mem for output reshape']
    %v2 = vld [vmem:[%s0] sm:$0x1]
    %vm3 = vcmask 130048
    %4 = vst.msk [vmem:[#allocation0] sm:$0x1] %vm3, %v2
    %s5 = scalar_lea.vmem %s0, 7
    %v6 = vld [vmem:[%s5] sm:$0x1]
    %7 = vrot.lane.b32.xlu0 %v6, 112
    %v8 = vpop.permute.xlu0 %7
    %vm9 = vcmask 1048448
    %10 = vst.msk [vmem:[#allocation0] sm:$0x1] %vm9, %v8
    %s11 = scalar_lea.vmem %s0, 6
    %v12 = vld [vmem:[%s11] sm:$0x1]
    %13 = vrot.lane.b32.xlu0 %v12, 96
    %v14 = vpop.permute.xlu0 %13
    %vm15 = vcmask 917248
    %16 = vst.msk [vmem:[#allocation0] sm:$0x1] %vm15, %v14
    %s17 = scalar_lea.vmem %s0, 5
    %v18 = vld [vmem:[%s17] sm:$0x1]
    %19 = vrot.lane.b32.xlu0 %v18, 80
    %v20 = vpop.permute.xlu0 %19
    %vm21 = vcmask 786048
    %22 = vst.msk [vmem:[#allocation0] sm:$0x1] %vm21, %v20
    %s23 = scalar_lea.vmem %s0, 4
    %v24 = vld [vmem:[%s23] sm:$0x1]
    %25 = vrot.lane.b32.xlu0 %v24, 64
    %v26 = vpop.permute.xlu0 %25
    %vm27 = vcmask 654848
    %28 = vst.msk [vmem:[#allocation0] sm:$0x1] %vm27, %v26
    %s29 = scalar_lea.vmem %s0, 3
    %v30 = vld [vmem:[%s29] sm:$0x1]
    %31 = vrot.lane.b32.xlu0 %v30, 48
    %v32 = vpop.permute.xlu0 %31
    %vm33 = vcmask 523648
    %34 = vst.msk [vmem:[#allocation0] sm:$0x1] %vm33, %v32
    %s35 = scalar_lea.vmem %s0, 2
    %v36 = vld [vmem:[%s35] sm:$0x1]
    %37 = vrot.lane.b32.xlu0 %v36, 32
    %v38 = vpop.permute.xlu0 %37
    %vm39 = vcmask 392448
    %40 = vst.msk [vmem:[#allocation0] sm:$0x1] %vm39, %v38
    %s41 = scalar_lea.vmem %s0, 1
    %v42 = vld [vmem:[%s41] sm:$0x1]
    %43 = vrot.lane.b32.xlu0 %v42, 16
    %v44 = vpop.permute.xlu0 %43
    %vm45 = vcmask 261248
    %46 = vst.msk [vmem:[#allocation0] sm:$0x1] %vm45, %v44
    %s48 = ssub.s32 2, 1
    %v49 = vld [vmem:[#allocation0] sm:%s48]
    %s51 = ssub.s32 2, 1
    %52 = vst [vmem:[%s1] sm:%s51] %v49

// kernel: conv3d_block_forward.3
$region0: #{conv3d_block_forward.3}
  #allocation0 [shape = 'u32[]', space=smem, size = 0x4, offset = 0x4, fixed_abs, tag = 'smem constant byte address 0x4 - core index']
  #allocation1 [shape = 'u32[72,128]{1,0:T(1,128)}', space=vmem, size = 0x9000, scoped, tag = 'internal scratch']
  %s0 = inlined_call_operand.vmem [shape: bf16[2,10,10,128], index: 0, kind: input, shape index: {}]
  %s1 = inlined_call_operand.vmem [shape: bf16[1152,128], index: 1, kind: input, shape index: {}]
  %s2 = inlined_call_operand.vmem [shape: bf16[2,64,128], index: 2, kind: output, shape index: {0}]
  %s3 = inlined_call_operand.vmem [shape: f32[2,2,128], index: 3, kind: output, shape index: {1}]
  %4 = xla_tuple %s2, %s3
  %s5 = sld [smem:[#allocation0]]
  $region49: #{conv3d_block_forward.3} parent=0
    _
  %s7 = ssub.s32 1, %s5
  %s8 = scalar_select 0, %s7, %s5
  loop: start=0, step=1, limit=4
  $region2: #{conv3d_block_forward.3} parent=0 // loop_pre_header
    _
  $region3: #{conv3d_block_forward.3} parent=0 // loop_header
    %s10 = sphi 0, %s14
    %p11 = scmp.ge.s32.totalorder %s10, 4
    %s20 = sphi 0, %s22
    %s23 = sphi 0, %s20
    %s24 = sphi 0, %s23
    %s40 = sphi 0, %s24
    %s44 = sphi 0, %s44
    %s46 = sphi 0, %s44
    %s47 = sphi 0, %s46
    %s61 = sphi 0, %s47
    %s67 = sphi 0, %s69
    %s70 = sphi 0, %s67
    %s71 = sphi 0, %s70
    %s87 = sphi 0, %s71
    %s93 = sphi 0, %s95
    %s96 = sphi 0, %s93
    %s97 = sphi 0, %s96
    %s113 = sphi 0, %s97
  $region4: #{conv3d_block_forward.3} parent=0 // loop_header_branch
    %13 = sbr.rel (%p11) target = $region8
  $region5: #{conv3d_block_forward.3} parent=0 // loop_body
    %s15 = ssub.s32 %s10, 1
    %s16 = ssub.s32 %s10, 2
    %s17 = sadd.s32 %s10, 1
    %s18 = ssub.s32 %s10, %s17
    %p19 = scmp.eq.s32.totalorder %s18, 0
    %s21 = sadd.s32 %s20, 1
    %s22 = scalar_select %p19, %s20, %s21
    %p25 = pneg %p19
    %p26 = scmp.eq.s32.totalorder %s10, 1
    %p27 = por %p25, %p26
    %p28 = scmp.ne.s32.totalorder %s20, %s23
    %p29 = scmp.eq.s32.totalorder %s10, 0
    %p30 = por %p28, %p29
    %p31 = scmp.ne.s32.totalorder %s20, %s23
    %p32 = scmp.eq.s32.totalorder %s15, 1
    %p33 = por %p31, %p32
    %p34 = scmp.ne.s32.totalorder %s23, %s24
    %p35 = scmp.eq.s32.totalorder %s15, 0
    %p36 = por %p34, %p35
    %p37 = scmp.ne.s32.totalorder %s23, %s24
    %p38 = scmp.eq.s32.totalorder %s16, 1
    %p39 = por %p37, %p38
    %p41 = scmp.ne.s32.totalorder %s24, %s40
    %p42 = scmp.eq.s32.totalorder %s16, 0
    %p43 = por %p41, %p42
    %s45 = sadd.s32 %s44, 1
    %p48 = scmp.eq.s32.totalorder %s10, 1
    %p49 = scmp.ne.s32.totalorder %s44, %s46
    %p50 = scmp.eq.s32.totalorder %s10, 0
    %p51 = por %p49, %p50
    %p52 = scmp.ne.s32.totalorder %s44, %s46
    %p53 = scmp.eq.s32.totalorder %s15, 1
    %p54 = por %p52, %p53
    %p55 = scmp.ne.s32.totalorder %s46, %s47
    %p56 = scmp.eq.s32.totalorder %s15, 0
    %p57 = por %p55, %p56
    %p58 = scmp.ne.s32.totalorder %s46, %s47
    %p59 = scmp.eq.s32.totalorder %s16, 1
    %p60 = por %p58, %p59
    %p62 = scmp.ne.s32.totalorder %s47, %s61
    %p63 = scmp.eq.s32.totalorder %s16, 0
    %p64 = por %p62, %p63
    %s65 = ssub.s32 %s10, %s17
    %p66 = scmp.eq.s32.totalorder %s65, 0
    %s68 = sadd.s32 %s67, 1
    %s69 = scalar_select %p66, %s67, %s68
    %p72 = pneg %p66
    %p73 = scmp.eq.s32.totalorder %s10, 1
    %p74 = por %p72, %p73
    %p75 = scmp.ne.s32.totalorder %s67, %s70
    %p76 = scmp.eq.s32.totalorder %s10, 0
    %p77 = por %p75, %p76
    %p78 = scmp.ne.s32.totalorder %s67, %s70
    %p79 = scmp.eq.s32.totalorder %s15, 1
    %p80 = por %p78, %p79
    %p81 = scmp.ne.s32.totalorder %s70, %s71
    %p82 = scmp.eq.s32.totalorder %s15, 0
    %p83 = por %p81, %p82
    %p84 = scmp.ne.s32.totalorder %s70, %s71
    %p85 = scmp.eq.s32.totalorder %s16, 1
    %p86 = por %p84, %p85
    %p88 = scmp.ne.s32.totalorder %s71, %s87
    %p89 = scmp.eq.s32.totalorder %s16, 0
    %p90 = por %p88, %p89
    %s91 = ssub.s32 %s10, %s17
    %p92 = scmp.eq.s32.totalorder %s91, 0
    %s94 = sadd.s32 %s93, 1
    %s95 = scalar_select %p92, %s93, %s94
    %p98 = pneg %p92
    %p99 = scmp.eq.s32.totalorder %s10, 1
    %p100 = por %p98, %p99
    %p101 = scmp.ne.s32.totalorder %s93, %s96
    %p102 = scmp.eq.s32.totalorder %s10, 0
    %p103 = por %p101, %p102
    %p104 = scmp.ne.s32.totalorder %s93, %s96
    %p105 = scmp.eq.s32.totalorder %s15, 1
    %p106 = por %p104, %p105
    %p107 = scmp.ne.s32.totalorder %s96, %s97
    %p108 = scmp.eq.s32.totalorder %s15, 0
    %p109 = por %p107, %p108
    %p110 = scmp.ne.s32.totalorder %s96, %s97
    %p111 = scmp.eq.s32.totalorder %s16, 1
    %p112 = por %p110, %p111
    %p114 = scmp.ne.s32.totalorder %s97, %s113
    %p115 = scmp.eq.s32.totalorder %s16, 0
    %p116 = por %p114, %p115
    %p117 = scmp.le.s32.totalorder 1, %s10
    %p118 = scmp.lt.s32.totalorder %s10, 3
    %p119 = pnand %p117, %p118
    %p120 = pneg %p119
    // Predicated region
    $region9: #{conv3d_block_forward.3} parent=5 // pred_check
      _
    $region10: #{conv3d_block_forward.3} parent=5 // pred_check_branch
      %122 = sbr.rel (%p119) target = $region12
    $region11: #{conv3d_block_forward.3} parent=5 // pred_region
      %s123 = ssub.s32 %s10, 1
      // Predicated region
      $region13: #{conv3d_block_forward.3} parent=11 // pred_check
        %p124 = pneg %p57
      $region14: #{conv3d_block_forward.3} parent=11 // pred_check_branch
        %126 = sbr.rel (%p124) target = $region16
      $region15: #{conv3d_block_forward.3} parent=11 // pred_region
        _
      $region16: #{conv3d_block_forward.3} parent=11 // pred_fallthru
        _
    $region12: #{conv3d_block_forward.3} parent=5 // pred_fallthru
      _
    %p127 = scmp.lt.s32.totalorder %s10, 2
    // Predicated region
    $region17: #{conv3d_block_forward.3} parent=5 // pred_check
      %p128 = pneg %p127
    $region18: #{conv3d_block_forward.3} parent=5 // pred_check_branch
      %130 = sbr.rel (%p128) target = $region20
    $region19: #{conv3d_block_forward.3} parent=5 // pred_region
      // Predicated region
      $region21: #{conv3d_block_forward.3} parent=19 // pred_check
        %p131 = pneg %p30
      $region22: #{conv3d_block_forward.3} parent=19 // pred_check_branch
        %133 = sbr.rel (%p131) target = $region24
      $region23: #{conv3d_block_forward.3} parent=19 // pred_region
        %p134 = scmp.lt.s32.totalorder %s10, 1
        %s135 = scalar_select %p134, %s10, 1
        %s136 = smul.addr %s135, 20
        %s137 = smul.addr %s136, 4
        %s138 = scalar_lea.vmem %s0, %s137
      $region24: #{conv3d_block_forward.3} parent=19 // pred_fallthru
        _
    $region20: #{conv3d_block_forward.3} parent=5 // pred_fallthru
      _
    %p139 = scmp.le.s32.totalorder 1, %s10
    %p140 = scmp.lt.s32.totalorder %s10, 3
    %p141 = pnand %p139, %p140
    %p142 = pneg %p141
    // Predicated region
    $region25: #{conv3d_block_forward.3} parent=5 // pred_check
      _
    $region26: #{conv3d_block_forward.3} parent=5 // pred_check_branch
      %144 = sbr.rel (%p141) target = $region28
    $region27: #{conv3d_block_forward.3} parent=5 // pred_region
      %s145 = ssub.s32 %s10, 1
      %p146 = scmp.lt.s32.totalorder %s15, 1
      %s147 = scalar_select %p146, %s15, 1
      %s148 = smul.addr %s147, 20
      %s149 = smul.addr %s148, 4
      %s150 = scalar_lea.vmem %s0, %s149
      %p151 = pneg %p36
      %p152 = pneg %p33
      %p153 = pneg %p57
      %p154 = pneg %p54
      %p155 = pneg %p83
      %p156 = pneg %p80
      %p157 = scmp.lt.s32.totalorder %s15, 1
      %s158 = scalar_select %p157, %s15, 1
      %s159 = smul.addr %s158, 8
      %s160 = smul.addr %s159, 4
      %s161 = scalar_lea.vmem %s2, %s160
      %p162 = pneg %p109
      %p163 = pneg %p106
      %p164 = scmp.lt.s32.totalorder %s15, 1
      %s165 = scalar_select %p164, %s15, 1
      %s166 = smul.addr %s165, 2
      %s167 = scalar_lea.vmem %s3, %s166
      %p168 = scmp.lt.s32.totalorder %s15, 1
      %s169 = scalar_select %p168, %s15, 1
      %s170 = smul.addr %s169, 20
      %s171 = smul.addr %s170, 4
      %s172 = scalar_lea.vmem %s0, %s171
      %p173 = scmp.lt.s32.totalorder %s15, 1
      %s174 = scalar_select %p173, %s15, 1
      %s175 = smul.addr %s174, 8
      %s176 = smul.addr %s175, 4
      %s177 = scalar_lea.vmem %s2, %s176
      %p178 = scmp.lt.s32.totalorder %s15, 1
      %s179 = scalar_select %p178, %s15, 1
      %s180 = smul.addr %s179, 2
      %s181 = scalar_lea.vmem %s3, %s180
      %v182 = vld [vmem:[%s172] sm:$0xf]
      %v183 = vld [vmem:[%s172 + $0x4] sm:$0x1]
      %v184 = vld [vmem:[%s172 + $0x8] sm:$0xf]
      %v185 = vld [vmem:[%s172 + $0xc] sm:$0x1]
      %v186 = vld [vmem:[%s172 + $0x10] sm:$0xf]
      %v187 = vld [vmem:[%s172 + $0x14] sm:$0x1]
      %v188 = vld [vmem:[%s172 + $0x18] sm:$0xf]
      %v189 = vld [vmem:[%s172 + $0x1c] sm:$0x1]
      %v190 = vld [vmem:[%s172 + $0x20] sm:$0xf]
      %v191 = vld [vmem:[%s172 + $0x24] sm:$0x1]
      %v192 = vld [vmem:[%s172 + $0x28] sm:$0xf]
      %v193 = vld [vmem:[%s172 + $0x2c] sm:$0x1]
      %v194 = vld [vmem:[%s172 + $0x30] sm:$0xf]
      %v195 = vld [vmem:[%s172 + $0x34] sm:$0x1]
      %v196 = vld [vmem:[%s172 + $0x38] sm:$0xf]
      %v197 = vld [vmem:[%s172 + $0x3c] sm:$0x1]
      %v198 = vld [vmem:[%s172 + $0x40] sm:$0xf]
      %v199 = vld [vmem:[%s172 + $0x44] sm:$0x1]
      %v200 = vld [vmem:[%s172 + $0x48] sm:$0xf]
      %v201 = vld [vmem:[%s172 + $0x4c] sm:$0x1]
      %vm202 = vsmask.f32 3328
      %vm203 = vsmask.f32 7440
      %vm204 = vmor %vm202, %vm203
      %v206 = vshrl.u32 %v182, 16
      %v208 = vrot.slane %v206, 4
      %v209 = vshll.u32 %v182, 16
      %v211 = vrot.slane %v209, 5
      %v212 = vor.u32 %v208, %v211
      %v213 = vrot.slane %v212, 4
      %v215 = vshll.u32 %v183, 16
      %v217 = vrot.slane %v215, 5
      %v218 = vsel %vm204, %v213, %v217
      %v220 = vshrl.u32 %v184, 16
      %v222 = vrot.slane %v220, 4
      %v223 = vshll.u32 %v184, 16
      %v225 = vrot.slane %v223, 5
      %v226 = vor.u32 %v222, %v225
      %v227 = vrot.slane %v226, 4
      %v229 = vshll.u32 %v185, 16
      %v231 = vrot.slane %v229, 5
      %v232 = vsel %vm204, %v227, %v231
      %v234 = vshrl.u32 %v186, 16
      %v236 = vrot.slane %v234, 4
      %v237 = vshll.u32 %v186, 16
      %v239 = vrot.slane %v237, 5
      %v240 = vor.u32 %v236, %v239
      %v241 = vrot.slane %v240, 4
      %v243 = vshll.u32 %v187, 16
      %v245 = vrot.slane %v243, 5
      %v246 = vsel %vm204, %v241, %v245
      %v248 = vshrl.u32 %v188, 16
      %v250 = vrot.slane %v248, 4
      %v251 = vshll.u32 %v188, 16
      %v253 = vrot.slane %v251, 5
      %v254 = vor.u32 %v250, %v253
      %v255 = vrot.slane %v254, 4
      %v257 = vshll.u32 %v189, 16
      %v259 = vrot.slane %v257, 5
      %v260 = vsel %vm204, %v255, %v259
      %v262 = vshrl.u32 %v190, 16
      %v264 = vrot.slane %v262, 4
      %v265 = vshll.u32 %v190, 16
      %v267 = vrot.slane %v265, 5
      %v268 = vor.u32 %v264, %v267
      %v269 = vrot.slane %v268, 4
      %v271 = vshll.u32 %v191, 16
      %v273 = vrot.slane %v271, 5
      %v274 = vsel %vm204, %v269, %v273
      %v276 = vshrl.u32 %v192, 16
      %v278 = vrot.slane %v276, 4
      %v279 = vshll.u32 %v192, 16
      %v281 = vrot.slane %v279, 5
      %v282 = vor.u32 %v278, %v281
      %v283 = vrot.slane %v282, 4
      %v285 = vshll.u32 %v193, 16
      %v287 = vrot.slane %v285, 5
      %v288 = vsel %vm204, %v283, %v287
      %v290 = vshrl.u32 %v194, 16
      %v292 = vrot.slane %v290, 4
      %v293 = vshll.u32 %v194, 16
      %v295 = vrot.slane %v293, 5
      %v296 = vor.u32 %v292, %v295
      %v297 = vrot.slane %v296, 4
      %v299 = vshll.u32 %v195, 16
      %v301 = vrot.slane %v299, 5
      %v302 = vsel %vm204, %v297, %v301
      %v304 = vshrl.u32 %v196, 16
      %v306 = vrot.slane %v304, 4
      %v307 = vshll.u32 %v196, 16
      %v309 = vrot.slane %v307, 5
      %v310 = vor.u32 %v306, %v309
      %v311 = vrot.slane %v310, 4
      %v313 = vshll.u32 %v197, 16
      %v315 = vrot.slane %v313, 5
      %v316 = vsel %vm204, %v311, %v315
      %vm333 = vcmask 1042432
      %vm334 = vcmask 1046532
      %vm335 = vmor %vm333, %vm334
      %v336 = vrot.slane %v182, 5
      %v337 = vrot.slane %v336, 4
      %v338 = vrot.slane %v183, 5
      %v339 = vsel %vm335, %v337, %v338
      %v340 = vrot.slane %v184, 5
      %v341 = vrot.slane %v340, 4
      %v342 = vrot.slane %v185, 5
      %v343 = vsel %vm335, %v341, %v342
      %v344 = vrot.slane %v186, 5
      %v345 = vrot.slane %v344, 4
      %v346 = vrot.slane %v187, 5
      %v347 = vsel %vm335, %v345, %v346
      %v348 = vrot.slane %v188, 5
      %v349 = vrot.slane %v348, 4
      %v350 = vrot.slane %v189, 5
      %v351 = vsel %vm335, %v349, %v350
      %v352 = vrot.slane %v190, 5
      %v353 = vrot.slane %v352, 4
      %v354 = vrot.slane %v191, 5
      %v355 = vsel %vm335, %v353, %v354
      %v356 = vrot.slane %v192, 5
      %v357 = vrot.slane %v356, 4
      %v358 = vrot.slane %v193, 5
      %v359 = vsel %vm335, %v357, %v358
      %v360 = vrot.slane %v194, 5
      %v361 = vrot.slane %v360, 4
      %v362 = vrot.slane %v195, 5
      %v363 = vsel %vm335, %v361, %v362
      %v364 = vrot.slane %v196, 5
      %v365 = vrot.slane %v364, 4
      %v366 = vrot.slane %v197, 5
      %v367 = vsel %vm335, %v365, %v366
      %v369 = vshrl.u32 %v198, 16
      %v371 = vrot.slane %v369, 4
      %v372 = vshll.u32 %v198, 16
      %v374 = vrot.slane %v372, 5
      %v375 = vor.u32 %v371, %v374
      %v376 = vrot.slane %v375, 4
      %v378 = vshll.u32 %v199, 16
      %v380 = vrot.slane %v378, 5
      %v381 = vsel %vm204, %v376, %v380
      %v384 = vrot.slane %v198, 5
      %v385 = vrot.slane %v384, 4
      %v386 = vrot.slane %v199, 5
      %v387 = vsel %vm335, %v385, %v386
      %v389 = vshrl.u32 %v200, 16
      %v391 = vrot.slane %v389, 4
      %v392 = vshll.u32 %v200, 16
      %v394 = vrot.slane %v392, 5
      %v395 = vor.u32 %v391, %v394
      %v396 = vrot.slane %v395, 4
      %v398 = vshll.u32 %v201, 16
      %v400 = vrot.slane %v398, 5
      %v401 = vsel %vm204, %v396, %v400
      %v404 = vrot.slane %v200, 5
      %v405 = vrot.slane %v404, 4
      %v406 = vrot.slane %v201, 5
      %v407 = vsel %vm335, %v405, %v406
      %v408 = vunpack.c.l.b16 %v182
      %v409 = vunpack.c.l.b16 %v184
      %v410 = vunpack.c.l.b16 %v186
      %v411 = vunpack.c.l.b16 %v188
      %v412 = vunpack.c.l.b16 %v190
      %v413 = vunpack.c.l.b16 %v192
      %v414 = vunpack.c.l.b16 %v194
      %v415 = vunpack.c.l.b16 %v196
      %v416 = vpack.c.b16 %v409, %v408
      %v417 = vpack.c.b16 %v411, %v410
      %v418 = vpack.c.b16 %v413, %v412
      %v419 = vpack.c.b16 %v415, %v414
      %v424 = vunpack.c.l.b16 %v218
      %v425 = vunpack.c.l.b16 %v232
      %v426 = vunpack.c.l.b16 %v246
      %v427 = vunpack.c.l.b16 %v260
      %v428 = vunpack.c.l.b16 %v274
      %v429 = vunpack.c.l.b16 %v288
      %v430 = vunpack.c.l.b16 %v302
      %v431 = vunpack.c.l.b16 %v316
      %v432 = vpack.c.b16 %v425, %v424
      %v433 = vpack.c.b16 %v427, %v426
      %v434 = vpack.c.b16 %v429, %v428
      %v435 = vpack.c.b16 %v431, %v430
      %v440 = vunpack.c.l.b16 %v339
      %v441 = vunpack.c.l.b16 %v343
      %v442 = vunpack.c.l.b16 %v347
      %v443 = vunpack.c.l.b16 %v351
      %v444 = vunpack.c.l.b16 %v355
      %v445 = vunpack.c.l.b16 %v359
      %v446 = vunpack.c.l.b16 %v363
      %v447 = vunpack.c.l.b16 %v367
      %v448 = vpack.c.b16 %v441, %v440
      %v449 = vpack.c.b16 %v443, %v442
      %v450 = vpack.c.b16 %v445, %v444
      %v451 = vpack.c.b16 %v447, %v446
      %v456 = vunpack.c.l.b16 %v198
      %v457 = vpack.c.b16 %v410, %v409
      %v458 = vpack.c.b16 %v412, %v411
      %v459 = vpack.c.b16 %v414, %v413
      %v460 = vpack.c.b16 %v456, %v415
      %v465 = vunpack.c.l.b16 %v381
      %v466 = vpack.c.b16 %v426, %v425
      %v467 = vpack.c.b16 %v428, %v427
      %v468 = vpack.c.b16 %v430, %v429
      %v469 = vpack.c.b16 %v465, %v431
      %v474 = vunpack.c.l.b16 %v387
      %v475 = vpack.c.b16 %v442, %v441
      %v476 = vpack.c.b16 %v444, %v443
      %v477 = vpack.c.b16 %v446, %v445
      %v478 = vpack.c.b16 %v474, %v447
      %v483 = vunpack.c.l.b16 %v200
      %v484 = vpack.c.b16 %v483, %v456
      %v486 = vunpack.c.l.b16 %v401
      %v487 = vpack.c.b16 %v486, %v465
      %v489 = vunpack.c.l.b16 %v407
      %v490 = vpack.c.b16 %v489, %v474
      %v492 = vld [vmem:[%s1] sm:$0xf]
      %v493 = vld [vmem:[%s1 + $0x4] sm:$0xf]
      %v494 = vld [vmem:[%s1 + $0x8] sm:$0xf]
      %v495 = vld [vmem:[%s1 + $0xc] sm:$0xf]
      %v496 = vld [vmem:[%s1 + $0x10] sm:$0xf]
      %v497 = vld [vmem:[%s1 + $0x14] sm:$0xf]
      %v498 = vld [vmem:[%s1 + $0x18] sm:$0xf]
      %v499 = vld [vmem:[%s1 + $0x1c] sm:$0xf]
      %v500 = vld [vmem:[%s1 + $0x20] sm:$0xf]
      %v501 = vld [vmem:[%s1 + $0x24] sm:$0xf]
      %v502 = vld [vmem:[%s1 + $0x28] sm:$0xf]
      %v503 = vld [vmem:[%s1 + $0x2c] sm:$0xf]
      %v504 = vld [vmem:[%s1 + $0x30] sm:$0xf]
      %v505 = vld [vmem:[%s1 + $0x34] sm:$0xf]
      %v506 = vld [vmem:[%s1 + $0x38] sm:$0xf]
      %v507 = vld [vmem:[%s1 + $0x3c] sm:$0xf]
      %v508 = vld [vmem:[%s1 + $0x40] sm:$0xf]
      %v509 = vld [vmem:[%s1 + $0x44] sm:$0xf]
      %v510 = vld [vmem:[%s1 + $0x48] sm:$0xf]
      %v511 = vld [vmem:[%s1 + $0x4c] sm:$0xf]
      %v512 = vld [vmem:[%s1 + $0x50] sm:$0xf]
      %v513 = vld [vmem:[%s1 + $0x54] sm:$0xf]
      %v514 = vld [vmem:[%s1 + $0x58] sm:$0xf]
      %v515 = vld [vmem:[%s1 + $0x5c] sm:$0xf]
      %v516 = vld [vmem:[%s1 + $0x60] sm:$0xf]
      %v517 = vld [vmem:[%s1 + $0x64] sm:$0xf]
      %v518 = vld [vmem:[%s1 + $0x68] sm:$0xf]
      %v519 = vld [vmem:[%s1 + $0x6c] sm:$0xf]
      %v520 = vld [vmem:[%s1 + $0x70] sm:$0xf]
      %v521 = vld [vmem:[%s1 + $0x74] sm:$0xf]
      %v522 = vld [vmem:[%s1 + $0x78] sm:$0xf]
      %v523 = vld [vmem:[%s1 + $0x7c] sm:$0xf]
      %v524 = vld [vmem:[%s1 + $0x80] sm:$0xf]
      %v525 = vld [vmem:[%s1 + $0x84] sm:$0xf]
      %v526 = vld [vmem:[%s1 + $0x88] sm:$0xf]
      %v527 = vld [vmem:[%s1 + $0x8c] sm:$0xf]
      %v528 = vld [vmem:[%s1 + $0x90] sm:$0xf]
      %v529 = vld [vmem:[%s1 + $0x94] sm:$0xf]
      %v530 = vld [vmem:[%s1 + $0x98] sm:$0xf]
      %v531 = vld [vmem:[%s1 + $0x9c] sm:$0xf]
      %v532 = vld [vmem:[%s1 + $0xa0] sm:$0xf]
      %v533 = vld [vmem:[%s1 + $0xa4] sm:$0xf]
      %v534 = vld [vmem:[%s1 + $0xa8] sm:$0xf]
      %v535 = vld [vmem:[%s1 + $0xac] sm:$0xf]
      %v536 = vld [vmem:[%s1 + $0xb0] sm:$0xf]
      %v537 = vld [vmem:[%s1 + $0xb4] sm:$0xf]
      %v538 = vld [vmem:[%s1 + $0xb8] sm:$0xf]
      %v539 = vld [vmem:[%s1 + $0xbc] sm:$0xf]
      %v540 = vld [vmem:[%s1 + $0xc0] sm:$0xf]
      %v541 = vld [vmem:[%s1 + $0xc4] sm:$0xf]
      %v542 = vld [vmem:[%s1 + $0xc8] sm:$0xf]
      %v543 = vld [vmem:[%s1 + $0xcc] sm:$0xf]
      %v544 = vld [vmem:[%s1 + $0xd0] sm:$0xf]
      %v545 = vld [vmem:[%s1 + $0xd4] sm:$0xf]
      %v546 = vld [vmem:[%s1 + $0xd8] sm:$0xf]
      %v547 = vld [vmem:[%s1 + $0xdc] sm:$0xf]
      %v548 = vld [vmem:[%s1 + $0xe0] sm:$0xf]
      %v549 = vld [vmem:[%s1 + $0xe4] sm:$0xf]
      %v550 = vld [vmem:[%s1 + $0xe8] sm:$0xf]
      %v551 = vld [vmem:[%s1 + $0xec] sm:$0xf]
      %v552 = vld [vmem:[%s1 + $0xf0] sm:$0xf]
      %v553 = vld [vmem:[%s1 + $0xf4] sm:$0xf]
      %v554 = vld [vmem:[%s1 + $0xf8] sm:$0xf]
      %v555 = vld [vmem:[%s1 + $0xfc] sm:$0xf]
      %v556 = vld [vmem:[%s1 + $0x100] sm:$0xf]
      %v557 = vld [vmem:[%s1 + $0x104] sm:$0xf]
      %v558 = vld [vmem:[%s1 + $0x108] sm:$0xf]
      %v559 = vld [vmem:[%s1 + $0x10c] sm:$0xf]
      %v560 = vld [vmem:[%s1 + $0x110] sm:$0xf]
      %v561 = vld [vmem:[%s1 + $0x114] sm:$0xf]
      %v562 = vld [vmem:[%s1 + $0x118] sm:$0xf]
      %v563 = vld [vmem:[%s1 + $0x11c] sm:$0xf]
      %v564 = vld [vmem:[%s1 + $0x120] sm:$0xf]
      %v565 = vld [vmem:[%s1 + $0x124] sm:$0xf]
      %v566 = vld [vmem:[%s1 + $0x128] sm:$0xf]
      %v567 = vld [vmem:[%s1 + $0x12c] sm:$0xf]
      %v568 = vld [vmem:[%s1 + $0x130] sm:$0xf]
      %v569 = vld [vmem:[%s1 + $0x134] sm:$0xf]
      %v570 = vld [vmem:[%s1 + $0x138] sm:$0xf]
      %v571 = vld [vmem:[%s1 + $0x13c] sm:$0xf]
      %v572 = vld [vmem:[%s1 + $0x140] sm:$0xf]
      %v573 = vld [vmem:[%s1 + $0x144] sm:$0xf]
      %v574 = vld [vmem:[%s1 + $0x148] sm:$0xf]
      %v575 = vld [vmem:[%s1 + $0x14c] sm:$0xf]
      %v576 = vld [vmem:[%s1 + $0x150] sm:$0xf]
      %v577 = vld [vmem:[%s1 + $0x154] sm:$0xf]
      %v578 = vld [vmem:[%s1 + $0x158] sm:$0xf]
      %v579 = vld [vmem:[%s1 + $0x15c] sm:$0xf]
      %v580 = vld [vmem:[%s1 + $0x160] sm:$0xf]
      %v581 = vld [vmem:[%s1 + $0x164] sm:$0xf]
      %v582 = vld [vmem:[%s1 + $0x168] sm:$0xf]
      %v583 = vld [vmem:[%s1 + $0x16c] sm:$0xf]
      %v584 = vld [vmem:[%s1 + $0x170] sm:$0xf]
      %v585 = vld [vmem:[%s1 + $0x174] sm:$0xf]
      %v586 = vld [vmem:[%s1 + $0x178] sm:$0xf]
      %v587 = vld [vmem:[%s1 + $0x17c] sm:$0xf]
      %v588 = vld [vmem:[%s1 + $0x180] sm:$0xf]
      %v589 = vld [vmem:[%s1 + $0x184] sm:$0xf]
      %v590 = vld [vmem:[%s1 + $0x188] sm:$0xf]
      %v591 = vld [vmem:[%s1 + $0x18c] sm:$0xf]
      %v592 = vld [vmem:[%s1 + $0x190] sm:$0xf]
      %v593 = vld [vmem:[%s1 + $0x194] sm:$0xf]
      %v594 = vld [vmem:[%s1 + $0x198] sm:$0xf]
      %v595 = vld [vmem:[%s1 + $0x19c] sm:$0xf]
      %v596 = vld [vmem:[%s1 + $0x1a0] sm:$0xf]
      %v597 = vld [vmem:[%s1 + $0x1a4] sm:$0xf]
      %v598 = vld [vmem:[%s1 + $0x1a8] sm:$0xf]
      %v599 = vld [vmem:[%s1 + $0x1ac] sm:$0xf]
      %v600 = vld [vmem:[%s1 + $0x1b0] sm:$0xf]
      %v601 = vld [vmem:[%s1 + $0x1b4] sm:$0xf]
      %v602 = vld [vmem:[%s1 + $0x1b8] sm:$0xf]
      %v603 = vld [vmem:[%s1 + $0x1bc] sm:$0xf]
      %v604 = vld [vmem:[%s1 + $0x1c0] sm:$0xf]
      %v605 = vld [vmem:[%s1 + $0x1c4] sm:$0xf]
      %v606 = vld [vmem:[%s1 + $0x1c8] sm:$0xf]
      %v607 = vld [vmem:[%s1 + $0x1cc] sm:$0xf]
      %v608 = vld [vmem:[%s1 + $0x1d0] sm:$0xf]
      %v609 = vld [vmem:[%s1 + $0x1d4] sm:$0xf]
      %v610 = vld [vmem:[%s1 + $0x1d8] sm:$0xf]
      %v611 = vld [vmem:[%s1 + $0x1dc] sm:$0xf]
      %v612 = vld [vmem:[%s1 + $0x1e0] sm:$0xf]
      %v613 = vld [vmem:[%s1 + $0x1e4] sm:$0xf]
      %v614 = vld [vmem:[%s1 + $0x1e8] sm:$0xf]
      %v615 = vld [vmem:[%s1 + $0x1ec] sm:$0xf]
      %v616 = vld [vmem:[%s1 + $0x1f0] sm:$0xf]
      %v617 = vld [vmem:[%s1 + $0x1f4] sm:$0xf]
      %v618 = vld [vmem:[%s1 + $0x1f8] sm:$0xf]
      %v619 = vld [vmem:[%s1 + $0x1fc] sm:$0xf]
      %v620 = vld [vmem:[%s1 + $0x200] sm:$0xf]
      %v621 = vld [vmem:[%s1 + $0x204] sm:$0xf]
      %v622 = vld [vmem:[%s1 + $0x208] sm:$0xf]
      %v623 = vld [vmem:[%s1 + $0x20c] sm:$0xf]
      %v624 = vld [vmem:[%s1 + $0x210] sm:$0xf]
      %v625 = vld [vmem:[%s1 + $0x214] sm:$0xf]
      %v626 = vld [vmem:[%s1 + $0x218] sm:$0xf]
      %v627 = vld [vmem:[%s1 + $0x21c] sm:$0xf]
      %v628 = vld [vmem:[%s1 + $0x220] sm:$0xf]
      %v629 = vld [vmem:[%s1 + $0x224] sm:$0xf]
      %v630 = vld [vmem:[%s1 + $0x228] sm:$0xf]
      %v631 = vld [vmem:[%s1 + $0x22c] sm:$0xf]
      %v632 = vld [vmem:[%s1 + $0x230] sm:$0xf]
      %v633 = vld [vmem:[%s1 + $0x234] sm:$0xf]
      %v634 = vld [vmem:[%s1 + $0x238] sm:$0xf]
      %v635 = vld [vmem:[%s1 + $0x23c] sm:$0xf]
      %v780 = vunpack.c.l.b16 %v492
      %v781 = vunpack.c.l.b16 %v493
      %v782 = vunpack.c.l.b16 %v494
      %v783 = vunpack.c.l.b16 %v495
      %v784 = vunpack.c.l.b16 %v496
      %v785 = vunpack.c.l.b16 %v497
      %v786 = vunpack.c.l.b16 %v498
      %v787 = vunpack.c.l.b16 %v499
      %v788 = vunpack.c.l.b16 %v500
      %v789 = vunpack.c.l.b16 %v501
      %v790 = vunpack.c.l.b16 %v502
      %v791 = vunpack.c.l.b16 %v503
      %v792 = vunpack.c.l.b16 %v504
      %v793 = vunpack.c.l.b16 %v505
      %v794 = vunpack.c.l.b16 %v506
      %v795 = vunpack.c.l.b16 %v507
      %v796 = vunpack.c.l.b16 %v508
      %v797 = vunpack.c.l.b16 %v509
      %v798 = vunpack.c.l.b16 %v510
      %v799 = vunpack.c.l.b16 %v511
      %v800 = vunpack.c.l.b16 %v512
      %v801 = vunpack.c.l.b16 %v513
      %v802 = vunpack.c.l.b16 %v514
      %v803 = vunpack.c.l.b16 %v515
      %v804 = vunpack.c.l.b16 %v516
      %v805 = vunpack.c.l.b16 %v517
      %v806 = vunpack.c.l.b16 %v518
      %v807 = vunpack.c.l.b16 %v519
      %v808 = vunpack.c.l.b16 %v520
      %v809 = vunpack.c.l.b16 %v521
      %v810 = vunpack.c.l.b16 %v522
      %v811 = vunpack.c.l.b16 %v523
      %v812 = vunpack.c.l.b16 %v524
      %v813 = vunpack.c.l.b16 %v525
      %v814 = vunpack.c.l.b16 %v526
      %v815 = vunpack.c.l.b16 %v527
      %v816 = vunpack.c.l.b16 %v528
      %v817 = vunpack.c.l.b16 %v529
      %v818 = vunpack.c.l.b16 %v530
      %v819 = vunpack.c.l.b16 %v531
      %v820 = vunpack.c.l.b16 %v532
      %v821 = vunpack.c.l.b16 %v533
      %v822 = vunpack.c.l.b16 %v534
      %v823 = vunpack.c.l.b16 %v535
      %v824 = vunpack.c.l.b16 %v536
      %v825 = vunpack.c.l.b16 %v537
      %v826 = vunpack.c.l.b16 %v538
      %v827 = vunpack.c.l.b16 %v539
      %v828 = vunpack.c.l.b16 %v540
      %v829 = vunpack.c.l.b16 %v541
      %v830 = vunpack.c.l.b16 %v542
      %v831 = vunpack.c.l.b16 %v543
      %v832 = vunpack.c.l.b16 %v544
      %v833 = vunpack.c.l.b16 %v545
      %v834 = vunpack.c.l.b16 %v546
      %v835 = vunpack.c.l.b16 %v547
      %v836 = vunpack.c.l.b16 %v548
      %v837 = vunpack.c.l.b16 %v549
      %v838 = vunpack.c.l.b16 %v550
      %v839 = vunpack.c.l.b16 %v551
      %v840 = vunpack.c.l.b16 %v552
      %v841 = vunpack.c.l.b16 %v553
      %v842 = vunpack.c.l.b16 %v554
      %v843 = vunpack.c.l.b16 %v555
      %v844 = vunpack.c.l.b16 %v556
      %v845 = vunpack.c.l.b16 %v557
      %v846 = vunpack.c.l.b16 %v558
      %v847 = vunpack.c.l.b16 %v559
      %v848 = vunpack.c.l.b16 %v560
      %v849 = vunpack.c.l.b16 %v561
      %v850 = vunpack.c.l.b16 %v562
      %v851 = vunpack.c.l.b16 %v563
      %v852 = vunpack.c.l.b16 %v564
      %v853 = vunpack.c.l.b16 %v565
      %v854 = vunpack.c.l.b16 %v566
      %v855 = vunpack.c.l.b16 %v567
      %v856 = vunpack.c.l.b16 %v568
      %v857 = vunpack.c.l.b16 %v569
      %v858 = vunpack.c.l.b16 %v570
      %v859 = vunpack.c.l.b16 %v571
      %v860 = vunpack.c.l.b16 %v572
      %v861 = vunpack.c.l.b16 %v573
      %v862 = vunpack.c.l.b16 %v574
      %v863 = vunpack.c.l.b16 %v575
      %v864 = vunpack.c.l.b16 %v576
      %v865 = vunpack.c.l.b16 %v577
      %v866 = vunpack.c.l.b16 %v578
      %v867 = vunpack.c.l.b16 %v579
      %v868 = vunpack.c.l.b16 %v580
      %v869 = vunpack.c.l.b16 %v581
      %v870 = vunpack.c.l.b16 %v582
      %v871 = vunpack.c.l.b16 %v583
      %v872 = vunpack.c.l.b16 %v584
      %v873 = vunpack.c.l.b16 %v585
      %v874 = vunpack.c.l.b16 %v586
      %v875 = vunpack.c.l.b16 %v587
      %v876 = vunpack.c.l.b16 %v588
      %v877 = vunpack.c.l.b16 %v589
      %v878 = vunpack.c.l.b16 %v590
      %v879 = vunpack.c.l.b16 %v591
      %v880 = vunpack.c.l.b16 %v592
      %v881 = vunpack.c.l.b16 %v593
      %v882 = vunpack.c.l.b16 %v594
      %v883 = vunpack.c.l.b16 %v595
      %v884 = vunpack.c.l.b16 %v596
      %v885 = vunpack.c.l.b16 %v597
      %v886 = vunpack.c.l.b16 %v598
      %v887 = vunpack.c.l.b16 %v599
      %v888 = vunpack.c.l.b16 %v600
      %v889 = vunpack.c.l.b16 %v601
      %v890 = vunpack.c.l.b16 %v602
      %v891 = vunpack.c.l.b16 %v603
      %v892 = vunpack.c.l.b16 %v604
      %v893 = vunpack.c.l.b16 %v605
      %v894 = vunpack.c.l.b16 %v606
      %v895 = vunpack.c.l.b16 %v607
      %v896 = vunpack.c.l.b16 %v608
      %v897 = vunpack.c.l.b16 %v609
      %v898 = vunpack.c.l.b16 %v610
      %v899 = vunpack.c.l.b16 %v611
      %v900 = vunpack.c.l.b16 %v612
      %v901 = vunpack.c.l.b16 %v613
      %v902 = vunpack.c.l.b16 %v614
      %v903 = vunpack.c.l.b16 %v615
      %v904 = vunpack.c.l.b16 %v616
      %v905 = vunpack.c.l.b16 %v617
      %v906 = vunpack.c.l.b16 %v618
      %v907 = vunpack.c.l.b16 %v619
      %v908 = vunpack.c.l.b16 %v620
      %v909 = vunpack.c.l.b16 %v621
      %v910 = vunpack.c.l.b16 %v622
      %v911 = vunpack.c.l.b16 %v623
      %v912 = vunpack.c.l.b16 %v624
      %v913 = vunpack.c.l.b16 %v625
      %v914 = vunpack.c.l.b16 %v626
      %v915 = vunpack.c.l.b16 %v627
      %v916 = vunpack.c.l.b16 %v628
      %v917 = vunpack.c.l.b16 %v629
      %v918 = vunpack.c.l.b16 %v630
      %v919 = vunpack.c.l.b16 %v631
      %v920 = vunpack.c.l.b16 %v632
      %v921 = vunpack.c.l.b16 %v633
      %v922 = vunpack.c.l.b16 %v634
      %v923 = vunpack.c.l.b16 %v635
      %v924 = vpack.c.b16 %v781, %v780
      %v925 = vpack.c.b16 %v783, %v782
      %v926 = vpack.c.b16 %v785, %v784
      %v927 = vpack.c.b16 %v787, %v786
      %v928 = vpack.c.b16 %v789, %v788
      %v929 = vpack.c.b16 %v791, %v790
      %v930 = vpack.c.b16 %v793, %v792
      %v931 = vpack.c.b16 %v795, %v794
      %v932 = vpack.c.b16 %v797, %v796
      %v933 = vpack.c.b16 %v799, %v798
      %v934 = vpack.c.b16 %v801, %v800
      %v935 = vpack.c.b16 %v803, %v802
      %v936 = vpack.c.b16 %v805, %v804
      %v937 = vpack.c.b16 %v807, %v806
      %v938 = vpack.c.b16 %v809, %v808
      %v939 = vpack.c.b16 %v811, %v810
      %v940 = vpack.c.b16 %v813, %v812
      %v941 = vpack.c.b16 %v815, %v814
      %v942 = vpack.c.b16 %v817, %v816
      %v943 = vpack.c.b16 %v819, %v818
      %v944 = vpack.c.b16 %v821, %v820
      %v945 = vpack.c.b16 %v823, %v822
      %v946 = vpack.c.b16 %v825, %v824
      %v947 = vpack.c.b16 %v827, %v826
      %v948 = vpack.c.b16 %v829, %v828
      %v949 = vpack.c.b16 %v831, %v830
      %v950 = vpack.c.b16 %v833, %v832
      %v951 = vpack.c.b16 %v835, %v834
      %v952 = vpack.c.b16 %v837, %v836
      %v953 = vpack.c.b16 %v839, %v838
      %v954 = vpack.c.b16 %v841, %v840
      %v955 = vpack.c.b16 %v843, %v842
      %v956 = vpack.c.b16 %v845, %v844
      %v957 = vpack.c.b16 %v847, %v846
      %v958 = vpack.c.b16 %v849, %v848
      %v959 = vpack.c.b16 %v851, %v850
      %v960 = vpack.c.b16 %v853, %v852
      %v961 = vpack.c.b16 %v855, %v854
      %v962 = vpack.c.b16 %v857, %v856
      %v963 = vpack.c.b16 %v859, %v858
      %v964 = vpack.c.b16 %v861, %v860
      %v965 = vpack.c.b16 %v863, %v862
      %v966 = vpack.c.b16 %v865, %v864
      %v967 = vpack.c.b16 %v867, %v866
      %v968 = vpack.c.b16 %v869, %v868
      %v969 = vpack.c.b16 %v871, %v870
      %v970 = vpack.c.b16 %v873, %v872
      %v971 = vpack.c.b16 %v875, %v874
      %v972 = vpack.c.b16 %v877, %v876
      %v973 = vpack.c.b16 %v879, %v878
      %v974 = vpack.c.b16 %v881, %v880
      %v975 = vpack.c.b16 %v883, %v882
      %v976 = vpack.c.b16 %v885, %v884
      %v977 = vpack.c.b16 %v887, %v886
      %v978 = vpack.c.b16 %v889, %v888
      %v979 = vpack.c.b16 %v891, %v890
      %v980 = vpack.c.b16 %v893, %v892
      %v981 = vpack.c.b16 %v895, %v894
      %v982 = vpack.c.b16 %v897, %v896
      %v983 = vpack.c.b16 %v899, %v898
      %v984 = vpack.c.b16 %v901, %v900
      %v985 = vpack.c.b16 %v903, %v902
      %v986 = vpack.c.b16 %v905, %v904
      %v987 = vpack.c.b16 %v907, %v906
      %v988 = vpack.c.b16 %v909, %v908
      %v989 = vpack.c.b16 %v911, %v910
      %v990 = vpack.c.b16 %v913, %v912
      %v991 = vpack.c.b16 %v915, %v914
      %v992 = vpack.c.b16 %v917, %v916
      %v993 = vpack.c.b16 %v919, %v918
      %v994 = vpack.c.b16 %v921, %v920
      %v995 = vpack.c.b16 %v923, %v922
      %1068 = vmatpush.bf16.msra.mxu0 %v931
      %1069 = vmatpush.bf16.msra.mxu0 %v930
      %1070 = vmatpush.bf16.msra.mxu0 %v929
      %1071 = vmatpush.bf16.msra.mxu0 %v928
      %1072 = vmatpush.bf16.msra.mxu0 %v927
      %1073 = vmatpush.bf16.msra.mxu0 %v926
      %1074 = vmatpush.bf16.msra.mxu0 %v925
      %1075 = vmatpush.bf16.msra.mxu0 %v924
      %1076 = vmatmul.bf16.gmra.mxu0 %v416
      %v1077 = vpop.f32.mrf.mxu0
      %v1078 = vadd.f32 0.0, %v1077
      %v1079 = vpop.f32.mrf.mxu0
      %v1080 = vadd.f32 0.0, %v1079
      %1081 = vmatmul.bf16.gmra.mxu0 %v417
      %v1082 = vpop.f32.mrf.mxu0
      %v1083 = vadd.f32 0.0, %v1082
      %v1084 = vpop.f32.mrf.mxu0
      %v1085 = vadd.f32 0.0, %v1084
      %1086 = vmatmul.bf16.gmra.mxu0 %v418
      %v1087 = vpop.f32.mrf.mxu0
      %v1088 = vadd.f32 0.0, %v1087
      %v1089 = vpop.f32.mrf.mxu0
      %v1090 = vadd.f32 0.0, %v1089
      %1091 = vmatmul.bf16.gmra.mxu0 %v419
      %v1092 = vpop.f32.mrf.mxu0
      %v1093 = vadd.f32 0.0, %v1092
      %v1094 = vpop.f32.mrf.mxu0
      %v1095 = vadd.f32 0.0, %v1094
      %1096 = vdwg.mxu0
      %1097 = vmatpush.bf16.msra.mxu0 %v939
      %1098 = vmatpush.bf16.msra.mxu0 %v938
      %1099 = vmatpush.bf16.msra.mxu0 %v937
      %1100 = vmatpush.bf16.msra.mxu0 %v936
      %1101 = vmatpush.bf16.msra.mxu0 %v935
      %1102 = vmatpush.bf16.msra.mxu0 %v934
      %1103 = vmatpush.bf16.msra.mxu0 %v933
      %1104 = vmatpush.bf16.msra.mxu0 %v932
      %1105 = vmatmul.bf16.gmra.mxu0 %v432
      %v1106 = vpop.f32.mrf.mxu0
      %v1107 = vadd.f32 %v1078, %v1106
      %v1108 = vpop.f32.mrf.mxu0
      %v1109 = vadd.f32 %v1080, %v1108
      %1110 = vmatmul.bf16.gmra.mxu0 %v433
      %v1111 = vpop.f32.mrf.mxu0
      %v1112 = vadd.f32 %v1083, %v1111
      %v1113 = vpop.f32.mrf.mxu0
      %v1114 = vadd.f32 %v1085, %v1113
      %1115 = vmatmul.bf16.gmra.mxu0 %v434
      %v1116 = vpop.f32.mrf.mxu0
      %v1117 = vadd.f32 %v1088, %v1116
      %v1118 = vpop.f32.mrf.mxu0
      %v1119 = vadd.f32 %v1090, %v1118
      %1120 = vmatmul.bf16.gmra.mxu0 %v435
      %v1121 = vpop.f32.mrf.mxu0
      %v1122 = vadd.f32 %v1093, %v1121
      %v1123 = vpop.f32.mrf.mxu0
      %v1124 = vadd.f32 %v1095, %v1123
      %1125 = vdwg.mxu0
      %1126 = vmatpush.bf16.msra.mxu0 %v947
      %1127 = vmatpush.bf16.msra.mxu0 %v946
      %1128 = vmatpush.bf16.msra.mxu0 %v945
      %1129 = vmatpush.bf16.msra.mxu0 %v944
      %1130 = vmatpush.bf16.msra.mxu0 %v943
      %1131 = vmatpush.bf16.msra.mxu0 %v942
      %1132 = vmatpush.bf16.msra.mxu0 %v941
      %1133 = vmatpush.bf16.msra.mxu0 %v940
      %1134 = vmatmul.bf16.gmra.mxu0 %v448
      %v1135 = vpop.f32.mrf.mxu0
      %v1136 = vadd.f32 %v1107, %v1135
      %v1137 = vpop.f32.mrf.mxu0
      %v1138 = vadd.f32 %v1109, %v1137
      %1139 = vmatmul.bf16.gmra.mxu0 %v449
      %v1140 = vpop.f32.mrf.mxu0
      %v1141 = vadd.f32 %v1112, %v1140
      %v1142 = vpop.f32.mrf.mxu0
      %v1143 = vadd.f32 %v1114, %v1142
      %1144 = vmatmul.bf16.gmra.mxu0 %v450
      %v1145 = vpop.f32.mrf.mxu0
      %v1146 = vadd.f32 %v1117, %v1145
      %v1147 = vpop.f32.mrf.mxu0
      %v1148 = vadd.f32 %v1119, %v1147
      %1149 = vmatmul.bf16.gmra.mxu0 %v451
      %v1150 = vpop.f32.mrf.mxu0
      %v1151 = vadd.f32 %v1122, %v1150
      %v1152 = vpop.f32.mrf.mxu0
      %v1153 = vadd.f32 %v1124, %v1152
      %1154 = vdwg.mxu0
      %1155 = vmatpush.bf16.msra.mxu0 %v955
      %1156 = vmatpush.bf16.msra.mxu0 %v954
      %1157 = vmatpush.bf16.msra.mxu0 %v953
      %1158 = vmatpush.bf16.msra.mxu0 %v952
      %1159 = vmatpush.bf16.msra.mxu0 %v951
      %1160 = vmatpush.bf16.msra.mxu0 %v950
      %1161 = vmatpush.bf16.msra.mxu0 %v949
      %1162 = vmatpush.bf16.msra.mxu0 %v948
      %1163 = vmatmul.bf16.gmra.mxu0 %v457
      %v1164 = vpop.f32.mrf.mxu0
      %v1165 = vadd.f32 %v1136, %v1164
      %v1166 = vpop.f32.mrf.mxu0
      %v1167 = vadd.f32 %v1138, %v1166
      %1168 = vmatmul.bf16.gmra.mxu0 %v458
      %v1169 = vpop.f32.mrf.mxu0
      %v1170 = vadd.f32 %v1141, %v1169
      %v1171 = vpop.f32.mrf.mxu0
      %v1172 = vadd.f32 %v1143, %v1171
      %1173 = vmatmul.bf16.gmra.mxu0 %v459
      %v1174 = vpop.f32.mrf.mxu0
      %v1175 = vadd.f32 %v1146, %v1174
      %v1176 = vpop.f32.mrf.mxu0
      %v1177 = vadd.f32 %v1148, %v1176
      %1178 = vmatmul.bf16.gmra.mxu0 %v460
      %v1179 = vpop.f32.mrf.mxu0
      %v1180 = vadd.f32 %v1151, %v1179
      %v1181 = vpop.f32.mrf.mxu0
      %v1182 = vadd.f32 %v1153, %v1181
      %1183 = vdwg.mxu0
      %1184 = vmatpush.bf16.msra.mxu0 %v963
      %1185 = vmatpush.bf16.msra.mxu0 %v962
      %1186 = vmatpush.bf16.msra.mxu0 %v961
      %1187 = vmatpush.bf16.msra.mxu0 %v960
      %1188 = vmatpush.bf16.msra.mxu0 %v959
      %1189 = vmatpush.bf16.msra.mxu0 %v958
      %1190 = vmatpush.bf16.msra.mxu0 %v957
      %1191 = vmatpush.bf16.msra.mxu0 %v956
      %1192 = vmatmul.bf16.gmra.mxu0 %v466
      %v1193 = vpop.f32.mrf.mxu0
      %v1194 = vadd.f32 %v1165, %v1193
      %v1195 = vpop.f32.mrf.mxu0
      %v1196 = vadd.f32 %v1167, %v1195
      %1197 = vmatmul.bf16.gmra.mxu0 %v467
      %v1198 = vpop.f32.mrf.mxu0
      %v1199 = vadd.f32 %v1170, %v1198
      %v1200 = vpop.f32.mrf.mxu0
      %v1201 = vadd.f32 %v1172, %v1200
      %1202 = vmatmul.bf16.gmra.mxu0 %v468
      %v1203 = vpop.f32.mrf.mxu0
      %v1204 = vadd.f32 %v1175, %v1203
      %v1205 = vpop.f32.mrf.mxu0
      %v1206 = vadd.f32 %v1177, %v1205
      %1207 = vmatmul.bf16.gmra.mxu0 %v469
      %v1208 = vpop.f32.mrf.mxu0
      %v1209 = vadd.f32 %v1180, %v1208
      %v1210 = vpop.f32.mrf.mxu0
      %v1211 = vadd.f32 %v1182, %v1210
      %1212 = vdwg.mxu0
      %1213 = vmatpush.bf16.msra.mxu0 %v971
      %1214 = vmatpush.bf16.msra.mxu0 %v970
      %1215 = vmatpush.bf16.msra.mxu0 %v969
      %1216 = vmatpush.bf16.msra.mxu0 %v968
      %1217 = vmatpush.bf16.msra.mxu0 %v967
      %1218 = vmatpush.bf16.msra.mxu0 %v966
      %1219 = vmatpush.bf16.msra.mxu0 %v965
      %1220 = vmatpush.bf16.msra.mxu0 %v964
      %1221 = vmatmul.bf16.gmra.mxu0 %v475
      %v1222 = vpop.f32.mrf.mxu0
      %v1223 = vadd.f32 %v1194, %v1222
      %v1224 = vpop.f32.mrf.mxu0
      %v1225 = vadd.f32 %v1196, %v1224
      %1226 = vmatmul.bf16.gmra.mxu0 %v476
      %v1227 = vpop.f32.mrf.mxu0
      %v1228 = vadd.f32 %v1199, %v1227
      %v1229 = vpop.f32.mrf.mxu0
      %v1230 = vadd.f32 %v1201, %v1229
      %1231 = vmatmul.bf16.gmra.mxu0 %v477
      %v1232 = vpop.f32.mrf.mxu0
      %v1233 = vadd.f32 %v1204, %v1232
      %v1234 = vpop.f32.mrf.mxu0
      %v1235 = vadd.f32 %v1206, %v1234
      %1236 = vmatmul.bf16.gmra.mxu0 %v478
      %v1237 = vpop.f32.mrf.mxu0
      %v1238 = vadd.f32 %v1209, %v1237
      %v1239 = vpop.f32.mrf.mxu0
      %v1240 = vadd.f32 %v1211, %v1239
      %1241 = vdwg.mxu0
      %1242 = vmatpush.bf16.msra.mxu0 %v979
      %1243 = vmatpush.bf16.msra.mxu0 %v978
      %1244 = vmatpush.bf16.msra.mxu0 %v977
      %1245 = vmatpush.bf16.msra.mxu0 %v976
      %1246 = vmatpush.bf16.msra.mxu0 %v975
      %1247 = vmatpush.bf16.msra.mxu0 %v974
      %1248 = vmatpush.bf16.msra.mxu0 %v973
      %1249 = vmatpush.bf16.msra.mxu0 %v972
      %1250 = vmatmul.bf16.gmra.mxu0 %v417
      %v1251 = vpop.f32.mrf.mxu0
      %v1252 = vadd.f32 %v1223, %v1251
      %v1253 = vpop.f32.mrf.mxu0
      %v1254 = vadd.f32 %v1225, %v1253
      %1255 = vmatmul.bf16.gmra.mxu0 %v418
      %v1256 = vpop.f32.mrf.mxu0
      %v1257 = vadd.f32 %v1228, %v1256
      %v1258 = vpop.f32.mrf.mxu0
      %v1259 = vadd.f32 %v1230, %v1258
      %1260 = vmatmul.bf16.gmra.mxu0 %v419
      %v1261 = vpop.f32.mrf.mxu0
      %v1262 = vadd.f32 %v1233, %v1261
      %v1263 = vpop.f32.mrf.mxu0
      %v1264 = vadd.f32 %v1235, %v1263
      %1265 = vmatmul.bf16.gmra.mxu0 %v484
      %v1266 = vpop.f32.mrf.mxu0
      %v1267 = vadd.f32 %v1238, %v1266
      %v1268 = vpop.f32.mrf.mxu0
      %v1269 = vadd.f32 %v1240, %v1268
      %1270 = vdwg.mxu0
      %1271 = vmatpush.bf16.msra.mxu0 %v987
      %1272 = vmatpush.bf16.msra.mxu0 %v986
      %1273 = vmatpush.bf16.msra.mxu0 %v985
      %1274 = vmatpush.bf16.msra.mxu0 %v984
      %1275 = vmatpush.bf16.msra.mxu0 %v983
      %1276 = vmatpush.bf16.msra.mxu0 %v982
      %1277 = vmatpush.bf16.msra.mxu0 %v981
      %1278 = vmatpush.bf16.msra.mxu0 %v980
      %1279 = vmatmul.bf16.gmra.mxu0 %v433
      %v1280 = vpop.f32.mrf.mxu0
      %v1281 = vadd.f32 %v1252, %v1280
      %v1282 = vpop.f32.mrf.mxu0
      %v1283 = vadd.f32 %v1254, %v1282
      %1284 = vmatmul.bf16.gmra.mxu0 %v434
      %v1285 = vpop.f32.mrf.mxu0
      %v1286 = vadd.f32 %v1257, %v1285
      %v1287 = vpop.f32.mrf.mxu0
      %v1288 = vadd.f32 %v1259, %v1287
      %1289 = vmatmul.bf16.gmra.mxu0 %v435
      %v1290 = vpop.f32.mrf.mxu0
      %v1291 = vadd.f32 %v1262, %v1290
      %v1292 = vpop.f32.mrf.mxu0
      %v1293 = vadd.f32 %v1264, %v1292
      %1294 = vmatmul.bf16.gmra.mxu0 %v487
      %v1295 = vpop.f32.mrf.mxu0
      %v1296 = vadd.f32 %v1267, %v1295
      %v1297 = vpop.f32.mrf.mxu0
      %v1298 = vadd.f32 %v1269, %v1297
      %1299 = vdwg.mxu0
      %1300 = vmatpush.bf16.msra.mxu0 %v995
      %1301 = vmatpush.bf16.msra.mxu0 %v994
      %1302 = vmatpush.bf16.msra.mxu0 %v993
      %1303 = vmatpush.bf16.msra.mxu0 %v992
      %1304 = vmatpush.bf16.msra.mxu0 %v991
      %1305 = vmatpush.bf16.msra.mxu0 %v990
      %1306 = vmatpush.bf16.msra.mxu0 %v989
      %1307 = vmatpush.bf16.msra.mxu0 %v988
      %1308 = vmatmul.bf16.gmra.mxu0 %v449
      %v1309 = vpop.f32.mrf.mxu0
      %v1310 = vadd.f32 %v1281, %v1309
      %v1311 = vpop.f32.mrf.mxu0
      %v1312 = vadd.f32 %v1283, %v1311
      %1313 = vmatmul.bf16.gmra.mxu0 %v450
      %v1314 = vpop.f32.mrf.mxu0
      %v1315 = vadd.f32 %v1286, %v1314
      %v1316 = vpop.f32.mrf.mxu0
      %v1317 = vadd.f32 %v1288, %v1316
      %1318 = vmatmul.bf16.gmra.mxu0 %v451
      %v1319 = vpop.f32.mrf.mxu0
      %v1320 = vadd.f32 %v1291, %v1319
      %v1321 = vpop.f32.mrf.mxu0
      %v1322 = vadd.f32 %v1293, %v1321
      %1323 = vmatmul.bf16.gmra.mxu0 %v490
      %v1324 = vpop.f32.mrf.mxu0
      %v1325 = vadd.f32 %v1296, %v1324
      %v1326 = vpop.f32.mrf.mxu0
      %v1327 = vadd.f32 %v1298, %v1326
      %1328 = vdwg.mxu0
      %v1329 = vadd.f32 %v1310, %v1312
      %v1330 = vadd.f32 %v1329, %v1315
      %v1331 = vadd.f32 %v1330, %v1317
      %v1332 = vadd.f32 %v1331, %v1320
      %v1333 = vadd.f32 %v1332, %v1322
      %v1334 = vadd.f32 %v1333, %v1325
      %v1335 = vadd.f32 %v1334, %v1327
      %v1336 = vrot.slane %v1335, 4
      %v1337 = vadd.f32 %v1335, %v1336
      %v1338 = vrot.slane %v1337, 2
      %v1339 = vadd.f32 %v1337, %v1338
      %v1340 = vrot.slane %v1339, 1
      %v1341 = vadd.f32 %v1339, %v1340
      %v1342 = vmul.f32 %v1310, %v1310
      %v1343 = vmul.f32 %v1312, %v1312
      %v1344 = vmul.f32 %v1315, %v1315
      %v1345 = vmul.f32 %v1317, %v1317
      %v1346 = vmul.f32 %v1320, %v1320
      %v1347 = vmul.f32 %v1322, %v1322
      %v1348 = vmul.f32 %v1325, %v1325
      %v1349 = vmul.f32 %v1327, %v1327
      %v1350 = vadd.f32 %v1342, %v1343
      %v1351 = vadd.f32 %v1350, %v1344
      %v1352 = vadd.f32 %v1351, %v1345
      %v1353 = vadd.f32 %v1352, %v1346
      %v1354 = vadd.f32 %v1353, %v1347
      %v1355 = vadd.f32 %v1354, %v1348
      %v1356 = vadd.f32 %v1355, %v1349
      %v1357 = vrot.slane %v1356, 4
      %v1358 = vadd.f32 %v1356, %v1357
      %v1359 = vrot.slane %v1358, 2
      %v1360 = vadd.f32 %v1358, %v1359
      %v1361 = vrot.slane %v1360, 1
      %v1362 = vadd.f32 %v1360, %v1361
      %vm1363 = vcmask 1040384
      %v1364 = vsel %vm1363, %v1341, %v1362
      %1365 = vst [vmem:[%s181] sm:$0x3] %v1364
      %v1366 = vpack.c.bf16 %v1310, %v1310
      %v1367 = vpack.c.bf16 %v1312, %v1312
      %v1368 = vpack.c.bf16 %v1315, %v1315
      %v1369 = vpack.c.bf16 %v1317, %v1317
      %v1370 = vpack.c.bf16 %v1320, %v1320
      %v1371 = vpack.c.bf16 %v1322, %v1322
      %v1372 = vpack.c.bf16 %v1325, %v1325
      %v1373 = vpack.c.bf16 %v1327, %v1327
      %1374 = vst [vmem:[%s177] sm:$0xf] %v1366
      %1375 = vst [vmem:[%s177 + $0x4] sm:$0xf] %v1367
      %1376 = vst [vmem:[%s177 + $0x8] sm:$0xf] %v1368
      %1377 = vst [vmem:[%s177 + $0xc] sm:$0xf] %v1369
      %1378 = vst [vmem:[%s177 + $0x10] sm:$0xf] %v1370
      %1379 = vst [vmem:[%s177 + $0x14] sm:$0xf] %v1371
      %1380 = vst [vmem:[%s177 + $0x18] sm:$0xf] %v1372
      %1381 = vst [vmem:[%s177 + $0x1c] sm:$0xf] %v1373
      %p1382 = scmp.lt.s32.totalorder %s15, 1
      %s1383 = scalar_select %p1382, %s15, 1
      %s1384 = smul.addr %s1383, 8
      %s1385 = smul.addr %s1384, 4
      %s1386 = scalar_lea.vmem %s2, %s1385
      %p1387 = scmp.lt.s32.totalorder %s15, 1
      %s1388 = scalar_select %p1387, %s15, 1
      %s1389 = smul.addr %s1388, 2
      %s1390 = scalar_lea.vmem %s3, %s1389
      // Predicated region
      $region29: #{conv3d_block_forward.3} parent=27 // pred_check
        %p1391 = pneg %p80
      $region30: #{conv3d_block_forward.3} parent=27 // pred_check_branch
        %1393 = sbr.rel (%p1391) target = $region32
      $region31: #{conv3d_block_forward.3} parent=27 // pred_region
        _
      $region32: #{conv3d_block_forward.3} parent=27 // pred_fallthru
        _
      // Predicated region
      $region33: #{conv3d_block_forward.3} parent=27 // pred_check
        %p1394 = pneg %p106
      $region34: #{conv3d_block_forward.3} parent=27 // pred_check_branch
        %1396 = sbr.rel (%p1394) target = $region36
      $region35: #{conv3d_block_forward.3} parent=27 // pred_region
        _
      $region36: #{conv3d_block_forward.3} parent=27 // pred_fallthru
        _
    $region28: #{conv3d_block_forward.3} parent=5 // pred_fallthru
      _
    %p1397 = scmp.le.s32.totalorder 2, %s10
    // Predicated region
    $region37: #{conv3d_block_forward.3} parent=5 // pred_check
      %p1398 = pneg %p1397
    $region38: #{conv3d_block_forward.3} parent=5 // pred_check_branch
      %1400 = sbr.rel (%p1398) target = $region40
    $region39: #{conv3d_block_forward.3} parent=5 // pred_region
      %s1401 = ssub.s32 %s10, 2
      // Predicated region
      $region41: #{conv3d_block_forward.3} parent=39 // pred_check
        %p1402 = pneg %p86
      $region42: #{conv3d_block_forward.3} parent=39 // pred_check_branch
        %1404 = sbr.rel (%p1402) target = $region44
      $region43: #{conv3d_block_forward.3} parent=39 // pred_region
        %p1405 = scmp.lt.s32.totalorder %s16, 1
        %s1406 = scalar_select %p1405, %s16, 1
        %s1407 = smul.addr %s1406, 8
        %s1408 = smul.addr %s1407, 4
        %s1409 = scalar_lea.vmem %s2, %s1408
      $region44: #{conv3d_block_forward.3} parent=39 // pred_fallthru
        _
      // Predicated region
      $region45: #{conv3d_block_forward.3} parent=39 // pred_check
        %p1410 = pneg %p112
      $region46: #{conv3d_block_forward.3} parent=39 // pred_check_branch
        %1412 = sbr.rel (%p1410) target = $region48
      $region47: #{conv3d_block_forward.3} parent=39 // pred_region
        %p1413 = scmp.lt.s32.totalorder %s16, 1
        %s1414 = scalar_select %p1413, %s16, 1
        %s1415 = smul.addr %s1414, 2
        %s1416 = scalar_lea.vmem %s3, %s1415
      $region48: #{conv3d_block_forward.3} parent=39 // pred_fallthru
        _
    $region40: #{conv3d_block_forward.3} parent=5 // pred_fallthru
      _
  $region6: #{conv3d_block_forward.3} parent=0 // loop_footer
    %s14 = sadd.s32 1, %s10
  $region7: #{conv3d_block_forward.3} parent=0 // loop_footer_branch
    %9 = sbr.rel target = $region3
  $region8: #{conv3d_block_forward.3} parent=0 // loop_exit
    _

// kernel: conv3d_block_forward.4
$region0: #{conv3d_block_forward.4}
  #allocation0 [shape = 'u32[]', space=smem, size = 0x4, offset = 0x4, fixed_abs, tag = 'smem constant byte address 0x4 - core index']
  #allocation1 [shape = 'u32[72,128]{1,0:T(1,128)}', space=vmem, size = 0x9000, scoped, tag = 'internal scratch']
  %s0 = inlined_call_operand.vmem [shape: bf16[2,64,128], index: 0, kind: input, shape index: {}]
  %s1 = inlined_call_operand.vmem [shape: f32[1,128], index: 1, kind: input, shape index: {}]
  %s2 = inlined_call_operand.vmem [shape: f32[1,128], index: 2, kind: input, shape index: {}]
  %s3 = inlined_call_operand.vmem [shape: bf16[1152,128], index: 3, kind: input, shape index: {}]
  %s4 = inlined_call_operand.vmem [shape: bf16[2,64,128], index: 4, kind: output, shape index: {0}]
  %s5 = inlined_call_operand.vmem [shape: f32[2,2,128], index: 5, kind: output, shape index: {1}]
  %6 = xla_tuple %s4, %s5
  %s7 = sld [smem:[#allocation0]]
  $region57: #{conv3d_block_forward.4} parent=0
    _
  %s9 = ssub.s32 1, %s7
  %s10 = scalar_select 0, %s9, %s7
  loop: start=0, step=1, limit=4
  $region2: #{conv3d_block_forward.4} parent=0 // loop_pre_header
    _
  $region3: #{conv3d_block_forward.4} parent=0 // loop_header
    %s12 = sphi 0, %s16
    %p13 = scmp.ge.s32.totalorder %s12, 4
    %s22 = sphi 0, %s24
    %s25 = sphi 0, %s22
    %s26 = sphi 0, %s25
    %s42 = sphi 0, %s26
    %s46 = sphi 0, %s46
    %s48 = sphi 0, %s46
    %s49 = sphi 0, %s48
    %s63 = sphi 0, %s49
    %s67 = sphi 0, %s67
    %s69 = sphi 0, %s67
    %s70 = sphi 0, %s69
    %s84 = sphi 0, %s70
    %s88 = sphi 0, %s88
    %s90 = sphi 0, %s88
    %s91 = sphi 0, %s90
    %s105 = sphi 0, %s91
    %s111 = sphi 0, %s113
    %s114 = sphi 0, %s111
    %s115 = sphi 0, %s114
    %s131 = sphi 0, %s115
    %s137 = sphi 0, %s139
    %s140 = sphi 0, %s137
    %s141 = sphi 0, %s140
    %s157 = sphi 0, %s141
  $region4: #{conv3d_block_forward.4} parent=0 // loop_header_branch
    %15 = sbr.rel (%p13) target = $region8
  $region5: #{conv3d_block_forward.4} parent=0 // loop_body
    %s17 = ssub.s32 %s12, 1
    %s18 = ssub.s32 %s12, 2
    %s19 = sadd.s32 %s12, 1
    %s20 = ssub.s32 %s12, %s19
    %p21 = scmp.eq.s32.totalorder %s20, 0
    %s23 = sadd.s32 %s22, 1
    %s24 = scalar_select %p21, %s22, %s23
    %p27 = pneg %p21
    %p28 = scmp.eq.s32.totalorder %s12, 1
    %p29 = por %p27, %p28
    %p30 = scmp.ne.s32.totalorder %s22, %s25
    %p31 = scmp.eq.s32.totalorder %s12, 0
    %p32 = por %p30, %p31
    %p33 = scmp.ne.s32.totalorder %s22, %s25
    %p34 = scmp.eq.s32.totalorder %s17, 1
    %p35 = por %p33, %p34
    %p36 = scmp.ne.s32.totalorder %s25, %s26
    %p37 = scmp.eq.s32.totalorder %s17, 0
    %p38 = por %p36, %p37
    %p39 = scmp.ne.s32.totalorder %s25, %s26
    %p40 = scmp.eq.s32.totalorder %s18, 1
    %p41 = por %p39, %p40
    %p43 = scmp.ne.s32.totalorder %s26, %s42
    %p44 = scmp.eq.s32.totalorder %s18, 0
    %p45 = por %p43, %p44
    %s47 = sadd.s32 %s46, 1
    %p50 = scmp.eq.s32.totalorder %s12, 1
    %p51 = scmp.ne.s32.totalorder %s46, %s48
    %p52 = scmp.eq.s32.totalorder %s12, 0
    %p53 = por %p51, %p52
    %p54 = scmp.ne.s32.totalorder %s46, %s48
    %p55 = scmp.eq.s32.totalorder %s17, 1
    %p56 = por %p54, %p55
    %p57 = scmp.ne.s32.totalorder %s48, %s49
    %p58 = scmp.eq.s32.totalorder %s17, 0
    %p59 = por %p57, %p58
    %p60 = scmp.ne.s32.totalorder %s48, %s49
    %p61 = scmp.eq.s32.totalorder %s18, 1
    %p62 = por %p60, %p61
    %p64 = scmp.ne.s32.totalorder %s49, %s63
    %p65 = scmp.eq.s32.totalorder %s18, 0
    %p66 = por %p64, %p65
    %s68 = sadd.s32 %s67, 1
    %p71 = scmp.eq.s32.totalorder %s12, 1
    %p72 = scmp.ne.s32.totalorder %s67, %s69
    %p73 = scmp.eq.s32.totalorder %s12, 0
    %p74 = por %p72, %p73
    %p75 = scmp.ne.s32.totalorder %s67, %s69
    %p76 = scmp.eq.s32.totalorder %s17, 1
    %p77 = por %p75, %p76
    %p78 = scmp.ne.s32.totalorder %s69, %s70
    %p79 = scmp.eq.s32.totalorder %s17, 0
    %p80 = por %p78, %p79
    %p81 = scmp.ne.s32.totalorder %s69, %s70
    %p82 = scmp.eq.s32.totalorder %s18, 1
    %p83 = por %p81, %p82
    %p85 = scmp.ne.s32.totalorder %s70, %s84
    %p86 = scmp.eq.s32.totalorder %s18, 0
    %p87 = por %p85, %p86
    %s89 = sadd.s32 %s88, 1
    %p92 = scmp.eq.s32.totalorder %s12, 1
    %p93 = scmp.ne.s32.totalorder %s88, %s90
    %p94 = scmp.eq.s32.totalorder %s12, 0
    %p95 = por %p93, %p94
    %p96 = scmp.ne.s32.totalorder %s88, %s90
    %p97 = scmp.eq.s32.totalorder %s17, 1
    %p98 = por %p96, %p97
    %p99 = scmp.ne.s32.totalorder %s90, %s91
    %p100 = scmp.eq.s32.totalorder %s17, 0
    %p101 = por %p99, %p100
    %p102 = scmp.ne.s32.totalorder %s90, %s91
    %p103 = scmp.eq.s32.totalorder %s18, 1
    %p104 = por %p102, %p103
    %p106 = scmp.ne.s32.totalorder %s91, %s105
    %p107 = scmp.eq.s32.totalorder %s18, 0
    %p108 = por %p106, %p107
    %s109 = ssub.s32 %s12, %s19
    %p110 = scmp.eq.s32.totalorder %s109, 0
    %s112 = sadd.s32 %s111, 1
    %s113 = scalar_select %p110, %s111, %s112
    %p116 = pneg %p110
    %p117 = scmp.eq.s32.totalorder %s12, 1
    %p118 = por %p116, %p117
    %p119 = scmp.ne.s32.totalorder %s111, %s114
    %p120 = scmp.eq.s32.totalorder %s12, 0
    %p121 = por %p119, %p120
    %p122 = scmp.ne.s32.totalorder %s111, %s114
    %p123 = scmp.eq.s32.totalorder %s17, 1
    %p124 = por %p122, %p123
    %p125 = scmp.ne.s32.totalorder %s114, %s115
    %p126 = scmp.eq.s32.totalorder %s17, 0
    %p127 = por %p125, %p126
    %p128 = scmp.ne.s32.totalorder %s114, %s115
    %p129 = scmp.eq.s32.totalorder %s18, 1
    %p130 = por %p128, %p129
    %p132 = scmp.ne.s32.totalorder %s115, %s131
    %p133 = scmp.eq.s32.totalorder %s18, 0
    %p134 = por %p132, %p133
    %s135 = ssub.s32 %s12, %s19
    %p136 = scmp.eq.s32.totalorder %s135, 0
    %s138 = sadd.s32 %s137, 1
    %s139 = scalar_select %p136, %s137, %s138
    %p142 = pneg %p136
    %p143 = scmp.eq.s32.totalorder %s12, 1
    %p144 = por %p142, %p143
    %p145 = scmp.ne.s32.totalorder %s137, %s140
    %p146 = scmp.eq.s32.totalorder %s12, 0
    %p147 = por %p145, %p146
    %p148 = scmp.ne.s32.totalorder %s137, %s140
    %p149 = scmp.eq.s32.totalorder %s17, 1
    %p150 = por %p148, %p149
    %p151 = scmp.ne.s32.totalorder %s140, %s141
    %p152 = scmp.eq.s32.totalorder %s17, 0
    %p153 = por %p151, %p152
    %p154 = scmp.ne.s32.totalorder %s140, %s141
    %p155 = scmp.eq.s32.totalorder %s18, 1
    %p156 = por %p154, %p155
    %p158 = scmp.ne.s32.totalorder %s141, %s157
    %p159 = scmp.eq.s32.totalorder %s18, 0
    %p160 = por %p158, %p159
    %p161 = scmp.le.s32.totalorder 1, %s12
    %p162 = scmp.lt.s32.totalorder %s12, 3
    %p163 = pnand %p161, %p162
    %p164 = pneg %p163
    // Predicated region
    $region9: #{conv3d_block_forward.4} parent=5 // pred_check
      _
    $region10: #{conv3d_block_forward.4} parent=5 // pred_check_branch
      %166 = sbr.rel (%p163) target = $region12
    $region11: #{conv3d_block_forward.4} parent=5 // pred_region
      %s167 = ssub.s32 %s12, 1
      // Predicated region
      $region13: #{conv3d_block_forward.4} parent=11 // pred_check
        %p168 = pneg %p59
      $region14: #{conv3d_block_forward.4} parent=11 // pred_check_branch
        %170 = sbr.rel (%p168) target = $region16
      $region15: #{conv3d_block_forward.4} parent=11 // pred_region
        _
      $region16: #{conv3d_block_forward.4} parent=11 // pred_fallthru
        _
      // Predicated region
      $region17: #{conv3d_block_forward.4} parent=11 // pred_check
        %p171 = pneg %p80
      $region18: #{conv3d_block_forward.4} parent=11 // pred_check_branch
        %173 = sbr.rel (%p171) target = $region20
      $region19: #{conv3d_block_forward.4} parent=11 // pred_region
        _
      $region20: #{conv3d_block_forward.4} parent=11 // pred_fallthru
        _
      // Predicated region
      $region21: #{conv3d_block_forward.4} parent=11 // pred_check
        %p174 = pneg %p101
      $region22: #{conv3d_block_forward.4} parent=11 // pred_check_branch
        %176 = sbr.rel (%p174) target = $region24
      $region23: #{conv3d_block_forward.4} parent=11 // pred_region
        _
      $region24: #{conv3d_block_forward.4} parent=11 // pred_fallthru
        _
    $region12: #{conv3d_block_forward.4} parent=5 // pred_fallthru
      _
    %p177 = scmp.lt.s32.totalorder %s12, 2
    // Predicated region
    $region25: #{conv3d_block_forward.4} parent=5 // pred_check
      %p178 = pneg %p177
    $region26: #{conv3d_block_forward.4} parent=5 // pred_check_branch
      %180 = sbr.rel (%p178) target = $region28
    $region27: #{conv3d_block_forward.4} parent=5 // pred_region
      // Predicated region
      $region29: #{conv3d_block_forward.4} parent=27 // pred_check
        %p181 = pneg %p32
      $region30: #{conv3d_block_forward.4} parent=27 // pred_check_branch
        %183 = sbr.rel (%p181) target = $region32
      $region31: #{conv3d_block_forward.4} parent=27 // pred_region
        %p184 = scmp.lt.s32.totalorder %s12, 1
        %s185 = scalar_select %p184, %s12, 1
        %s186 = smul.addr %s185, 8
        %s187 = smul.addr %s186, 4
        %s188 = scalar_lea.vmem %s0, %s187
      $region32: #{conv3d_block_forward.4} parent=27 // pred_fallthru
        _
    $region28: #{conv3d_block_forward.4} parent=5 // pred_fallthru
      _
    %p189 = scmp.le.s32.totalorder 1, %s12
    %p190 = scmp.lt.s32.totalorder %s12, 3
    %p191 = pnand %p189, %p190
    %p192 = pneg %p191
    // Predicated region
    $region33: #{conv3d_block_forward.4} parent=5 // pred_check
      _
    $region34: #{conv3d_block_forward.4} parent=5 // pred_check_branch
      %194 = sbr.rel (%p191) target = $region36
    $region35: #{conv3d_block_forward.4} parent=5 // pred_region
      %s195 = ssub.s32 %s12, 1
      %p196 = scmp.lt.s32.totalorder %s17, 1
      %s197 = scalar_select %p196, %s17, 1
      %s198 = smul.addr %s197, 8
      %s199 = smul.addr %s198, 4
      %s200 = scalar_lea.vmem %s0, %s199
      %p201 = pneg %p38
      %p202 = pneg %p35
      %p203 = pneg %p59
      %p204 = pneg %p56
      %p205 = pneg %p80
      %p206 = pneg %p77
      %p207 = pneg %p101
      %p208 = pneg %p98
      %p209 = pneg %p127
      %p210 = pneg %p124
      %p211 = scmp.lt.s32.totalorder %s17, 1
      %s212 = scalar_select %p211, %s17, 1
      %s213 = smul.addr %s212, 8
      %s214 = smul.addr %s213, 4
      %s215 = scalar_lea.vmem %s4, %s214
      %p216 = pneg %p153
      %p217 = pneg %p150
      %p218 = scmp.lt.s32.totalorder %s17, 1
      %s219 = scalar_select %p218, %s17, 1
      %s220 = smul.addr %s219, 2
      %s221 = scalar_lea.vmem %s5, %s220
      %p222 = scmp.lt.s32.totalorder %s17, 1
      %s223 = scalar_select %p222, %s17, 1
      %s224 = smul.addr %s223, 8
      %s225 = smul.addr %s224, 4
      %s226 = scalar_lea.vmem %s0, %s225
      %p227 = scmp.lt.s32.totalorder %s17, 1
      %s228 = scalar_select %p227, %s17, 1
      %s229 = smul.addr %s228, 8
      %s230 = smul.addr %s229, 4
      %s231 = scalar_lea.vmem %s4, %s230
      %p232 = scmp.lt.s32.totalorder %s17, 1
      %s233 = scalar_select %p232, %s17, 1
      %s234 = smul.addr %s233, 2
      %s235 = scalar_lea.vmem %s5, %s234
      %v237 = vld [vmem:[%s226] sm:$0xf]
      %v238 = vld [vmem:[%s226 + $0x4] sm:$0xf]
      %v239 = vld [vmem:[%s226 + $0x8] sm:$0xf]
      %v240 = vld [vmem:[%s226 + $0xc] sm:$0xf]
      %v241 = vld [vmem:[%s226 + $0x10] sm:$0xf]
      %v242 = vld [vmem:[%s226 + $0x14] sm:$0xf]
      %v243 = vld [vmem:[%s226 + $0x18] sm:$0xf]
      %v244 = vld [vmem:[%s226 + $0x1c] sm:$0xf]
      %v245 = vunpack.c.l.bf16 %v237
      %v246 = vunpack.c.l.bf16 %v238
      %v247 = vunpack.c.l.bf16 %v239
      %v248 = vunpack.c.l.bf16 %v240
      %v249 = vunpack.c.l.bf16 %v241
      %v250 = vunpack.c.l.bf16 %v242
      %v251 = vunpack.c.l.bf16 %v243
      %v252 = vunpack.c.l.bf16 %v244
      %v253 = vld [vmem:[%s1] sm:$0x1]
      %v255 = vperm.slane %v253, 0
      %v257 = vmul.f32 %v245, %v255
      %v258 = vmul.f32 %v246, %v255
      %v259 = vmul.f32 %v247, %v255
      %v260 = vmul.f32 %v248, %v255
      %v261 = vmul.f32 %v249, %v255
      %v262 = vmul.f32 %v250, %v255
      %v263 = vmul.f32 %v251, %v255
      %v264 = vmul.f32 %v252, %v255
      %v265 = vld [vmem:[%s2] sm:$0x1]
      %v267 = vperm.slane %v265, 0
      %v269 = vadd.f32 %v257, %v267
      %v270 = vadd.f32 %v258, %v267
      %v271 = vadd.f32 %v259, %v267
      %v272 = vadd.f32 %v260, %v267
      %v273 = vadd.f32 %v261, %v267
      %v274 = vadd.f32 %v262, %v267
      %v275 = vadd.f32 %v263, %v267
      %v276 = vadd.f32 %v264, %v267
      %v277 = vmax.f32 %v269, 0.0
      %v278 = vmax.f32 %v270, 0.0
      %v279 = vmax.f32 %v271, 0.0
      %v280 = vmax.f32 %v272, 0.0
      %v281 = vmax.f32 %v273, 0.0
      %v282 = vmax.f32 %v274, 0.0
      %v283 = vmax.f32 %v275, 0.0
      %v284 = vmax.f32 %v276, 0.0
      %v285 = vpack.c.bf16 %v277, %v277
      %v286 = vpack.c.bf16 %v278, %v278
      %v287 = vpack.c.bf16 %v279, %v279
      %v288 = vpack.c.bf16 %v280, %v280
      %v289 = vpack.c.bf16 %v281, %v281
      %v290 = vpack.c.bf16 %v282, %v282
      %v291 = vpack.c.bf16 %v283, %v283
      %v292 = vpack.c.bf16 %v284, %v284
      %v301 = vunpack.c.l.b16 %v285
      %v302 = vunpack.c.l.b16 %v286
      %v303 = vunpack.c.l.b16 %v287
      %v304 = vunpack.c.l.b16 %v288
      %v305 = vunpack.c.l.b16 %v289
      %v306 = vunpack.c.l.b16 %v290
      %v307 = vunpack.c.l.b16 %v291
      %v308 = vunpack.c.l.b16 %v292
      %v309 = vpack.c.b16 %v301, %v301
      %v310 = vpack.c.b16 %v302, %v302
      %v311 = vpack.c.b16 %v303, %v303
      %v312 = vpack.c.b16 %v304, %v304
      %v313 = vpack.c.b16 %v305, %v305
      %v314 = vpack.c.b16 %v306, %v306
      %v315 = vpack.c.b16 %v307, %v307
      %v316 = vpack.c.b16 %v308, %v308
      %v318 = vshrl.u32 %v309, 16
      %v320 = vrot.slane %v318, 7
      %v321 = vshll.u32 %v309, 16
      %v323 = vor.u32 %v320, %v321
      %v325 = vshrl.u32 %v310, 16
      %v327 = vrot.slane %v325, 7
      %v328 = vshll.u32 %v310, 16
      %v330 = vor.u32 %v327, %v328
      %v332 = vshrl.u32 %v311, 16
      %v334 = vrot.slane %v332, 7
      %v335 = vshll.u32 %v311, 16
      %v337 = vor.u32 %v334, %v335
      %v339 = vshrl.u32 %v312, 16
      %v341 = vrot.slane %v339, 7
      %v342 = vshll.u32 %v312, 16
      %v344 = vor.u32 %v341, %v342
      %v346 = vshrl.u32 %v313, 16
      %v348 = vrot.slane %v346, 7
      %v349 = vshll.u32 %v313, 16
      %v351 = vor.u32 %v348, %v349
      %v353 = vshrl.u32 %v314, 16
      %v355 = vrot.slane %v353, 7
      %v356 = vshll.u32 %v314, 16
      %v358 = vor.u32 %v355, %v356
      %v360 = vshrl.u32 %v315, 16
      %v362 = vrot.slane %v360, 7
      %v363 = vshll.u32 %v315, 16
      %v365 = vor.u32 %v362, %v363
      %v367 = vshrl.u32 %v316, 16
      %v369 = vrot.slane %v367, 7
      %v370 = vshll.u32 %v316, 16
      %v372 = vor.u32 %v369, %v370
      %vm381 = vcmask 1040384
      %vm382 = vsmask.f32 256
      %vm383 = vmand %vm381, %vm382
      %v384 = vsel %vm383, 0, %v323
      %v385 = vsel %vm383, 0, %v330
      %v386 = vsel %vm383, 0, %v337
      %v387 = vsel %vm383, 0, %v344
      %v388 = vsel %vm383, 0, %v351
      %v389 = vsel %vm383, 0, %v358
      %v390 = vsel %vm383, 0, %v365
      %v391 = vsel %vm383, 0, %v372
      %vm392 = vcmask 1044480
      %vm393 = vsmask.f32 4352
      %vm394 = vmand %vm392, %vm393
      %v395 = vsel %vm394, %v384, 0
      %v396 = vsel %vm394, %v385, 0
      %v397 = vsel %vm394, %v386, 0
      %v398 = vsel %vm394, %v387, 0
      %v399 = vsel %vm394, %v388, 0
      %v400 = vsel %vm394, %v389, 0
      %v401 = vsel %vm394, %v390, 0
      %v402 = vsel %vm394, %v391, 0
      %v411 = vunpack.c.l.b16 0
      %v412 = vunpack.c.h.b16 0
      %v413 = vunpack.c.l.b16 %v395
      %v414 = vunpack.c.h.b16 %v395
      %v415 = vunpack.c.l.b16 %v396
      %v416 = vunpack.c.h.b16 %v396
      %v417 = vunpack.c.l.b16 %v397
      %v418 = vunpack.c.h.b16 %v397
      %v419 = vunpack.c.l.b16 %v398
      %v420 = vunpack.c.h.b16 %v398
      %v421 = vunpack.c.l.b16 %v399
      %v422 = vunpack.c.h.b16 %v399
      %v423 = vunpack.c.l.b16 %v400
      %v424 = vunpack.c.h.b16 %v400
      %v425 = vunpack.c.l.b16 %v401
      %v426 = vunpack.c.h.b16 %v401
      %v427 = vpack.c.b16 %v411, %v411
      %v428 = vpack.c.b16 %v412, %v412
      %v429 = vpack.c.b16 %v413, %v413
      %v430 = vpack.c.b16 %v414, %v414
      %v431 = vpack.c.b16 %v415, %v415
      %v432 = vpack.c.b16 %v416, %v416
      %v433 = vpack.c.b16 %v417, %v417
      %v434 = vpack.c.b16 %v418, %v418
      %v435 = vpack.c.b16 %v419, %v419
      %v436 = vpack.c.b16 %v420, %v420
      %v437 = vpack.c.b16 %v421, %v421
      %v438 = vpack.c.b16 %v422, %v422
      %v439 = vpack.c.b16 %v423, %v423
      %v440 = vpack.c.b16 %v424, %v424
      %v441 = vpack.c.b16 %v425, %v425
      %v442 = vpack.c.b16 %v426, %v426
      %vm443 = vsmask.f32 3328
      %vm444 = vsmask.f32 7440
      %vm445 = vmor %vm443, %vm444
      %v447 = vshrl.u32 %v427, 16
      %v449 = vrot.slane %v447, 4
      %v450 = vshll.u32 %v427, 16
      %v452 = vrot.slane %v450, 5
      %v453 = vor.u32 %v449, %v452
      %v454 = vrot.slane %v453, 4
      %v456 = vshll.u32 %v428, 16
      %v458 = vrot.slane %v456, 5
      %v459 = vsel %vm445, %v454, %v458
      %v461 = vshrl.u32 %v429, 16
      %v463 = vrot.slane %v461, 4
      %v464 = vshll.u32 %v429, 16
      %v466 = vrot.slane %v464, 5
      %v467 = vor.u32 %v463, %v466
      %v468 = vrot.slane %v467, 4
      %v470 = vshll.u32 %v430, 16
      %v472 = vrot.slane %v470, 5
      %v473 = vsel %vm445, %v468, %v472
      %v475 = vshrl.u32 %v431, 16
      %v477 = vrot.slane %v475, 4
      %v478 = vshll.u32 %v431, 16
      %v480 = vrot.slane %v478, 5
      %v481 = vor.u32 %v477, %v480
      %v482 = vrot.slane %v481, 4
      %v484 = vshll.u32 %v432, 16
      %v486 = vrot.slane %v484, 5
      %v487 = vsel %vm445, %v482, %v486
      %v489 = vshrl.u32 %v433, 16
      %v491 = vrot.slane %v489, 4
      %v492 = vshll.u32 %v433, 16
      %v494 = vrot.slane %v492, 5
      %v495 = vor.u32 %v491, %v494
      %v496 = vrot.slane %v495, 4
      %v498 = vshll.u32 %v434, 16
      %v500 = vrot.slane %v498, 5
      %v501 = vsel %vm445, %v496, %v500
      %v503 = vshrl.u32 %v435, 16
      %v505 = vrot.slane %v503, 4
      %v506 = vshll.u32 %v435, 16
      %v508 = vrot.slane %v506, 5
      %v509 = vor.u32 %v505, %v508
      %v510 = vrot.slane %v509, 4
      %v512 = vshll.u32 %v436, 16
      %v514 = vrot.slane %v512, 5
      %v515 = vsel %vm445, %v510, %v514
      %v517 = vshrl.u32 %v437, 16
      %v519 = vrot.slane %v517, 4
      %v520 = vshll.u32 %v437, 16
      %v522 = vrot.slane %v520, 5
      %v523 = vor.u32 %v519, %v522
      %v524 = vrot.slane %v523, 4
      %v526 = vshll.u32 %v438, 16
      %v528 = vrot.slane %v526, 5
      %v529 = vsel %vm445, %v524, %v528
      %v531 = vshrl.u32 %v439, 16
      %v533 = vrot.slane %v531, 4
      %v534 = vshll.u32 %v439, 16
      %v536 = vrot.slane %v534, 5
      %v537 = vor.u32 %v533, %v536
      %v538 = vrot.slane %v537, 4
      %v540 = vshll.u32 %v440, 16
      %v542 = vrot.slane %v540, 5
      %v543 = vsel %vm445, %v538, %v542
      %v545 = vshrl.u32 %v441, 16
      %v547 = vrot.slane %v545, 4
      %v548 = vshll.u32 %v441, 16
      %v550 = vrot.slane %v548, 5
      %v551 = vor.u32 %v547, %v550
      %v552 = vrot.slane %v551, 4
      %v554 = vshll.u32 %v442, 16
      %v556 = vrot.slane %v554, 5
      %v557 = vsel %vm445, %v552, %v556
      %vm558 = vcmask 1042432
      %vm559 = vcmask 1046532
      %vm560 = vmor %vm558, %vm559
      %v561 = vrot.slane %v427, 5
      %v562 = vrot.slane %v561, 4
      %v563 = vrot.slane %v428, 5
      %v564 = vsel %vm560, %v562, %v563
      %v565 = vrot.slane %v429, 5
      %v566 = vrot.slane %v565, 4
      %v567 = vrot.slane %v430, 5
      %v568 = vsel %vm560, %v566, %v567
      %v569 = vrot.slane %v431, 5
      %v570 = vrot.slane %v569, 4
      %v571 = vrot.slane %v432, 5
      %v572 = vsel %vm560, %v570, %v571
      %v573 = vrot.slane %v433, 5
      %v574 = vrot.slane %v573, 4
      %v575 = vrot.slane %v434, 5
      %v576 = vsel %vm560, %v574, %v575
      %v577 = vrot.slane %v435, 5
      %v578 = vrot.slane %v577, 4
      %v579 = vrot.slane %v436, 5
      %v580 = vsel %vm560, %v578, %v579
      %v581 = vrot.slane %v437, 5
      %v582 = vrot.slane %v581, 4
      %v583 = vrot.slane %v438, 5
      %v584 = vsel %vm560, %v582, %v583
      %v585 = vrot.slane %v439, 5
      %v586 = vrot.slane %v585, 4
      %v587 = vrot.slane %v440, 5
      %v588 = vsel %vm560, %v586, %v587
      %v589 = vrot.slane %v441, 5
      %v590 = vrot.slane %v589, 4
      %v591 = vrot.slane %v442, 5
      %v592 = vsel %vm560, %v590, %v591
      %v594 = vunpack.c.l.b16 %v402
      %v595 = vunpack.c.h.b16 %v402
      %v596 = vpack.c.b16 %v594, %v594
      %v597 = vpack.c.b16 %v595, %v595
      %v599 = vshrl.u32 %v596, 16
      %v601 = vrot.slane %v599, 4
      %v602 = vshll.u32 %v596, 16
      %v604 = vrot.slane %v602, 5
      %v605 = vor.u32 %v601, %v604
      %v606 = vrot.slane %v605, 4
      %v608 = vshll.u32 %v597, 16
      %v610 = vrot.slane %v608, 5
      %v611 = vsel %vm445, %v606, %v610
      %v612 = vrot.slane %v596, 5
      %v613 = vrot.slane %v612, 4
      %v614 = vrot.slane %v597, 5
      %v615 = vsel %vm560, %v613, %v614
      %v616 = vpack.c.b16 %v413, %v411
      %v617 = vpack.c.b16 %v417, %v415
      %v618 = vpack.c.b16 %v421, %v419
      %v619 = vpack.c.b16 %v425, %v423
      %v624 = vunpack.c.l.b16 %v459
      %v625 = vunpack.c.l.b16 %v473
      %v626 = vunpack.c.l.b16 %v487
      %v627 = vunpack.c.l.b16 %v501
      %v628 = vunpack.c.l.b16 %v515
      %v629 = vunpack.c.l.b16 %v529
      %v630 = vunpack.c.l.b16 %v543
      %v631 = vunpack.c.l.b16 %v557
      %v632 = vpack.c.b16 %v625, %v624
      %v633 = vpack.c.b16 %v627, %v626
      %v634 = vpack.c.b16 %v629, %v628
      %v635 = vpack.c.b16 %v631, %v630
      %v640 = vunpack.c.l.b16 %v564
      %v641 = vunpack.c.l.b16 %v568
      %v642 = vunpack.c.l.b16 %v572
      %v643 = vunpack.c.l.b16 %v576
      %v644 = vunpack.c.l.b16 %v580
      %v645 = vunpack.c.l.b16 %v584
      %v646 = vunpack.c.l.b16 %v588
      %v647 = vunpack.c.l.b16 %v592
      %v648 = vpack.c.b16 %v641, %v640
      %v649 = vpack.c.b16 %v643, %v642
      %v650 = vpack.c.b16 %v645, %v644
      %v651 = vpack.c.b16 %v647, %v646
      %v656 = vpack.c.b16 %v415, %v413
      %v657 = vpack.c.b16 %v419, %v417
      %v658 = vpack.c.b16 %v423, %v421
      %v659 = vpack.c.b16 %v594, %v425
      %v664 = vunpack.c.l.b16 %v611
      %v665 = vpack.c.b16 %v626, %v625
      %v666 = vpack.c.b16 %v628, %v627
      %v667 = vpack.c.b16 %v630, %v629
      %v668 = vpack.c.b16 %v664, %v631
      %v673 = vunpack.c.l.b16 %v615
      %v674 = vpack.c.b16 %v642, %v641
      %v675 = vpack.c.b16 %v644, %v643
      %v676 = vpack.c.b16 %v646, %v645
      %v677 = vpack.c.b16 %v673, %v647
      %v682 = vpack.c.b16 %v411, %v594
      %v684 = vpack.c.b16 %v624, %v664
      %v686 = vpack.c.b16 %v640, %v673
      %v688 = vld [vmem:[%s3] sm:$0xf]
      %v689 = vld [vmem:[%s3 + $0x4] sm:$0xf]
      %v690 = vld [vmem:[%s3 + $0x8] sm:$0xf]
      %v691 = vld [vmem:[%s3 + $0xc] sm:$0xf]
      %v692 = vld [vmem:[%s3 + $0x10] sm:$0xf]
      %v693 = vld [vmem:[%s3 + $0x14] sm:$0xf]
      %v694 = vld [vmem:[%s3 + $0x18] sm:$0xf]
      %v695 = vld [vmem:[%s3 + $0x1c] sm:$0xf]
      %v696 = vld [vmem:[%s3 + $0x20] sm:$0xf]
      %v697 = vld [vmem:[%s3 + $0x24] sm:$0xf]
      %v698 = vld [vmem:[%s3 + $0x28] sm:$0xf]
      %v699 = vld [vmem:[%s3 + $0x2c] sm:$0xf]
      %v700 = vld [vmem:[%s3 + $0x30] sm:$0xf]
      %v701 = vld [vmem:[%s3 + $0x34] sm:$0xf]
      %v702 = vld [vmem:[%s3 + $0x38] sm:$0xf]
      %v703 = vld [vmem:[%s3 + $0x3c] sm:$0xf]
      %v704 = vld [vmem:[%s3 + $0x40] sm:$0xf]
      %v705 = vld [vmem:[%s3 + $0x44] sm:$0xf]
      %v706 = vld [vmem:[%s3 + $0x48] sm:$0xf]
      %v707 = vld [vmem:[%s3 + $0x4c] sm:$0xf]
      %v708 = vld [vmem:[%s3 + $0x50] sm:$0xf]
      %v709 = vld [vmem:[%s3 + $0x54] sm:$0xf]
      %v710 = vld [vmem:[%s3 + $0x58] sm:$0xf]
      %v711 = vld [vmem:[%s3 + $0x5c] sm:$0xf]
      %v712 = vld [vmem:[%s3 + $0x60] sm:$0xf]
      %v713 = vld [vmem:[%s3 + $0x64] sm:$0xf]
      %v714 = vld [vmem:[%s3 + $0x68] sm:$0xf]
      %v715 = vld [vmem:[%s3 + $0x6c] sm:$0xf]
      %v716 = vld [vmem:[%s3 + $0x70] sm:$0xf]
      %v717 = vld [vmem:[%s3 + $0x74] sm:$0xf]
      %v718 = vld [vmem:[%s3 + $0x78] sm:$0xf]
      %v719 = vld [vmem:[%s3 + $0x7c] sm:$0xf]
      %v720 = vld [vmem:[%s3 + $0x80] sm:$0xf]
      %v721 = vld [vmem:[%s3 + $0x84] sm:$0xf]
      %v722 = vld [vmem:[%s3 + $0x88] sm:$0xf]
      %v723 = vld [vmem:[%s3 + $0x8c] sm:$0xf]
      %v724 = vld [vmem:[%s3 + $0x90] sm:$0xf]
      %v725 = vld [vmem:[%s3 + $0x94] sm:$0xf]
      %v726 = vld [vmem:[%s3 + $0x98] sm:$0xf]
      %v727 = vld [vmem:[%s3 + $0x9c] sm:$0xf]
      %v728 = vld [vmem:[%s3 + $0xa0] sm:$0xf]
      %v729 = vld [vmem:[%s3 + $0xa4] sm:$0xf]
      %v730 = vld [vmem:[%s3 + $0xa8] sm:$0xf]
      %v731 = vld [vmem:[%s3 + $0xac] sm:$0xf]
      %v732 = vld [vmem:[%s3 + $0xb0] sm:$0xf]
      %v733 = vld [vmem:[%s3 + $0xb4] sm:$0xf]
      %v734 = vld [vmem:[%s3 + $0xb8] sm:$0xf]
      %v735 = vld [vmem:[%s3 + $0xbc] sm:$0xf]
      %v736 = vld [vmem:[%s3 + $0xc0] sm:$0xf]
      %v737 = vld [vmem:[%s3 + $0xc4] sm:$0xf]
      %v738 = vld [vmem:[%s3 + $0xc8] sm:$0xf]
      %v739 = vld [vmem:[%s3 + $0xcc] sm:$0xf]
      %v740 = vld [vmem:[%s3 + $0xd0] sm:$0xf]
      %v741 = vld [vmem:[%s3 + $0xd4] sm:$0xf]
      %v742 = vld [vmem:[%s3 + $0xd8] sm:$0xf]
      %v743 = vld [vmem:[%s3 + $0xdc] sm:$0xf]
      %v744 = vld [vmem:[%s3 + $0xe0] sm:$0xf]
      %v745 = vld [vmem:[%s3 + $0xe4] sm:$0xf]
      %v746 = vld [vmem:[%s3 + $0xe8] sm:$0xf]
      %v747 = vld [vmem:[%s3 + $0xec] sm:$0xf]
      %v748 = vld [vmem:[%s3 + $0xf0] sm:$0xf]
      %v749 = vld [vmem:[%s3 + $0xf4] sm:$0xf]
      %v750 = vld [vmem:[%s3 + $0xf8] sm:$0xf]
      %v751 = vld [vmem:[%s3 + $0xfc] sm:$0xf]
      %v752 = vld [vmem:[%s3 + $0x100] sm:$0xf]
      %v753 = vld [vmem:[%s3 + $0x104] sm:$0xf]
      %v754 = vld [vmem:[%s3 + $0x108] sm:$0xf]
      %v755 = vld [vmem:[%s3 + $0x10c] sm:$0xf]
      %v756 = vld [vmem:[%s3 + $0x110] sm:$0xf]
      %v757 = vld [vmem:[%s3 + $0x114] sm:$0xf]
      %v758 = vld [vmem:[%s3 + $0x118] sm:$0xf]
      %v759 = vld [vmem:[%s3 + $0x11c] sm:$0xf]
      %v760 = vld [vmem:[%s3 + $0x120] sm:$0xf]
      %v761 = vld [vmem:[%s3 + $0x124] sm:$0xf]
      %v762 = vld [vmem:[%s3 + $0x128] sm:$0xf]
      %v763 = vld [vmem:[%s3 + $0x12c] sm:$0xf]
      %v764 = vld [vmem:[%s3 + $0x130] sm:$0xf]
      %v765 = vld [vmem:[%s3 + $0x134] sm:$0xf]
      %v766 = vld [vmem:[%s3 + $0x138] sm:$0xf]
      %v767 = vld [vmem:[%s3 + $0x13c] sm:$0xf]
      %v768 = vld [vmem:[%s3 + $0x140] sm:$0xf]
      %v769 = vld [vmem:[%s3 + $0x144] sm:$0xf]
      %v770 = vld [vmem:[%s3 + $0x148] sm:$0xf]
      %v771 = vld [vmem:[%s3 + $0x14c] sm:$0xf]
      %v772 = vld [vmem:[%s3 + $0x150] sm:$0xf]
      %v773 = vld [vmem:[%s3 + $0x154] sm:$0xf]
      %v774 = vld [vmem:[%s3 + $0x158] sm:$0xf]
      %v775 = vld [vmem:[%s3 + $0x15c] sm:$0xf]
      %v776 = vld [vmem:[%s3 + $0x160] sm:$0xf]
      %v777 = vld [vmem:[%s3 + $0x164] sm:$0xf]
      %v778 = vld [vmem:[%s3 + $0x168] sm:$0xf]
      %v779 = vld [vmem:[%s3 + $0x16c] sm:$0xf]
      %v780 = vld [vmem:[%s3 + $0x170] sm:$0xf]
      %v781 = vld [vmem:[%s3 + $0x174] sm:$0xf]
      %v782 = vld [vmem:[%s3 + $0x178] sm:$0xf]
      %v783 = vld [vmem:[%s3 + $0x17c] sm:$0xf]
      %v784 = vld [vmem:[%s3 + $0x180] sm:$0xf]
      %v785 = vld [vmem:[%s3 + $0x184] sm:$0xf]
      %v786 = vld [vmem:[%s3 + $0x188] sm:$0xf]
      %v787 = vld [vmem:[%s3 + $0x18c] sm:$0xf]
      %v788 = vld [vmem:[%s3 + $0x190] sm:$0xf]
      %v789 = vld [vmem:[%s3 + $0x194] sm:$0xf]
      %v790 = vld [vmem:[%s3 + $0x198] sm:$0xf]
      %v791 = vld [vmem:[%s3 + $0x19c] sm:$0xf]
      %v792 = vld [vmem:[%s3 + $0x1a0] sm:$0xf]
      %v793 = vld [vmem:[%s3 + $0x1a4] sm:$0xf]
      %v794 = vld [vmem:[%s3 + $0x1a8] sm:$0xf]
      %v795 = vld [vmem:[%s3 + $0x1ac] sm:$0xf]
      %v796 = vld [vmem:[%s3 + $0x1b0] sm:$0xf]
      %v797 = vld [vmem:[%s3 + $0x1b4] sm:$0xf]
      %v798 = vld [vmem:[%s3 + $0x1b8] sm:$0xf]
      %v799 = vld [vmem:[%s3 + $0x1bc] sm:$0xf]
      %v800 = vld [vmem:[%s3 + $0x1c0] sm:$0xf]
      %v801 = vld [vmem:[%s3 + $0x1c4] sm:$0xf]
      %v802 = vld [vmem:[%s3 + $0x1c8] sm:$0xf]
      %v803 = vld [vmem:[%s3 + $0x1cc] sm:$0xf]
      %v804 = vld [vmem:[%s3 + $0x1d0] sm:$0xf]
      %v805 = vld [vmem:[%s3 + $0x1d4] sm:$0xf]
      %v806 = vld [vmem:[%s3 + $0x1d8] sm:$0xf]
      %v807 = vld [vmem:[%s3 + $0x1dc] sm:$0xf]
      %v808 = vld [vmem:[%s3 + $0x1e0] sm:$0xf]
      %v809 = vld [vmem:[%s3 + $0x1e4] sm:$0xf]
      %v810 = vld [vmem:[%s3 + $0x1e8] sm:$0xf]
      %v811 = vld [vmem:[%s3 + $0x1ec] sm:$0xf]
      %v812 = vld [vmem:[%s3 + $0x1f0] sm:$0xf]
      %v813 = vld [vmem:[%s3 + $0x1f4] sm:$0xf]
      %v814 = vld [vmem:[%s3 + $0x1f8] sm:$0xf]
      %v815 = vld [vmem:[%s3 + $0x1fc] sm:$0xf]
      %v816 = vld [vmem:[%s3 + $0x200] sm:$0xf]
      %v817 = vld [vmem:[%s3 + $0x204] sm:$0xf]
      %v818 = vld [vmem:[%s3 + $0x208] sm:$0xf]
      %v819 = vld [vmem:[%s3 + $0x20c] sm:$0xf]
      %v820 = vld [vmem:[%s3 + $0x210] sm:$0xf]
      %v821 = vld [vmem:[%s3 + $0x214] sm:$0xf]
      %v822 = vld [vmem:[%s3 + $0x218] sm:$0xf]
      %v823 = vld [vmem:[%s3 + $0x21c] sm:$0xf]
      %v824 = vld [vmem:[%s3 + $0x220] sm:$0xf]
      %v825 = vld [vmem:[%s3 + $0x224] sm:$0xf]
      %v826 = vld [vmem:[%s3 + $0x228] sm:$0xf]
      %v827 = vld [vmem:[%s3 + $0x22c] sm:$0xf]
      %v828 = vld [vmem:[%s3 + $0x230] sm:$0xf]
      %v829 = vld [vmem:[%s3 + $0x234] sm:$0xf]
      %v830 = vld [vmem:[%s3 + $0x238] sm:$0xf]
      %v831 = vld [vmem:[%s3 + $0x23c] sm:$0xf]
      %v976 = vunpack.c.l.b16 %v688
      %v977 = vunpack.c.l.b16 %v689
      %v978 = vunpack.c.l.b16 %v690
      %v979 = vunpack.c.l.b16 %v691
      %v980 = vunpack.c.l.b16 %v692
      %v981 = vunpack.c.l.b16 %v693
      %v982 = vunpack.c.l.b16 %v694
      %v983 = vunpack.c.l.b16 %v695
      %v984 = vunpack.c.l.b16 %v696
      %v985 = vunpack.c.l.b16 %v697
      %v986 = vunpack.c.l.b16 %v698
      %v987 = vunpack.c.l.b16 %v699
      %v988 = vunpack.c.l.b16 %v700
      %v989 = vunpack.c.l.b16 %v701
      %v990 = vunpack.c.l.b16 %v702
      %v991 = vunpack.c.l.b16 %v703
      %v992 = vunpack.c.l.b16 %v704
      %v993 = vunpack.c.l.b16 %v705
      %v994 = vunpack.c.l.b16 %v706
      %v995 = vunpack.c.l.b16 %v707
      %v996 = vunpack.c.l.b16 %v708
      %v997 = vunpack.c.l.b16 %v709
      %v998 = vunpack.c.l.b16 %v710
      %v999 = vunpack.c.l.b16 %v711
      %v1000 = vunpack.c.l.b16 %v712
      %v1001 = vunpack.c.l.b16 %v713
      %v1002 = vunpack.c.l.b16 %v714
      %v1003 = vunpack.c.l.b16 %v715
      %v1004 = vunpack.c.l.b16 %v716
      %v1005 = vunpack.c.l.b16 %v717
      %v1006 = vunpack.c.l.b16 %v718
      %v1007 = vunpack.c.l.b16 %v719
      %v1008 = vunpack.c.l.b16 %v720
      %v1009 = vunpack.c.l.b16 %v721
      %v1010 = vunpack.c.l.b16 %v722
      %v1011 = vunpack.c.l.b16 %v723
      %v1012 = vunpack.c.l.b16 %v724
      %v1013 = vunpack.c.l.b16 %v725
      %v1014 = vunpack.c.l.b16 %v726
      %v1015 = vunpack.c.l.b16 %v727
      %v1016 = vunpack.c.l.b16 %v728
      %v1017 = vunpack.c.l.b16 %v729
      %v1018 = vunpack.c.l.b16 %v730
      %v1019 = vunpack.c.l.b16 %v731
      %v1020 = vunpack.c.l.b16 %v732
      %v1021 = vunpack.c.l.b16 %v733
      %v1022 = vunpack.c.l.b16 %v734
      %v1023 = vunpack.c.l.b16 %v735
      %v1024 = vunpack.c.l.b16 %v736
      %v1025 = vunpack.c.l.b16 %v737
      %v1026 = vunpack.c.l.b16 %v738
      %v1027 = vunpack.c.l.b16 %v739
      %v1028 = vunpack.c.l.b16 %v740
      %v1029 = vunpack.c.l.b16 %v741
      %v1030 = vunpack.c.l.b16 %v742
      %v1031 = vunpack.c.l.b16 %v743
      %v1032 = vunpack.c.l.b16 %v744
      %v1033 = vunpack.c.l.b16 %v745
      %v1034 = vunpack.c.l.b16 %v746
      %v1035 = vunpack.c.l.b16 %v747
      %v1036 = vunpack.c.l.b16 %v748
      %v1037 = vunpack.c.l.b16 %v749
      %v1038 = vunpack.c.l.b16 %v750
      %v1039 = vunpack.c.l.b16 %v751
      %v1040 = vunpack.c.l.b16 %v752
      %v1041 = vunpack.c.l.b16 %v753
      %v1042 = vunpack.c.l.b16 %v754
      %v1043 = vunpack.c.l.b16 %v755
      %v1044 = vunpack.c.l.b16 %v756
      %v1045 = vunpack.c.l.b16 %v757
      %v1046 = vunpack.c.l.b16 %v758
      %v1047 = vunpack.c.l.b16 %v759
      %v1048 = vunpack.c.l.b16 %v760
      %v1049 = vunpack.c.l.b16 %v761
      %v1050 = vunpack.c.l.b16 %v762
      %v1051 = vunpack.c.l.b16 %v763
      %v1052 = vunpack.c.l.b16 %v764
      %v1053 = vunpack.c.l.b16 %v765
      %v1054 = vunpack.c.l.b16 %v766
      %v1055 = vunpack.c.l.b16 %v767
      %v1056 = vunpack.c.l.b16 %v768
      %v1057 = vunpack.c.l.b16 %v769
      %v1058 = vunpack.c.l.b16 %v770
      %v1059 = vunpack.c.l.b16 %v771
      %v1060 = vunpack.c.l.b16 %v772
      %v1061 = vunpack.c.l.b16 %v773
      %v1062 = vunpack.c.l.b16 %v774
      %v1063 = vunpack.c.l.b16 %v775
      %v1064 = vunpack.c.l.b16 %v776
      %v1065 = vunpack.c.l.b16 %v777
      %v1066 = vunpack.c.l.b16 %v778
      %v1067 = vunpack.c.l.b16 %v779
      %v1068 = vunpack.c.l.b16 %v780
      %v1069 = vunpack.c.l.b16 %v781
      %v1070 = vunpack.c.l.b16 %v782
      %v1071 = vunpack.c.l.b16 %v783
      %v1072 = vunpack.c.l.b16 %v784
      %v1073 = vunpack.c.l.b16 %v785
      %v1074 = vunpack.c.l.b16 %v786
      %v1075 = vunpack.c.l.b16 %v787
      %v1076 = vunpack.c.l.b16 %v788
      %v1077 = vunpack.c.l.b16 %v789
      %v1078 = vunpack.c.l.b16 %v790
      %v1079 = vunpack.c.l.b16 %v791
      %v1080 = vunpack.c.l.b16 %v792
      %v1081 = vunpack.c.l.b16 %v793
      %v1082 = vunpack.c.l.b16 %v794
      %v1083 = vunpack.c.l.b16 %v795
      %v1084 = vunpack.c.l.b16 %v796
      %v1085 = vunpack.c.l.b16 %v797
      %v1086 = vunpack.c.l.b16 %v798
      %v1087 = vunpack.c.l.b16 %v799
      %v1088 = vunpack.c.l.b16 %v800
      %v1089 = vunpack.c.l.b16 %v801
      %v1090 = vunpack.c.l.b16 %v802
      %v1091 = vunpack.c.l.b16 %v803
      %v1092 = vunpack.c.l.b16 %v804
      %v1093 = vunpack.c.l.b16 %v805
      %v1094 = vunpack.c.l.b16 %v806
      %v1095 = vunpack.c.l.b16 %v807
      %v1096 = vunpack.c.l.b16 %v808
      %v1097 = vunpack.c.l.b16 %v809
      %v1098 = vunpack.c.l.b16 %v810
      %v1099 = vunpack.c.l.b16 %v811
      %v1100 = vunpack.c.l.b16 %v812
      %v1101 = vunpack.c.l.b16 %v813
      %v1102 = vunpack.c.l.b16 %v814
      %v1103 = vunpack.c.l.b16 %v815
      %v1104 = vunpack.c.l.b16 %v816
      %v1105 = vunpack.c.l.b16 %v817
      %v1106 = vunpack.c.l.b16 %v818
      %v1107 = vunpack.c.l.b16 %v819
      %v1108 = vunpack.c.l.b16 %v820
      %v1109 = vunpack.c.l.b16 %v821
      %v1110 = vunpack.c.l.b16 %v822
      %v1111 = vunpack.c.l.b16 %v823
      %v1112 = vunpack.c.l.b16 %v824
      %v1113 = vunpack.c.l.b16 %v825
      %v1114 = vunpack.c.l.b16 %v826
      %v1115 = vunpack.c.l.b16 %v827
      %v1116 = vunpack.c.l.b16 %v828
      %v1117 = vunpack.c.l.b16 %v829
      %v1118 = vunpack.c.l.b16 %v830
      %v1119 = vunpack.c.l.b16 %v831
      %v1120 = vpack.c.b16 %v977, %v976
      %v1121 = vpack.c.b16 %v979, %v978
      %v1122 = vpack.c.b16 %v981, %v980
      %v1123 = vpack.c.b16 %v983, %v982
      %v1124 = vpack.c.b16 %v985, %v984
      %v1125 = vpack.c.b16 %v987, %v986
      %v1126 = vpack.c.b16 %v989, %v988
      %v1127 = vpack.c.b16 %v991, %v990
      %v1128 = vpack.c.b16 %v993, %v992
      %v1129 = vpack.c.b16 %v995, %v994
      %v1130 = vpack.c.b16 %v997, %v996
      %v1131 = vpack.c.b16 %v999, %v998
      %v1132 = vpack.c.b16 %v1001, %v1000
      %v1133 = vpack.c.b16 %v1003, %v1002
      %v1134 = vpack.c.b16 %v1005, %v1004
      %v1135 = vpack.c.b16 %v1007, %v1006
      %v1136 = vpack.c.b16 %v1009, %v1008
      %v1137 = vpack.c.b16 %v1011, %v1010
      %v1138 = vpack.c.b16 %v1013, %v1012
      %v1139 = vpack.c.b16 %v1015, %v1014
      %v1140 = vpack.c.b16 %v1017, %v1016
      %v1141 = vpack.c.b16 %v1019, %v1018
      %v1142 = vpack.c.b16 %v1021, %v1020
      %v1143 = vpack.c.b16 %v1023, %v1022
      %v1144 = vpack.c.b16 %v1025, %v1024
      %v1145 = vpack.c.b16 %v1027, %v1026
      %v1146 = vpack.c.b16 %v1029, %v1028
      %v1147 = vpack.c.b16 %v1031, %v1030
      %v1148 = vpack.c.b16 %v1033, %v1032
      %v1149 = vpack.c.b16 %v1035, %v1034
      %v1150 = vpack.c.b16 %v1037, %v1036
      %v1151 = vpack.c.b16 %v1039, %v1038
      %v1152 = vpack.c.b16 %v1041, %v1040
      %v1153 = vpack.c.b16 %v1043, %v1042
      %v1154 = vpack.c.b16 %v1045, %v1044
      %v1155 = vpack.c.b16 %v1047, %v1046
      %v1156 = vpack.c.b16 %v1049, %v1048
      %v1157 = vpack.c.b16 %v1051, %v1050
      %v1158 = vpack.c.b16 %v1053, %v1052
      %v1159 = vpack.c.b16 %v1055, %v1054
      %v1160 = vpack.c.b16 %v1057, %v1056
      %v1161 = vpack.c.b16 %v1059, %v1058
      %v1162 = vpack.c.b16 %v1061, %v1060
      %v1163 = vpack.c.b16 %v1063, %v1062
      %v1164 = vpack.c.b16 %v1065, %v1064
      %v1165 = vpack.c.b16 %v1067, %v1066
      %v1166 = vpack.c.b16 %v1069, %v1068
      %v1167 = vpack.c.b16 %v1071, %v1070
      %v1168 = vpack.c.b16 %v1073, %v1072
      %v1169 = vpack.c.b16 %v1075, %v1074
      %v1170 = vpack.c.b16 %v1077, %v1076
      %v1171 = vpack.c.b16 %v1079, %v1078
      %v1172 = vpack.c.b16 %v1081, %v1080
      %v1173 = vpack.c.b16 %v1083, %v1082
      %v1174 = vpack.c.b16 %v1085, %v1084
      %v1175 = vpack.c.b16 %v1087, %v1086
      %v1176 = vpack.c.b16 %v1089, %v1088
      %v1177 = vpack.c.b16 %v1091, %v1090
      %v1178 = vpack.c.b16 %v1093, %v1092
      %v1179 = vpack.c.b16 %v1095, %v1094
      %v1180 = vpack.c.b16 %v1097, %v1096
      %v1181 = vpack.c.b16 %v1099, %v1098
      %v1182 = vpack.c.b16 %v1101, %v1100
      %v1183 = vpack.c.b16 %v1103, %v1102
      %v1184 = vpack.c.b16 %v1105, %v1104
      %v1185 = vpack.c.b16 %v1107, %v1106
      %v1186 = vpack.c.b16 %v1109, %v1108
      %v1187 = vpack.c.b16 %v1111, %v1110
      %v1188 = vpack.c.b16 %v1113, %v1112
      %v1189 = vpack.c.b16 %v1115, %v1114
      %v1190 = vpack.c.b16 %v1117, %v1116
      %v1191 = vpack.c.b16 %v1119, %v1118
      %1264 = vmatpush.bf16.msra.mxu0 %v1127
      %1265 = vmatpush.bf16.msra.mxu0 %v1126
      %1266 = vmatpush.bf16.msra.mxu0 %v1125
      %1267 = vmatpush.bf16.msra.mxu0 %v1124
      %1268 = vmatpush.bf16.msra.mxu0 %v1123
      %1269 = vmatpush.bf16.msra.mxu0 %v1122
      %1270 = vmatpush.bf16.msra.mxu0 %v1121
      %1271 = vmatpush.bf16.msra.mxu0 %v1120
      %1272 = vmatmul.bf16.gmra.mxu0 %v616
      %v1273 = vpop.f32.mrf.mxu0
      %v1274 = vadd.f32 0.0, %v1273
      %v1275 = vpop.f32.mrf.mxu0
      %v1276 = vadd.f32 0.0, %v1275
      %1277 = vmatmul.bf16.gmra.mxu0 %v617
      %v1278 = vpop.f32.mrf.mxu0
      %v1279 = vadd.f32 0.0, %v1278
      %v1280 = vpop.f32.mrf.mxu0
      %v1281 = vadd.f32 0.0, %v1280
      %1282 = vmatmul.bf16.gmra.mxu0 %v618
      %v1283 = vpop.f32.mrf.mxu0
      %v1284 = vadd.f32 0.0, %v1283
      %v1285 = vpop.f32.mrf.mxu0
      %v1286 = vadd.f32 0.0, %v1285
      %1287 = vmatmul.bf16.gmra.mxu0 %v619
      %v1288 = vpop.f32.mrf.mxu0
      %v1289 = vadd.f32 0.0, %v1288
      %v1290 = vpop.f32.mrf.mxu0
      %v1291 = vadd.f32 0.0, %v1290
      %1292 = vdwg.mxu0
      %1293 = vmatpush.bf16.msra.mxu0 %v1135
      %1294 = vmatpush.bf16.msra.mxu0 %v1134
      %1295 = vmatpush.bf16.msra.mxu0 %v1133
      %1296 = vmatpush.bf16.msra.mxu0 %v1132
      %1297 = vmatpush.bf16.msra.mxu0 %v1131
      %1298 = vmatpush.bf16.msra.mxu0 %v1130
      %1299 = vmatpush.bf16.msra.mxu0 %v1129
      %1300 = vmatpush.bf16.msra.mxu0 %v1128
      %1301 = vmatmul.bf16.gmra.mxu0 %v632
      %v1302 = vpop.f32.mrf.mxu0
      %v1303 = vadd.f32 %v1274, %v1302
      %v1304 = vpop.f32.mrf.mxu0
      %v1305 = vadd.f32 %v1276, %v1304
      %1306 = vmatmul.bf16.gmra.mxu0 %v633
      %v1307 = vpop.f32.mrf.mxu0
      %v1308 = vadd.f32 %v1279, %v1307
      %v1309 = vpop.f32.mrf.mxu0
      %v1310 = vadd.f32 %v1281, %v1309
      %1311 = vmatmul.bf16.gmra.mxu0 %v634
      %v1312 = vpop.f32.mrf.mxu0
      %v1313 = vadd.f32 %v1284, %v1312
      %v1314 = vpop.f32.mrf.mxu0
      %v1315 = vadd.f32 %v1286, %v1314
      %1316 = vmatmul.bf16.gmra.mxu0 %v635
      %v1317 = vpop.f32.mrf.mxu0
      %v1318 = vadd.f32 %v1289, %v1317
      %v1319 = vpop.f32.mrf.mxu0
      %v1320 = vadd.f32 %v1291, %v1319
      %1321 = vdwg.mxu0
      %1322 = vmatpush.bf16.msra.mxu0 %v1143
      %1323 = vmatpush.bf16.msra.mxu0 %v1142
      %1324 = vmatpush.bf16.msra.mxu0 %v1141
      %1325 = vmatpush.bf16.msra.mxu0 %v1140
      %1326 = vmatpush.bf16.msra.mxu0 %v1139
      %1327 = vmatpush.bf16.msra.mxu0 %v1138
      %1328 = vmatpush.bf16.msra.mxu0 %v1137
      %1329 = vmatpush.bf16.msra.mxu0 %v1136
      %1330 = vmatmul.bf16.gmra.mxu0 %v648
      %v1331 = vpop.f32.mrf.mxu0
      %v1332 = vadd.f32 %v1303, %v1331
      %v1333 = vpop.f32.mrf.mxu0
      %v1334 = vadd.f32 %v1305, %v1333
      %1335 = vmatmul.bf16.gmra.mxu0 %v649
      %v1336 = vpop.f32.mrf.mxu0
      %v1337 = vadd.f32 %v1308, %v1336
      %v1338 = vpop.f32.mrf.mxu0
      %v1339 = vadd.f32 %v1310, %v1338
      %1340 = vmatmul.bf16.gmra.mxu0 %v650
      %v1341 = vpop.f32.mrf.mxu0
      %v1342 = vadd.f32 %v1313, %v1341
      %v1343 = vpop.f32.mrf.mxu0
      %v1344 = vadd.f32 %v1315, %v1343
      %1345 = vmatmul.bf16.gmra.mxu0 %v651
      %v1346 = vpop.f32.mrf.mxu0
      %v1347 = vadd.f32 %v1318, %v1346
      %v1348 = vpop.f32.mrf.mxu0
      %v1349 = vadd.f32 %v1320, %v1348
      %1350 = vdwg.mxu0
      %1351 = vmatpush.bf16.msra.mxu0 %v1151
      %1352 = vmatpush.bf16.msra.mxu0 %v1150
      %1353 = vmatpush.bf16.msra.mxu0 %v1149
      %1354 = vmatpush.bf16.msra.mxu0 %v1148
      %1355 = vmatpush.bf16.msra.mxu0 %v1147
      %1356 = vmatpush.bf16.msra.mxu0 %v1146
      %1357 = vmatpush.bf16.msra.mxu0 %v1145
      %1358 = vmatpush.bf16.msra.mxu0 %v1144
      %1359 = vmatmul.bf16.gmra.mxu0 %v656
      %v1360 = vpop.f32.mrf.mxu0
      %v1361 = vadd.f32 %v1332, %v1360
      %v1362 = vpop.f32.mrf.mxu0
      %v1363 = vadd.f32 %v1334, %v1362
      %1364 = vmatmul.bf16.gmra.mxu0 %v657
      %v1365 = vpop.f32.mrf.mxu0
      %v1366 = vadd.f32 %v1337, %v1365
      %v1367 = vpop.f32.mrf.mxu0
      %v1368 = vadd.f32 %v1339, %v1367
      %1369 = vmatmul.bf16.gmra.mxu0 %v658
      %v1370 = vpop.f32.mrf.mxu0
      %v1371 = vadd.f32 %v1342, %v1370
      %v1372 = vpop.f32.mrf.mxu0
      %v1373 = vadd.f32 %v1344, %v1372
      %1374 = vmatmul.bf16.gmra.mxu0 %v659
      %v1375 = vpop.f32.mrf.mxu0
      %v1376 = vadd.f32 %v1347, %v1375
      %v1377 = vpop.f32.mrf.mxu0
      %v1378 = vadd.f32 %v1349, %v1377
      %1379 = vdwg.mxu0
      %1380 = vmatpush.bf16.msra.mxu0 %v1159
      %1381 = vmatpush.bf16.msra.mxu0 %v1158
      %1382 = vmatpush.bf16.msra.mxu0 %v1157
      %1383 = vmatpush.bf16.msra.mxu0 %v1156
      %1384 = vmatpush.bf16.msra.mxu0 %v1155
      %1385 = vmatpush.bf16.msra.mxu0 %v1154
      %1386 = vmatpush.bf16.msra.mxu0 %v1153
      %1387 = vmatpush.bf16.msra.mxu0 %v1152
      %1388 = vmatmul.bf16.gmra.mxu0 %v665
      %v1389 = vpop.f32.mrf.mxu0
      %v1390 = vadd.f32 %v1361, %v1389
      %v1391 = vpop.f32.mrf.mxu0
      %v1392 = vadd.f32 %v1363, %v1391
      %1393 = vmatmul.bf16.gmra.mxu0 %v666
      %v1394 = vpop.f32.mrf.mxu0
      %v1395 = vadd.f32 %v1366, %v1394
      %v1396 = vpop.f32.mrf.mxu0
      %v1397 = vadd.f32 %v1368, %v1396
      %1398 = vmatmul.bf16.gmra.mxu0 %v667
      %v1399 = vpop.f32.mrf.mxu0
      %v1400 = vadd.f32 %v1371, %v1399
      %v1401 = vpop.f32.mrf.mxu0
      %v1402 = vadd.f32 %v1373, %v1401
      %1403 = vmatmul.bf16.gmra.mxu0 %v668
      %v1404 = vpop.f32.mrf.mxu0
      %v1405 = vadd.f32 %v1376, %v1404
      %v1406 = vpop.f32.mrf.mxu0
      %v1407 = vadd.f32 %v1378, %v1406
      %1408 = vdwg.mxu0
      %1409 = vmatpush.bf16.msra.mxu0 %v1167
      %1410 = vmatpush.bf16.msra.mxu0 %v1166
      %1411 = vmatpush.bf16.msra.mxu0 %v1165
      %1412 = vmatpush.bf16.msra.mxu0 %v1164
      %1413 = vmatpush.bf16.msra.mxu0 %v1163
      %1414 = vmatpush.bf16.msra.mxu0 %v1162
      %1415 = vmatpush.bf16.msra.mxu0 %v1161
      %1416 = vmatpush.bf16.msra.mxu0 %v1160
      %1417 = vmatmul.bf16.gmra.mxu0 %v674
      %v1418 = vpop.f32.mrf.mxu0
      %v1419 = vadd.f32 %v1390, %v1418
      %v1420 = vpop.f32.mrf.mxu0
      %v1421 = vadd.f32 %v1392, %v1420
      %1422 = vmatmul.bf16.gmra.mxu0 %v675
      %v1423 = vpop.f32.mrf.mxu0
      %v1424 = vadd.f32 %v1395, %v1423
      %v1425 = vpop.f32.mrf.mxu0
      %v1426 = vadd.f32 %v1397, %v1425
      %1427 = vmatmul.bf16.gmra.mxu0 %v676
      %v1428 = vpop.f32.mrf.mxu0
      %v1429 = vadd.f32 %v1400, %v1428
      %v1430 = vpop.f32.mrf.mxu0
      %v1431 = vadd.f32 %v1402, %v1430
      %1432 = vmatmul.bf16.gmra.mxu0 %v677
      %v1433 = vpop.f32.mrf.mxu0
      %v1434 = vadd.f32 %v1405, %v1433
      %v1435 = vpop.f32.mrf.mxu0
      %v1436 = vadd.f32 %v1407, %v1435
      %1437 = vdwg.mxu0
      %1438 = vmatpush.bf16.msra.mxu0 %v1175
      %1439 = vmatpush.bf16.msra.mxu0 %v1174
      %1440 = vmatpush.bf16.msra.mxu0 %v1173
      %1441 = vmatpush.bf16.msra.mxu0 %v1172
      %1442 = vmatpush.bf16.msra.mxu0 %v1171
      %1443 = vmatpush.bf16.msra.mxu0 %v1170
      %1444 = vmatpush.bf16.msra.mxu0 %v1169
      %1445 = vmatpush.bf16.msra.mxu0 %v1168
      %1446 = vmatmul.bf16.gmra.mxu0 %v617
      %v1447 = vpop.f32.mrf.mxu0
      %v1448 = vadd.f32 %v1419, %v1447
      %v1449 = vpop.f32.mrf.mxu0
      %v1450 = vadd.f32 %v1421, %v1449
      %1451 = vmatmul.bf16.gmra.mxu0 %v618
      %v1452 = vpop.f32.mrf.mxu0
      %v1453 = vadd.f32 %v1424, %v1452
      %v1454 = vpop.f32.mrf.mxu0
      %v1455 = vadd.f32 %v1426, %v1454
      %1456 = vmatmul.bf16.gmra.mxu0 %v619
      %v1457 = vpop.f32.mrf.mxu0
      %v1458 = vadd.f32 %v1429, %v1457
      %v1459 = vpop.f32.mrf.mxu0
      %v1460 = vadd.f32 %v1431, %v1459
      %1461 = vmatmul.bf16.gmra.mxu0 %v682
      %v1462 = vpop.f32.mrf.mxu0
      %v1463 = vadd.f32 %v1434, %v1462
      %v1464 = vpop.f32.mrf.mxu0
      %v1465 = vadd.f32 %v1436, %v1464
      %1466 = vdwg.mxu0
      %1467 = vmatpush.bf16.msra.mxu0 %v1183
      %1468 = vmatpush.bf16.msra.mxu0 %v1182
      %1469 = vmatpush.bf16.msra.mxu0 %v1181
      %1470 = vmatpush.bf16.msra.mxu0 %v1180
      %1471 = vmatpush.bf16.msra.mxu0 %v1179
      %1472 = vmatpush.bf16.msra.mxu0 %v1178
      %1473 = vmatpush.bf16.msra.mxu0 %v1177
      %1474 = vmatpush.bf16.msra.mxu0 %v1176
      %1475 = vmatmul.bf16.gmra.mxu0 %v633
      %v1476 = vpop.f32.mrf.mxu0
      %v1477 = vadd.f32 %v1448, %v1476
      %v1478 = vpop.f32.mrf.mxu0
      %v1479 = vadd.f32 %v1450, %v1478
      %1480 = vmatmul.bf16.gmra.mxu0 %v634
      %v1481 = vpop.f32.mrf.mxu0
      %v1482 = vadd.f32 %v1453, %v1481
      %v1483 = vpop.f32.mrf.mxu0
      %v1484 = vadd.f32 %v1455, %v1483
      %1485 = vmatmul.bf16.gmra.mxu0 %v635
      %v1486 = vpop.f32.mrf.mxu0
      %v1487 = vadd.f32 %v1458, %v1486
      %v1488 = vpop.f32.mrf.mxu0
      %v1489 = vadd.f32 %v1460, %v1488
      %1490 = vmatmul.bf16.gmra.mxu0 %v684
      %v1491 = vpop.f32.mrf.mxu0
      %v1492 = vadd.f32 %v1463, %v1491
      %v1493 = vpop.f32.mrf.mxu0
      %v1494 = vadd.f32 %v1465, %v1493
      %1495 = vdwg.mxu0
      %1496 = vmatpush.bf16.msra.mxu0 %v1191
      %1497 = vmatpush.bf16.msra.mxu0 %v1190
      %1498 = vmatpush.bf16.msra.mxu0 %v1189
      %1499 = vmatpush.bf16.msra.mxu0 %v1188
      %1500 = vmatpush.bf16.msra.mxu0 %v1187
      %1501 = vmatpush.bf16.msra.mxu0 %v1186
      %1502 = vmatpush.bf16.msra.mxu0 %v1185
      %1503 = vmatpush.bf16.msra.mxu0 %v1184
      %1504 = vmatmul.bf16.gmra.mxu0 %v649
      %v1505 = vpop.f32.mrf.mxu0
      %v1506 = vadd.f32 %v1477, %v1505
      %v1507 = vpop.f32.mrf.mxu0
      %v1508 = vadd.f32 %v1479, %v1507
      %1509 = vmatmul.bf16.gmra.mxu0 %v650
      %v1510 = vpop.f32.mrf.mxu0
      %v1511 = vadd.f32 %v1482, %v1510
      %v1512 = vpop.f32.mrf.mxu0
      %v1513 = vadd.f32 %v1484, %v1512
      %1514 = vmatmul.bf16.gmra.mxu0 %v651
      %v1515 = vpop.f32.mrf.mxu0
      %v1516 = vadd.f32 %v1487, %v1515
      %v1517 = vpop.f32.mrf.mxu0
      %v1518 = vadd.f32 %v1489, %v1517
      %1519 = vmatmul.bf16.gmra.mxu0 %v686
      %v1520 = vpop.f32.mrf.mxu0
      %v1521 = vadd.f32 %v1492, %v1520
      %v1522 = vpop.f32.mrf.mxu0
      %v1523 = vadd.f32 %v1494, %v1522
      %1524 = vdwg.mxu0
      %v1525 = vadd.f32 %v1506, %v1508
      %v1526 = vadd.f32 %v1525, %v1511
      %v1527 = vadd.f32 %v1526, %v1513
      %v1528 = vadd.f32 %v1527, %v1516
      %v1529 = vadd.f32 %v1528, %v1518
      %v1530 = vadd.f32 %v1529, %v1521
      %v1531 = vadd.f32 %v1530, %v1523
      %v1532 = vrot.slane %v1531, 4
      %v1533 = vadd.f32 %v1531, %v1532
      %v1534 = vrot.slane %v1533, 2
      %v1535 = vadd.f32 %v1533, %v1534
      %v1536 = vrot.slane %v1535, 1
      %v1537 = vadd.f32 %v1535, %v1536
      %v1538 = vmul.f32 %v1506, %v1506
      %v1539 = vmul.f32 %v1508, %v1508
      %v1540 = vmul.f32 %v1511, %v1511
      %v1541 = vmul.f32 %v1513, %v1513
      %v1542 = vmul.f32 %v1516, %v1516
      %v1543 = vmul.f32 %v1518, %v1518
      %v1544 = vmul.f32 %v1521, %v1521
      %v1545 = vmul.f32 %v1523, %v1523
      %v1546 = vadd.f32 %v1538, %v1539
      %v1547 = vadd.f32 %v1546, %v1540
      %v1548 = vadd.f32 %v1547, %v1541
      %v1549 = vadd.f32 %v1548, %v1542
      %v1550 = vadd.f32 %v1549, %v1543
      %v1551 = vadd.f32 %v1550, %v1544
      %v1552 = vadd.f32 %v1551, %v1545
      %v1553 = vrot.slane %v1552, 4
      %v1554 = vadd.f32 %v1552, %v1553
      %v1555 = vrot.slane %v1554, 2
      %v1556 = vadd.f32 %v1554, %v1555
      %v1557 = vrot.slane %v1556, 1
      %v1558 = vadd.f32 %v1556, %v1557
      %vm1559 = vcmask 1040384
      %v1560 = vsel %vm1559, %v1537, %v1558
      %1561 = vst [vmem:[%s235] sm:$0x3] %v1560
      %v1562 = vpack.c.bf16 %v1506, %v1506
      %v1563 = vpack.c.bf16 %v1508, %v1508
      %v1564 = vpack.c.bf16 %v1511, %v1511
      %v1565 = vpack.c.bf16 %v1513, %v1513
      %v1566 = vpack.c.bf16 %v1516, %v1516
      %v1567 = vpack.c.bf16 %v1518, %v1518
      %v1568 = vpack.c.bf16 %v1521, %v1521
      %v1569 = vpack.c.bf16 %v1523, %v1523
      %1570 = vst [vmem:[%s231] sm:$0xf] %v1562
      %1571 = vst [vmem:[%s231 + $0x4] sm:$0xf] %v1563
      %1572 = vst [vmem:[%s231 + $0x8] sm:$0xf] %v1564
      %1573 = vst [vmem:[%s231 + $0xc] sm:$0xf] %v1565
      %1574 = vst [vmem:[%s231 + $0x10] sm:$0xf] %v1566
      %1575 = vst [vmem:[%s231 + $0x14] sm:$0xf] %v1567
      %1576 = vst [vmem:[%s231 + $0x18] sm:$0xf] %v1568
      %1577 = vst [vmem:[%s231 + $0x1c] sm:$0xf] %v1569
      %p1578 = scmp.lt.s32.totalorder %s17, 1
      %s1579 = scalar_select %p1578, %s17, 1
      %s1580 = smul.addr %s1579, 8
      %s1581 = smul.addr %s1580, 4
      %s1582 = scalar_lea.vmem %s4, %s1581
      %p1583 = scmp.lt.s32.totalorder %s17, 1
      %s1584 = scalar_select %p1583, %s17, 1
      %s1585 = smul.addr %s1584, 2
      %s1586 = scalar_lea.vmem %s5, %s1585
      // Predicated region
      $region37: #{conv3d_block_forward.4} parent=35 // pred_check
        %p1587 = pneg %p124
      $region38: #{conv3d_block_forward.4} parent=35 // pred_check_branch
        %1589 = sbr.rel (%p1587) target = $region40
      $region39: #{conv3d_block_forward.4} parent=35 // pred_region
        _
      $region40: #{conv3d_block_forward.4} parent=35 // pred_fallthru
        _
      // Predicated region
      $region41: #{conv3d_block_forward.4} parent=35 // pred_check
        %p1590 = pneg %p150
      $region42: #{conv3d_block_forward.4} parent=35 // pred_check_branch
        %1592 = sbr.rel (%p1590) target = $region44
      $region43: #{conv3d_block_forward.4} parent=35 // pred_region
        _
      $region44: #{conv3d_block_forward.4} parent=35 // pred_fallthru
        _
    $region36: #{conv3d_block_forward.4} parent=5 // pred_fallthru
      _
    %p1593 = scmp.le.s32.totalorder 2, %s12
    // Predicated region
    $region45: #{conv3d_block_forward.4} parent=5 // pred_check
      %p1594 = pneg %p1593
    $region46: #{conv3d_block_forward.4} parent=5 // pred_check_branch
      %1596 = sbr.rel (%p1594) target = $region48
    $region47: #{conv3d_block_forward.4} parent=5 // pred_region
      %s1597 = ssub.s32 %s12, 2
      // Predicated region
      $region49: #{conv3d_block_forward.4} parent=47 // pred_check
        %p1598 = pneg %p130
      $region50: #{conv3d_block_forward.4} parent=47 // pred_check_branch
        %1600 = sbr.rel (%p1598) target = $region52
      $region51: #{conv3d_block_forward.4} parent=47 // pred_region
        %p1601 = scmp.lt.s32.totalorder %s18, 1
        %s1602 = scalar_select %p1601, %s18, 1
        %s1603 = smul.addr %s1602, 8
        %s1604 = smul.addr %s1603, 4
        %s1605 = scalar_lea.vmem %s4, %s1604
      $region52: #{conv3d_block_forward.4} parent=47 // pred_fallthru
        _
      // Predicated region
      $region53: #{conv3d_block_forward.4} parent=47 // pred_check
        %p1606 = pneg %p156
      $region54: #{conv3d_block_forward.4} parent=47 // pred_check_branch
        %1608 = sbr.rel (%p1606) target = $region56
      $region55: #{conv3d_block_forward.4} parent=47 // pred_region
        %p1609 = scmp.lt.s32.totalorder %s18, 1
        %s1610 = scalar_select %p1609, %s18, 1
        %s1611 = smul.addr %s1610, 2
        %s1612 = scalar_lea.vmem %s5, %s1611
      $region56: #{conv3d_block_forward.4} parent=47 // pred_fallthru
        _
    $region48: #{conv3d_block_forward.4} parent=5 // pred_fallthru
      _
  $region6: #{conv3d_block_forward.4} parent=0 // loop_footer
    %s16 = sadd.s32 1, %s12
  $region7: #{conv3d_block_forward.4} parent=0 // loop_footer_branch
    %11 = sbr.rel target = $region3
  $region8: #{conv3d_block_forward.4} parent=0 // loop_exit
    _

// kernel: conv3d_block_forward.5
$region0: #{conv3d_block_forward.5}
  #allocation0 [shape = 'u32[]', space=smem, size = 0x4, offset = 0x4, fixed_abs, tag = 'smem constant byte address 0x4 - core index']
  #allocation1 [shape = 'u32[72,128]{1,0:T(1,128)}', space=vmem, size = 0x9000, scoped, tag = 'internal scratch']
  %s0 = inlined_call_operand.vmem [shape: bf16[2,64,128], index: 0, kind: input, shape index: {}]
  %s1 = inlined_call_operand.vmem [shape: f32[1,128], index: 1, kind: input, shape index: {}]
  %s2 = inlined_call_operand.vmem [shape: f32[1,128], index: 2, kind: input, shape index: {}]
  %s3 = inlined_call_operand.vmem [shape: bf16[2,64,128], index: 3, kind: input, shape index: {}]
  %s4 = inlined_call_operand.vmem [shape: bf16[128,128], index: 4, kind: input, shape index: {}]
  %s5 = inlined_call_operand.vmem [shape: f32[2,64,128], index: 5, kind: output, shape index: {}]
  %s6 = sld [smem:[#allocation0]]
  $region53: #{conv3d_block_forward.5} parent=0
    _
  %s8 = ssub.s32 1, %s6
  %s9 = scalar_select 0, %s8, %s6
  loop: start=0, step=1, limit=4
  $region2: #{conv3d_block_forward.5} parent=0 // loop_pre_header
    _
  $region3: #{conv3d_block_forward.5} parent=0 // loop_header
    %s11 = sphi 0, %s15
    %p12 = scmp.ge.s32.totalorder %s11, 4
    %s21 = sphi 0, %s23
    %s24 = sphi 0, %s21
    %s25 = sphi 0, %s24
    %s41 = sphi 0, %s25
    %s45 = sphi 0, %s45
    %s47 = sphi 0, %s45
    %s48 = sphi 0, %s47
    %s62 = sphi 0, %s48
    %s66 = sphi 0, %s66
    %s68 = sphi 0, %s66
    %s69 = sphi 0, %s68
    %s83 = sphi 0, %s69
    %s89 = sphi 0, %s91
    %s92 = sphi 0, %s89
    %s93 = sphi 0, %s92
    %s109 = sphi 0, %s93
    %s113 = sphi 0, %s113
    %s115 = sphi 0, %s113
    %s116 = sphi 0, %s115
    %s130 = sphi 0, %s116
    %s136 = sphi 0, %s138
    %s139 = sphi 0, %s136
    %s140 = sphi 0, %s139
    %s156 = sphi 0, %s140
  $region4: #{conv3d_block_forward.5} parent=0 // loop_header_branch
    %14 = sbr.rel (%p12) target = $region8
  $region5: #{conv3d_block_forward.5} parent=0 // loop_body
    %s16 = ssub.s32 %s11, 1
    %s17 = ssub.s32 %s11, 2
    %s18 = sadd.s32 %s11, 1
    %s19 = ssub.s32 %s11, %s18
    %p20 = scmp.eq.s32.totalorder %s19, 0
    %s22 = sadd.s32 %s21, 1
    %s23 = scalar_select %p20, %s21, %s22
    %p26 = pneg %p20
    %p27 = scmp.eq.s32.totalorder %s11, 1
    %p28 = por %p26, %p27
    %p29 = scmp.ne.s32.totalorder %s21, %s24
    %p30 = scmp.eq.s32.totalorder %s11, 0
    %p31 = por %p29, %p30
    %p32 = scmp.ne.s32.totalorder %s21, %s24
    %p33 = scmp.eq.s32.totalorder %s16, 1
    %p34 = por %p32, %p33
    %p35 = scmp.ne.s32.totalorder %s24, %s25
    %p36 = scmp.eq.s32.totalorder %s16, 0
    %p37 = por %p35, %p36
    %p38 = scmp.ne.s32.totalorder %s24, %s25
    %p39 = scmp.eq.s32.totalorder %s17, 1
    %p40 = por %p38, %p39
    %p42 = scmp.ne.s32.totalorder %s25, %s41
    %p43 = scmp.eq.s32.totalorder %s17, 0
    %p44 = por %p42, %p43
    %s46 = sadd.s32 %s45, 1
    %p49 = scmp.eq.s32.totalorder %s11, 1
    %p50 = scmp.ne.s32.totalorder %s45, %s47
    %p51 = scmp.eq.s32.totalorder %s11, 0
    %p52 = por %p50, %p51
    %p53 = scmp.ne.s32.totalorder %s45, %s47
    %p54 = scmp.eq.s32.totalorder %s16, 1
    %p55 = por %p53, %p54
    %p56 = scmp.ne.s32.totalorder %s47, %s48
    %p57 = scmp.eq.s32.totalorder %s16, 0
    %p58 = por %p56, %p57
    %p59 = scmp.ne.s32.totalorder %s47, %s48
    %p60 = scmp.eq.s32.totalorder %s17, 1
    %p61 = por %p59, %p60
    %p63 = scmp.ne.s32.totalorder %s48, %s62
    %p64 = scmp.eq.s32.totalorder %s17, 0
    %p65 = por %p63, %p64
    %s67 = sadd.s32 %s66, 1
    %p70 = scmp.eq.s32.totalorder %s11, 1
    %p71 = scmp.ne.s32.totalorder %s66, %s68
    %p72 = scmp.eq.s32.totalorder %s11, 0
    %p73 = por %p71, %p72
    %p74 = scmp.ne.s32.totalorder %s66, %s68
    %p75 = scmp.eq.s32.totalorder %s16, 1
    %p76 = por %p74, %p75
    %p77 = scmp.ne.s32.totalorder %s68, %s69
    %p78 = scmp.eq.s32.totalorder %s16, 0
    %p79 = por %p77, %p78
    %p80 = scmp.ne.s32.totalorder %s68, %s69
    %p81 = scmp.eq.s32.totalorder %s17, 1
    %p82 = por %p80, %p81
    %p84 = scmp.ne.s32.totalorder %s69, %s83
    %p85 = scmp.eq.s32.totalorder %s17, 0
    %p86 = por %p84, %p85
    %s87 = ssub.s32 %s11, %s18
    %p88 = scmp.eq.s32.totalorder %s87, 0
    %s90 = sadd.s32 %s89, 1
    %s91 = scalar_select %p88, %s89, %s90
    %p94 = pneg %p88
    %p95 = scmp.eq.s32.totalorder %s11, 1
    %p96 = por %p94, %p95
    %p97 = scmp.ne.s32.totalorder %s89, %s92
    %p98 = scmp.eq.s32.totalorder %s11, 0
    %p99 = por %p97, %p98
    %p100 = scmp.ne.s32.totalorder %s89, %s92
    %p101 = scmp.eq.s32.totalorder %s16, 1
    %p102 = por %p100, %p101
    %p103 = scmp.ne.s32.totalorder %s92, %s93
    %p104 = scmp.eq.s32.totalorder %s16, 0
    %p105 = por %p103, %p104
    %p106 = scmp.ne.s32.totalorder %s92, %s93
    %p107 = scmp.eq.s32.totalorder %s17, 1
    %p108 = por %p106, %p107
    %p110 = scmp.ne.s32.totalorder %s93, %s109
    %p111 = scmp.eq.s32.totalorder %s17, 0
    %p112 = por %p110, %p111
    %s114 = sadd.s32 %s113, 1
    %p117 = scmp.eq.s32.totalorder %s11, 1
    %p118 = scmp.ne.s32.totalorder %s113, %s115
    %p119 = scmp.eq.s32.totalorder %s11, 0
    %p120 = por %p118, %p119
    %p121 = scmp.ne.s32.totalorder %s113, %s115
    %p122 = scmp.eq.s32.totalorder %s16, 1
    %p123 = por %p121, %p122
    %p124 = scmp.ne.s32.totalorder %s115, %s116
    %p125 = scmp.eq.s32.totalorder %s16, 0
    %p126 = por %p124, %p125
    %p127 = scmp.ne.s32.totalorder %s115, %s116
    %p128 = scmp.eq.s32.totalorder %s17, 1
    %p129 = por %p127, %p128
    %p131 = scmp.ne.s32.totalorder %s116, %s130
    %p132 = scmp.eq.s32.totalorder %s17, 0
    %p133 = por %p131, %p132
    %s134 = ssub.s32 %s11, %s18
    %p135 = scmp.eq.s32.totalorder %s134, 0
    %s137 = sadd.s32 %s136, 1
    %s138 = scalar_select %p135, %s136, %s137
    %p141 = pneg %p135
    %p142 = scmp.eq.s32.totalorder %s11, 1
    %p143 = por %p141, %p142
    %p144 = scmp.ne.s32.totalorder %s136, %s139
    %p145 = scmp.eq.s32.totalorder %s11, 0
    %p146 = por %p144, %p145
    %p147 = scmp.ne.s32.totalorder %s136, %s139
    %p148 = scmp.eq.s32.totalorder %s16, 1
    %p149 = por %p147, %p148
    %p150 = scmp.ne.s32.totalorder %s139, %s140
    %p151 = scmp.eq.s32.totalorder %s16, 0
    %p152 = por %p150, %p151
    %p153 = scmp.ne.s32.totalorder %s139, %s140
    %p154 = scmp.eq.s32.totalorder %s17, 1
    %p155 = por %p153, %p154
    %p157 = scmp.ne.s32.totalorder %s140, %s156
    %p158 = scmp.eq.s32.totalorder %s17, 0
    %p159 = por %p157, %p158
    %p160 = scmp.le.s32.totalorder 1, %s11
    %p161 = scmp.lt.s32.totalorder %s11, 3
    %p162 = pnand %p160, %p161
    %p163 = pneg %p162
    // Predicated region
    $region9: #{conv3d_block_forward.5} parent=5 // pred_check
      _
    $region10: #{conv3d_block_forward.5} parent=5 // pred_check_branch
      %165 = sbr.rel (%p162) target = $region12
    $region11: #{conv3d_block_forward.5} parent=5 // pred_region
      %s166 = ssub.s32 %s11, 1
      // Predicated region
      $region13: #{conv3d_block_forward.5} parent=11 // pred_check
        %p167 = pneg %p58
      $region14: #{conv3d_block_forward.5} parent=11 // pred_check_branch
        %169 = sbr.rel (%p167) target = $region16
      $region15: #{conv3d_block_forward.5} parent=11 // pred_region
        _
      $region16: #{conv3d_block_forward.5} parent=11 // pred_fallthru
        _
      // Predicated region
      $region17: #{conv3d_block_forward.5} parent=11 // pred_check
        %p170 = pneg %p79
      $region18: #{conv3d_block_forward.5} parent=11 // pred_check_branch
        %172 = sbr.rel (%p170) target = $region20
      $region19: #{conv3d_block_forward.5} parent=11 // pred_region
        _
      $region20: #{conv3d_block_forward.5} parent=11 // pred_fallthru
        _
      // Predicated region
      $region21: #{conv3d_block_forward.5} parent=11 // pred_check
        %p173 = pneg %p126
      $region22: #{conv3d_block_forward.5} parent=11 // pred_check_branch
        %175 = sbr.rel (%p173) target = $region24
      $region23: #{conv3d_block_forward.5} parent=11 // pred_region
        _
      $region24: #{conv3d_block_forward.5} parent=11 // pred_fallthru
        _
    $region12: #{conv3d_block_forward.5} parent=5 // pred_fallthru
      _
    %p176 = scmp.lt.s32.totalorder %s11, 2
    // Predicated region
    $region25: #{conv3d_block_forward.5} parent=5 // pred_check
      %p177 = pneg %p176
    $region26: #{conv3d_block_forward.5} parent=5 // pred_check_branch
      %179 = sbr.rel (%p177) target = $region28
    $region27: #{conv3d_block_forward.5} parent=5 // pred_region
      // Predicated region
      $region29: #{conv3d_block_forward.5} parent=27 // pred_check
        %p180 = pneg %p31
      $region30: #{conv3d_block_forward.5} parent=27 // pred_check_branch
        %182 = sbr.rel (%p180) target = $region32
      $region31: #{conv3d_block_forward.5} parent=27 // pred_region
        %p183 = scmp.lt.s32.totalorder %s11, 1
        %s184 = scalar_select %p183, %s11, 1
        %s185 = smul.addr %s184, 8
        %s186 = smul.addr %s185, 4
        %s187 = scalar_lea.vmem %s0, %s186
      $region32: #{conv3d_block_forward.5} parent=27 // pred_fallthru
        _
      // Predicated region
      $region33: #{conv3d_block_forward.5} parent=27 // pred_check
        %p188 = pneg %p99
      $region34: #{conv3d_block_forward.5} parent=27 // pred_check_branch
        %190 = sbr.rel (%p188) target = $region36
      $region35: #{conv3d_block_forward.5} parent=27 // pred_region
        %p191 = scmp.lt.s32.totalorder %s11, 1
        %s192 = scalar_select %p191, %s11, 1
        %s193 = smul.addr %s192, 8
        %s194 = smul.addr %s193, 4
        %s195 = scalar_lea.vmem %s3, %s194
      $region36: #{conv3d_block_forward.5} parent=27 // pred_fallthru
        _
    $region28: #{conv3d_block_forward.5} parent=5 // pred_fallthru
      _
    %p196 = scmp.le.s32.totalorder 1, %s11
    %p197 = scmp.lt.s32.totalorder %s11, 3
    %p198 = pnand %p196, %p197
    %p199 = pneg %p198
    // Predicated region
    $region37: #{conv3d_block_forward.5} parent=5 // pred_check
      _
    $region38: #{conv3d_block_forward.5} parent=5 // pred_check_branch
      %201 = sbr.rel (%p198) target = $region40
    $region39: #{conv3d_block_forward.5} parent=5 // pred_region
      %s202 = ssub.s32 %s11, 1
      %p203 = scmp.lt.s32.totalorder %s16, 1
      %s204 = scalar_select %p203, %s16, 1
      %s205 = smul.addr %s204, 8
      %s206 = smul.addr %s205, 4
      %s207 = scalar_lea.vmem %s0, %s206
      %p208 = pneg %p37
      %p209 = pneg %p34
      %p210 = pneg %p58
      %p211 = pneg %p55
      %p212 = pneg %p79
      %p213 = pneg %p76
      %p214 = scmp.lt.s32.totalorder %s16, 1
      %s215 = scalar_select %p214, %s16, 1
      %s216 = smul.addr %s215, 8
      %s217 = smul.addr %s216, 4
      %s218 = scalar_lea.vmem %s3, %s217
      %p219 = pneg %p105
      %p220 = pneg %p102
      %p221 = pneg %p126
      %p222 = pneg %p123
      %p223 = pneg %p152
      %p224 = pneg %p149
      %p225 = scmp.lt.s32.totalorder %s16, 1
      %s226 = scalar_select %p225, %s16, 1
      %s227 = smul.addr %s226, 8
      %s228 = smul.addr %s227, 8
      %s229 = scalar_lea.vmem %s5, %s228
      %p230 = scmp.lt.s32.totalorder %s16, 1
      %s231 = scalar_select %p230, %s16, 1
      %s232 = smul.addr %s231, 8
      %s233 = smul.addr %s232, 4
      %s234 = scalar_lea.vmem %s0, %s233
      %p235 = scmp.lt.s32.totalorder %s16, 1
      %s236 = scalar_select %p235, %s16, 1
      %s237 = smul.addr %s236, 8
      %s238 = smul.addr %s237, 4
      %s239 = scalar_lea.vmem %s3, %s238
      %p240 = scmp.lt.s32.totalorder %s16, 1
      %s241 = scalar_select %p240, %s16, 1
      %s242 = smul.addr %s241, 8
      %s243 = smul.addr %s242, 8
      %s244 = scalar_lea.vmem %s5, %s243
      %v245 = vld [vmem:[%s234] sm:$0xf]
      %v246 = vld [vmem:[%s234 + $0x4] sm:$0xf]
      %v247 = vld [vmem:[%s234 + $0x8] sm:$0xf]
      %v248 = vld [vmem:[%s234 + $0xc] sm:$0xf]
      %v249 = vld [vmem:[%s234 + $0x10] sm:$0xf]
      %v250 = vld [vmem:[%s234 + $0x14] sm:$0xf]
      %v251 = vld [vmem:[%s234 + $0x18] sm:$0xf]
      %v252 = vld [vmem:[%s234 + $0x1c] sm:$0xf]
      %v253 = vunpack.c.l.bf16 %v245
      %v254 = vunpack.c.l.bf16 %v246
      %v255 = vunpack.c.l.bf16 %v247
      %v256 = vunpack.c.l.bf16 %v248
      %v257 = vunpack.c.l.bf16 %v249
      %v258 = vunpack.c.l.bf16 %v250
      %v259 = vunpack.c.l.bf16 %v251
      %v260 = vunpack.c.l.bf16 %v252
      %v261 = vld [vmem:[%s1] sm:$0x1]
      %v263 = vperm.slane %v261, 0
      %v265 = vmul.f32 %v253, %v263
      %v266 = vmul.f32 %v254, %v263
      %v267 = vmul.f32 %v255, %v263
      %v268 = vmul.f32 %v256, %v263
      %v269 = vmul.f32 %v257, %v263
      %v270 = vmul.f32 %v258, %v263
      %v271 = vmul.f32 %v259, %v263
      %v272 = vmul.f32 %v260, %v263
      %v273 = vld [vmem:[%s2] sm:$0x1]
      %v275 = vperm.slane %v273, 0
      %v277 = vadd.f32 %v265, %v275
      %v278 = vadd.f32 %v266, %v275
      %v279 = vadd.f32 %v267, %v275
      %v280 = vadd.f32 %v268, %v275
      %v281 = vadd.f32 %v269, %v275
      %v282 = vadd.f32 %v270, %v275
      %v283 = vadd.f32 %v271, %v275
      %v284 = vadd.f32 %v272, %v275
      %v285 = vmax.f32 %v277, 0.0
      %v286 = vmax.f32 %v278, 0.0
      %v287 = vmax.f32 %v279, 0.0
      %v288 = vmax.f32 %v280, 0.0
      %v289 = vmax.f32 %v281, 0.0
      %v290 = vmax.f32 %v282, 0.0
      %v291 = vmax.f32 %v283, 0.0
      %v292 = vmax.f32 %v284, 0.0
      %v293 = vld [vmem:[%s239] sm:$0xf]
      %v294 = vld [vmem:[%s239 + $0x4] sm:$0xf]
      %v295 = vld [vmem:[%s239 + $0x8] sm:$0xf]
      %v296 = vld [vmem:[%s239 + $0xc] sm:$0xf]
      %v297 = vld [vmem:[%s239 + $0x10] sm:$0xf]
      %v298 = vld [vmem:[%s239 + $0x14] sm:$0xf]
      %v299 = vld [vmem:[%s239 + $0x18] sm:$0xf]
      %v300 = vld [vmem:[%s239 + $0x1c] sm:$0xf]
      %v301 = vld [vmem:[%s4] sm:$0xf]
      %v302 = vld [vmem:[%s4 + $0x4] sm:$0xf]
      %v303 = vld [vmem:[%s4 + $0x8] sm:$0xf]
      %v304 = vld [vmem:[%s4 + $0xc] sm:$0xf]
      %v305 = vld [vmem:[%s4 + $0x10] sm:$0xf]
      %v306 = vld [vmem:[%s4 + $0x14] sm:$0xf]
      %v307 = vld [vmem:[%s4 + $0x18] sm:$0xf]
      %v308 = vld [vmem:[%s4 + $0x1c] sm:$0xf]
      %v309 = vld [vmem:[%s4 + $0x20] sm:$0xf]
      %v310 = vld [vmem:[%s4 + $0x24] sm:$0xf]
      %v311 = vld [vmem:[%s4 + $0x28] sm:$0xf]
      %v312 = vld [vmem:[%s4 + $0x2c] sm:$0xf]
      %v313 = vld [vmem:[%s4 + $0x30] sm:$0xf]
      %v314 = vld [vmem:[%s4 + $0x34] sm:$0xf]
      %v315 = vld [vmem:[%s4 + $0x38] sm:$0xf]
      %v316 = vld [vmem:[%s4 + $0x3c] sm:$0xf]
      %v325 = vunpack.c.l.b16 %v293
      %v326 = vunpack.c.l.b16 %v294
      %v327 = vunpack.c.l.b16 %v295
      %v328 = vunpack.c.l.b16 %v296
      %v329 = vunpack.c.l.b16 %v297
      %v330 = vunpack.c.l.b16 %v298
      %v331 = vunpack.c.l.b16 %v299
      %v332 = vunpack.c.l.b16 %v300
      %v333 = vpack.c.b16 %v326, %v325
      %v334 = vpack.c.b16 %v328, %v327
      %v335 = vpack.c.b16 %v330, %v329
      %v336 = vpack.c.b16 %v332, %v331
      %v357 = vunpack.c.l.b16 %v301
      %v358 = vunpack.c.l.b16 %v302
      %v359 = vunpack.c.l.b16 %v303
      %v360 = vunpack.c.l.b16 %v304
      %v361 = vunpack.c.l.b16 %v305
      %v362 = vunpack.c.l.b16 %v306
      %v363 = vunpack.c.l.b16 %v307
      %v364 = vunpack.c.l.b16 %v308
      %v365 = vunpack.c.l.b16 %v309
      %v366 = vunpack.c.l.b16 %v310
      %v367 = vunpack.c.l.b16 %v311
      %v368 = vunpack.c.l.b16 %v312
      %v369 = vunpack.c.l.b16 %v313
      %v370 = vunpack.c.l.b16 %v314
      %v371 = vunpack.c.l.b16 %v315
      %v372 = vunpack.c.l.b16 %v316
      %v373 = vpack.c.b16 %v358, %v357
      %v374 = vpack.c.b16 %v360, %v359
      %v375 = vpack.c.b16 %v362, %v361
      %v376 = vpack.c.b16 %v364, %v363
      %v377 = vpack.c.b16 %v366, %v365
      %v378 = vpack.c.b16 %v368, %v367
      %v379 = vpack.c.b16 %v370, %v369
      %v380 = vpack.c.b16 %v372, %v371
      %389 = vmatpush.bf16.msra.mxu0 %v380
      %390 = vmatpush.bf16.msra.mxu0 %v379
      %391 = vmatpush.bf16.msra.mxu0 %v378
      %392 = vmatpush.bf16.msra.mxu0 %v377
      %393 = vmatpush.bf16.msra.mxu0 %v376
      %394 = vmatpush.bf16.msra.mxu0 %v375
      %395 = vmatpush.bf16.msra.mxu0 %v374
      %396 = vmatpush.bf16.msra.mxu0 %v373
      %397 = vmatmul.bf16.gmra.mxu0 %v333
      %v398 = vpop.f32.mrf.mxu0
      %v399 = vadd.f32 0.0, %v398
      %v400 = vpop.f32.mrf.mxu0
      %v401 = vadd.f32 0.0, %v400
      %402 = vmatmul.bf16.gmra.mxu0 %v334
      %v403 = vpop.f32.mrf.mxu0
      %v404 = vadd.f32 0.0, %v403
      %v405 = vpop.f32.mrf.mxu0
      %v406 = vadd.f32 0.0, %v405
      %407 = vmatmul.bf16.gmra.mxu0 %v335
      %v408 = vpop.f32.mrf.mxu0
      %v409 = vadd.f32 0.0, %v408
      %v410 = vpop.f32.mrf.mxu0
      %v411 = vadd.f32 0.0, %v410
      %412 = vmatmul.bf16.gmra.mxu0 %v336
      %v413 = vpop.f32.mrf.mxu0
      %v414 = vadd.f32 0.0, %v413
      %v415 = vpop.f32.mrf.mxu0
      %v416 = vadd.f32 0.0, %v415
      %417 = vdwg.mxu0
      %v418 = vadd.f32 %v285, %v399
      %v419 = vadd.f32 %v286, %v401
      %v420 = vadd.f32 %v287, %v404
      %v421 = vadd.f32 %v288, %v406
      %v422 = vadd.f32 %v289, %v409
      %v423 = vadd.f32 %v290, %v411
      %v424 = vadd.f32 %v291, %v414
      %v425 = vadd.f32 %v292, %v416
      %426 = vst [vmem:[%s244] sm:$0xff] %v418
      %427 = vst [vmem:[%s244 + $0x8] sm:$0xff] %v419
      %428 = vst [vmem:[%s244 + $0x10] sm:$0xff] %v420
      %429 = vst [vmem:[%s244 + $0x18] sm:$0xff] %v421
      %430 = vst [vmem:[%s244 + $0x20] sm:$0xff] %v422
      %431 = vst [vmem:[%s244 + $0x28] sm:$0xff] %v423
      %432 = vst [vmem:[%s244 + $0x30] sm:$0xff] %v424
      %433 = vst [vmem:[%s244 + $0x38] sm:$0xff] %v425
      %p434 = scmp.lt.s32.totalorder %s16, 1
      %s435 = scalar_select %p434, %s16, 1
      %s436 = smul.addr %s435, 8
      %s437 = smul.addr %s436, 8
      %s438 = scalar_lea.vmem %s5, %s437
      // Predicated region
      $region41: #{conv3d_block_forward.5} parent=39 // pred_check
        %p439 = pneg %p149
      $region42: #{conv3d_block_forward.5} parent=39 // pred_check_branch
        %441 = sbr.rel (%p439) target = $region44
      $region43: #{conv3d_block_forward.5} parent=39 // pred_region
        _
      $region44: #{conv3d_block_forward.5} parent=39 // pred_fallthru
        _
    $region40: #{conv3d_block_forward.5} parent=5 // pred_fallthru
      _
    %p442 = scmp.le.s32.totalorder 2, %s11
    // Predicated region
    $region45: #{conv3d_block_forward.5} parent=5 // pred_check
      %p443 = pneg %p442
    $region46: #{conv3d_block_forward.5} parent=5 // pred_check_branch
      %445 = sbr.rel (%p443) target = $region48
    $region47: #{conv3d_block_forward.5} parent=5 // pred_region
      %s446 = ssub.s32 %s11, 2
      // Predicated region
      $region49: #{conv3d_block_forward.5} parent=47 // pred_check
        %p447 = pneg %p155
      $region50: #{conv3d_block_forward.5} parent=47 // pred_check_branch
        %449 = sbr.rel (%p447) target = $region52
      $region51: #{conv3d_block_forward.5} parent=47 // pred_region
        %p450 = scmp.lt.s32.totalorder %s17, 1
        %s451 = scalar_select %p450, %s17, 1
        %s452 = smul.addr %s451, 8
        %s453 = smul.addr %s452, 8
        %s454 = scalar_lea.vmem %s5, %s453
      $region52: #{conv3d_block_forward.5} parent=47 // pred_fallthru
        _
    $region48: #{conv3d_block_forward.5} parent=5 // pred_fallthru
      _
  $region6: #{conv3d_block_forward.5} parent=0 // loop_footer
    %s15 = sadd.s32 1, %s11
  $region7: #{conv3d_block_forward.5} parent=0 // loop_footer_branch
    %10 = sbr.rel target = $region3
  $region8: #{conv3d_block_forward.5} parent=0 // loop_exit
    _

</llo_original>
